<compile_context>
chip_gen: v7x
topology: tpu7x:2x2x1
jax: 0.10.0
libtpu: 0.0.40
codegen_flags: <defaults>
</compile_context>

<pallas_src>
import numpy as np
import jax
import jax.numpy as jnp
from jax.experimental import pallas as pl
from jax.experimental.pallas import tpu as pltpu

TWO_PI = float(2.0 * np.pi)


def tgat_kernel(xj_ref, dst_oht_ref, et_ref, freqs_ref,
                wx_ref, wsin_ref, wcos_ref, b_ref, attn_ref, sel_ref,
                out_ref):
    """One edge-tile of TGAT message passing.

    out_ref[:, :Cout] accumulates sum_e dst_oh_e * (h_e * exp(s_e))  (numerator)
    out_ref[:,  Cout] accumulates sum_e dst_oh_e * exp(s_e)          (denominator)
    """
    k = pl.program_id(1)

    @pl.when(k == 0)
    def _init():
        out_ref[...] = jnp.zeros_like(out_ref)

    x_j = xj_ref[...]                                  # [tE, Cin] f32 (exact index gather, done in XLA)

    # ---- TimeEncode: freqs already carry the 2*pi factor ----
    te = et_ref[...] * freqs_ref[...]                  # [tE, Td/2]
    sin_te = jnp.sin(te)
    cos_te = jnp.cos(te)

    # ---- message: tanh(Linear(cat([x_j, sin, cos]))) with split weights (no concat) ----
    pre = (jnp.dot(x_j, wx_ref[...], preferred_element_type=jnp.float32)
           + jnp.dot(sin_te, wsin_ref[...], preferred_element_type=jnp.float32)
           + jnp.dot(cos_te, wcos_ref[...], preferred_element_type=jnp.float32)
           + b_ref[...])
    h = jnp.tanh(pre)                                  # [tE, Cpad]; padded lanes are exactly 0

    # ---- attention logits; single-pass softmax weights ----
    # |s| <= ||attn||_1 because |h| <= 1 (tanh): exp needs no running-max shift.
    s = jnp.sum(h * attn_ref[...], axis=-1, keepdims=True)      # [tE, 1]
    e_s = jnp.exp(s)

    # lanes [0,Cout): h*exp(s); lane Cout: exp(s) (selector row); pad lanes stay 0.
    payload = (h + sel_ref[...]) * e_s                 # [tE, Cpad]

    # ---- fused scatter-add of numerator + denominator (aggr='add') ----
    # bf16 0/1 one-hot is exact; promote to f32 so accumulation matches the f32 reference.
    dst_oht = dst_oht_ref[...].astype(jnp.float32)     # [N, tE]
    out_ref[...] += jnp.dot(dst_oht, payload, preferred_element_type=jnp.float32)


def _round_up(v, m):
    return (v + m - 1) // m * m


def _vmem_capacity_bytes():
    """Generation-aware VMEM capacity (128 MiB v5e/v6e, 64 MiB per TC on v7x)."""
    try:
        return int(pltpu.get_tpu_info().vmem_capacity_bytes)
    except Exception:
        return 64 << 20   # conservative fallback (v7x per-TensorCore)


def _stream_bytes_per_edge(n_nodes, cin, td, cpad):
    # double-buffered streams per edge row: x_j f32 + dst one-hot^T col bf16 + t f32,
    # plus in-flight intermediates (pre/h/payload ~3x Cpad f32, sin/cos ~Td f32).
    return 2 * (cin * 4 + 2 * n_nodes + 4) + 3 * cpad * 4 + td * 4


def _resident_bytes(n_nodes, cin, td, cpad):
    # weights + bias/attn/sel/freqs + double-buffered [N, Cpad] output slab
    return 4 * (cin + td + 8) * cpad + 8 * n_nodes * cpad


def tgat_encoder(x, edge_index, edge_t, params, *, tile_e=None, num_slabs=2):
    """x: [N, Cin] f32, edge_index: [2, E] int32 (row0=src, row1=dst), edge_t: [E] f32."""
    freqs, w, b, attn = params["freqs"], params["w"], params["b"], params["attn"]
    N, Cin = x.shape
    E = edge_index.shape[1]
    Td = int(freqs.shape[0]) * 2
    Cout = int(w.shape[1])

    # lane-pad the output dim; lane index `Cout` carries the softmax denominator
    Cpad = _round_up(Cout + 1, 128)

    vmem_cap = _vmem_capacity_bytes()
    per_edge = _stream_bytes_per_edge(N, Cin, Td, Cpad)
    resident = _resident_bytes(N, Cin, Td, Cpad)

    if tile_e is None:
        budget = max(vmem_cap // 2 - resident, 2 << 20)
        tile_e = min(max(128, (budget // per_edge) // 128 * 128), 4096)
        # don't pad wildly past the actual edge count
        tile_e = min(tile_e, max(128, _round_up(-(-E // num_slabs), 128)))
    assert tile_e % 128 == 0, "edge tile must be a multiple of 128 (lane dim of dst one-hot^T)"

    vmem_limit = int(min(max(tile_e * per_edge + resident + (8 << 20), 32 << 20),
                         vmem_cap * 3 // 4))

    E_pad = _round_up(max(E, 1), num_slabs * tile_e)
    T = E_pad // tile_e // num_slabs          # edge tiles per slab (per core on v7x)

    # ---- glue (plain XLA): pad edges, exact index gather, bf16 scatter one-hot ----
    src = edge_index[0].astype(jnp.int32)
    dst = edge_index[1].astype(jnp.int32)
    et = edge_t.astype(jnp.float32)
    pad = E_pad - E
    if pad:
        src = jnp.concatenate([src, jnp.zeros((pad,), jnp.int32)])       # any valid row (masked by dst)
        dst = jnp.concatenate([dst, jnp.full((pad,), N, jnp.int32)])     # index N -> all-zero one-hot col
        et = jnp.concatenate([et, jnp.zeros((pad,), jnp.float32)])

    xj_all = jnp.take(x.astype(jnp.float32), src, axis=0)                # [E_pad, Cin]  exact gather
    node_ids = jnp.arange(N, dtype=jnp.int32)
    dst_oht = (node_ids[:, None] == dst[None, :]).astype(jnp.bfloat16)   # [N, E_pad]
    et2 = et.reshape(E_pad, 1)
    freqs2 = (freqs.astype(jnp.float32) * TWO_PI).reshape(1, Td // 2)    # fold 2*pi into freqs

    w = w.astype(jnp.float32)
    w_x = jnp.zeros((Cin, Cpad), jnp.float32).at[:, :Cout].set(w[:Cin])
    w_sin = jnp.zeros((Td // 2, Cpad), jnp.float32).at[:, :Cout].set(w[Cin:Cin + Td // 2])
    w_cos = jnp.zeros((Td // 2, Cpad), jnp.float32).at[:, :Cout].set(w[Cin + Td // 2:])
    b2 = jnp.zeros((1, Cpad), jnp.float32).at[:, :Cout].set(
        b.reshape(1, Cout).astype(jnp.float32))
    attn2 = jnp.zeros((1, Cpad), jnp.float32).at[:, :Cout].set(
        attn.reshape(1, Cout).astype(jnp.float32))
    sel = jnp.zeros((1, Cpad), jnp.float32).at[:, Cout].set(1.0)         # denominator-lane selector

    inv = pl.Buffered(1)   # loop-invariant operands: single-buffer to halve their VMEM footprint

    slabs = pl.pallas_call(
        tgat_kernel,
        out_shape=jax.ShapeDtypeStruct((num_slabs, N, Cpad), jnp.float32),
        grid_spec=pltpu.PrefetchScalarGridSpec(
            num_scalar_prefetch=0,
            grid=(num_slabs, T),
            in_specs=[
                pl.BlockSpec((tile_e, Cin), lambda c, k: (c * T + k, 0)),      # x_j tile (streamed)
                pl.BlockSpec((N, tile_e), lambda c, k: (0, c * T + k)),        # dst one-hot^T tile
                pl.BlockSpec((tile_e, 1), lambda c, k: (c * T + k, 0)),        # edge times
                pl.BlockSpec((1, Td // 2), lambda c, k: (0, 0), pipeline_mode=inv),   # freqs*2pi
                pl.BlockSpec((Cin, Cpad), lambda c, k: (0, 0), pipeline_mode=inv),    # W_x
                pl.BlockSpec((Td // 2, Cpad), lambda c, k: (0, 0), pipeline_mode=inv),  # W_sin
                pl.BlockSpec((Td // 2, Cpad), lambda c, k: (0, 0), pipeline_mode=inv),  # W_cos
                pl.BlockSpec((1, Cpad), lambda c, k: (0, 0), pipeline_mode=inv),      # bias
                pl.BlockSpec((1, Cpad), lambda c, k: (0, 0), pipeline_mode=inv),      # attn
                pl.BlockSpec((1, Cpad), lambda c, k: (0, 0), pipeline_mode=inv),      # selector
            ],
            out_specs=pl.BlockSpec((None, N, Cpad), lambda c, k: (c, 0, 0)),
        ),
        compiler_params=pltpu.CompilerParams(
            dimension_semantics=("parallel", "arbitrary"),   # slabs across cores; edge axis = reduction
            vmem_limit_bytes=vmem_limit,
        ),
    )(xj_all, dst_oht, et2, freqs2, w_x, w_sin, w_cos, b2, attn2, sel)

    # tiny XLA epilogue: combine per-core partial slabs and normalize by the denominator lane
    acc = slabs.sum(axis=0)                              # [N, Cpad]
    denom = acc[:, Cout:Cout + 1]
    denom = jnp.where(denom > 0.0, denom, 1.0)           # isolated nodes -> output 0
    return acc[:, :Cout] / denom


def tgat_reference(x, edge_index, edge_t, params):
    """Pure-JAX reference replicating PyG propagate(aggr='add') + softmax(index)."""
    src, dst = edge_index[0], edge_index[1]
    N = x.shape[0]
    te = edge_t[:, None] * params["freqs"][None, :] * TWO_PI
    edge_attr = jnp.concatenate([jnp.sin(te), jnp.cos(te)], axis=-1)
    msg = jnp.concatenate([x[src], edge_attr], axis=-1)
    h = jnp.tanh(msg @ params["w"] + params["b"][None, :])
    s = jnp.sum(h * params["attn"][None, :], axis=-1)
    m = jax.ops.segment_max(s, dst, num_segments=N)
    e = jnp.exp(s - m[dst])
    denom = jax.ops.segment_sum(e, dst, num_segments=N)
    alpha = e / denom[dst]
    return jax.ops.segment_sum(h * alpha[:, None], dst, num_segments=N)


if __name__ == "__main__":
    # Small shapes consistent with the module
    N = 8                 # nodes
    E = 200               # edges (padded to 256 -> one 128-edge tile per slab)
    in_channels = 8
    time_dim = 8
    out_channels = 16

    key = jax.random.PRNGKey(0)
    k1, k2, k3, k4, k5, k6, k7 = jax.random.split(key, 7)

    # deterministic synthetic parameters (shapes from __init__)
    params = {
        "freqs": jax.random.normal(k1, (time_dim // 2,), jnp.float32),           # TimeEncode.freqs
        "w": jax.random.normal(k2, (in_channels + time_dim, out_channels),
                               jnp.float32) * 0.2,                               # lin.weight ([in, out])
        "b": jax.random.normal(k3, (out_channels,), jnp.float32) * 0.1,          # lin.bias
        "attn": jax.random.normal(k4, (out_channels,), jnp.float32) * 0.3,       # attn [1, out] flattened
    }

    x = jax.random.normal(k5, (N, in_channels), jnp.float32)
    edge_index = jax.random.randint(k6, (2, E), 0, N, dtype=jnp.int32)
    edge_t = jax.random.uniform(k7, (E,), jnp.float32)

    out = tgat_encoder(x, edge_index, edge_t, params, tile_e=128)
    out = jax.block_until_ready(out)

    ref = tgat_reference(x, edge_index, edge_t, params)
    np.testing.assert_allclose(np.asarray(out), np.asarray(ref), rtol=5e-4, atol=1e-4)

    print("KERNEL_OK")
</pallas_src>

<mosaic_0001>
module attributes {stable_mosaic.version = 11 : i64} {
  func.func @tgat_kernel(%arg0: i32, %arg1: i32, %arg2: memref<128x8xf32, #tpu.memory_space<vmem>>, %arg3: memref<8x128xbf16, #tpu.memory_space<vmem>>, %arg4: memref<128x1xf32, #tpu.memory_space<vmem>>, %arg5: memref<1x4xf32, #tpu.memory_space<vmem>>, %arg6: memref<8x128xf32, #tpu.memory_space<vmem>>, %arg7: memref<4x128xf32, #tpu.memory_space<vmem>>, %arg8: memref<4x128xf32, #tpu.memory_space<vmem>>, %arg9: memref<1x128xf32, #tpu.memory_space<vmem>>, %arg10: memref<1x128xf32, #tpu.memory_space<vmem>>, %arg11: memref<1x128xf32, #tpu.memory_space<vmem>>, %arg12: memref<1x8x128xf32, #tpu.memory_space<vmem>>) attributes {dimension_semantics = [#tpu.dimension_semantics<parallel>, #tpu.dimension_semantics<arbitrary>], iteration_bounds = array<i64: 2, 1>, scalar_prefetch = 0 : i64, scratch_operands = 0 : i64, tpu.core_type = #tpu.core_type<tc>, window_params = [{transform_indices = @transform_0, window_bounds = array<i64: 128, 8>}, {transform_indices = @transform_1, window_bounds = array<i64: 8, 128>}, {transform_indices = @transform_2, window_bounds = array<i64: 128, 1>}, {pipeline_mode = #tpu.pipeline_mode<synchronous>, transform_indices = @transform_3, window_bounds = array<i64: 1, 4>}, {pipeline_mode = #tpu.pipeline_mode<synchronous>, transform_indices = @transform_4, window_bounds = array<i64: 8, 128>}, {pipeline_mode = #tpu.pipeline_mode<synchronous>, transform_indices = @transform_5, window_bounds = array<i64: 4, 128>}, {pipeline_mode = #tpu.pipeline_mode<synchronous>, transform_indices = @transform_6, window_bounds = array<i64: 4, 128>}, {pipeline_mode = #tpu.pipeline_mode<synchronous>, transform_indices = @transform_7, window_bounds = array<i64: 1, 128>}, {pipeline_mode = #tpu.pipeline_mode<synchronous>, transform_indices = @transform_8, window_bounds = array<i64: 1, 128>}, {pipeline_mode = #tpu.pipeline_mode<synchronous>, transform_indices = @transform_9, window_bounds = array<i64: 1, 128>}, {transform_indices = @transform_10, window_bounds = array<i64: 1, 8, 128>}]} {
    %c0_i32 = arith.constant 0 : i32
    %0 = arith.cmpi eq, %arg1, %c0_i32 : i32
    %1 = arith.extui %0 : i1 to i32
    %c0_i32_0 = arith.constant 0 : i32
    %2 = arith.cmpi ne, %1, %c0_i32_0 : i32
    scf.if %2 {
      %cst_30 = arith.constant 0.000000e+00 : f32
      %43 = vector.broadcast %cst_30 : f32 to vector<8x128xf32>
      %c0_31 = arith.constant 0 : index
      %c0_32 = arith.constant 0 : index
      %c0_33 = arith.constant 0 : index
      %44 = vector.load %arg12[%c0_31, %c0_32, %c0_33] : memref<1x8x128xf32, #tpu.memory_space<vmem>>, vector<1x8x128xf32>
      %45 = vector.shape_cast %44 : vector<1x8x128xf32> to vector<8x128xf32>
      %46 = vector.shape_cast %43 : vector<8x128xf32> to vector<1x8x128xf32>
      tpu.vector_store %arg12[%c0_31, %c0_32, %c0_33], %46 {strides = array<i32>} : memref<1x8x128xf32, #tpu.memory_space<vmem>>, vector<1x8x128xf32>,
    } else {
    }
    %c0 = arith.constant 0 : index
    %c0_1 = arith.constant 0 : index
    %3 = vector.load %arg2[%c0, %c0_1] : memref<128x8xf32, #tpu.memory_space<vmem>>, vector<128x8xf32>
    %c0_2 = arith.constant 0 : index
    %c0_3 = arith.constant 0 : index
    %4 = vector.load %arg4[%c0_2, %c0_3] : memref<128x1xf32, #tpu.memory_space<vmem>>, vector<128x1xf32>
    %c0_4 = arith.constant 0 : index
    %c0_5 = arith.constant 0 : index
    %5 = vector.load %arg5[%c0_4, %c0_5] : memref<1x4xf32, #tpu.memory_space<vmem>>, vector<1x4xf32>
    %6 = vector.broadcast %4 : vector<128x1xf32> to vector<128x4xf32>
    %7 = vector.broadcast %5 : vector<1x4xf32> to vector<128x4xf32>
    %8 = arith.mulf %6, %7 : vector<128x4xf32>
    %9 = math.sin %8 : vector<128x4xf32>
    %10 = math.cos %8 : vector<128x4xf32>
    %c0_6 = arith.constant 0 : index
    %c0_7 = arith.constant 0 : index
    %11 = vector.load %arg6[%c0_6, %c0_7] : memref<8x128xf32, #tpu.memory_space<vmem>>, vector<8x128xf32>
    %cst = arith.constant dense<0.000000e+00> : vector<128x128xf32>
    %12 = tpu.matmul %3, %11, %cst {dimension_numbers = #tpu.dot_dimension_numbers<[1], [0], [0], [1], [0, 0, 1, 1], [], []>} : vector<128x8xf32>, vector<8x128xf32>, vector<128x128xf32> -> vector<128x128xf32>
    %c0_8 = arith.constant 0 : index
    %c0_9 = arith.constant 0 : index
    %13 = vector.load %arg7[%c0_8, %c0_9] : memref<4x128xf32, #tpu.memory_space<vmem>>, vector<4x128xf32>
    %cst_10 = arith.constant dense<0.000000e+00> : vector<128x128xf32>
    %14 = tpu.matmul %9, %13, %cst_10 {dimension_numbers = #tpu.dot_dimension_numbers<[1], [0], [0], [1], [0, 0, 1, 1], [], []>} : vector<128x4xf32>, vector<4x128xf32>, vector<128x128xf32> -> vector<128x128xf32>
    %15 = arith.addf %12, %14 : vector<128x128xf32>
    %c0_11 = arith.constant 0 : index
    %c0_12 = arith.constant 0 : index
    %16 = vector.load %arg8[%c0_11, %c0_12] : memref<4x128xf32, #tpu.memory_space<vmem>>, vector<4x128xf32>
    %cst_13 = arith.constant dense<0.000000e+00> : vector<128x128xf32>
    %17 = tpu.matmul %10, %16, %cst_13 {dimension_numbers = #tpu.dot_dimension_numbers<[1], [0], [0], [1], [0, 0, 1, 1], [], []>} : vector<128x4xf32>, vector<4x128xf32>, vector<128x128xf32> -> vector<128x128xf32>
    %18 = arith.addf %15, %17 : vector<128x128xf32>
    %c0_14 = arith.constant 0 : index
    %c0_15 = arith.constant 0 : index
    %19 = vector.load %arg9[%c0_14, %c0_15] : memref<1x128xf32, #tpu.memory_space<vmem>>, vector<1x128xf32>
    %20 = vector.broadcast %19 : vector<1x128xf32> to vector<128x128xf32>
    %21 = arith.addf %18, %20 : vector<128x128xf32>
    %22 = math.tanh %21 : vector<128x128xf32>
    %c0_16 = arith.constant 0 : index
    %c0_17 = arith.constant 0 : index
    %23 = vector.load %arg10[%c0_16, %c0_17] : memref<1x128xf32, #tpu.memory_space<vmem>>, vector<1x128xf32>
    %24 = vector.broadcast %23 : vector<1x128xf32> to vector<128x128xf32>
    %25 = arith.mulf %22, %24 : vector<128x128xf32>
    %cst_18 = arith.constant dense<0.000000e+00> : vector<128xf32>
    %26 = vector.multi_reduction <add>, %25, %cst_18 [1] : vector<128x128xf32> to vector<128xf32>
    %27 = vector.shape_cast %26 : vector<128xf32> to vector<128x1xf32>
    %28 = math.exp %27 : vector<128x1xf32>
    %c0_19 = arith.constant 0 : index
    %c0_20 = arith.constant 0 : index
    %29 = vector.load %arg11[%c0_19, %c0_20] : memref<1x128xf32, #tpu.memory_space<vmem>>, vector<1x128xf32>
    %30 = vector.broadcast %29 : vector<1x128xf32> to vector<128x128xf32>
    %31 = arith.addf %22, %30 : vector<128x128xf32>
    %32 = vector.broadcast %28 : vector<128x1xf32> to vector<128x128xf32>
    %33 = arith.mulf %31, %32 : vector<128x128xf32>
    %c0_21 = arith.constant 0 : index
    %c0_22 = arith.constant 0 : index
    %34 = vector.load %arg3[%c0_21, %c0_22] : memref<8x128xbf16, #tpu.memory_space<vmem>>, vector<8x128xbf16>
    %35 = arith.extf %34 : vector<8x128xbf16> to vector<8x128xf32>
    %c0_23 = arith.constant 0 : index
    %c0_24 = arith.constant 0 : index
    %c0_25 = arith.constant 0 : index
    %36 = vector.load %arg12[%c0_23, %c0_24, %c0_25] : memref<1x8x128xf32, #tpu.memory_space<vmem>>, vector<1x8x128xf32>
    %37 = vector.shape_cast %36 : vector<1x8x128xf32> to vector<8x128xf32>
    %cst_26 = arith.constant dense<0.000000e+00> : vector<8x128xf32>
    %38 = tpu.matmul %35, %33, %cst_26 {dimension_numbers = #tpu.dot_dimension_numbers<[1], [0], [0], [1], [0, 0, 1, 1], [], []>} : vector<8x128xf32>, vector<128x128xf32>, vector<8x128xf32> -> vector<8x128xf32>
    %39 = arith.addf %37, %38 : vector<8x128xf32>
    %c0_27 = arith.constant 0 : index
    %c0_28 = arith.constant 0 : index
    %c0_29 = arith.constant 0 : index
    %40 = vector.load %arg12[%c0_27, %c0_28, %c0_29] : memref<1x8x128xf32, #tpu.memory_space<vmem>>, vector<1x8x128xf32>
    %41 = vector.shape_cast %40 : vector<1x8x128xf32> to vector<8x128xf32>
    %42 = vector.shape_cast %39 : vector<8x128xf32> to vector<1x8x128xf32>
    tpu.vector_store %arg12[%c0_27, %c0_28, %c0_29], %42 {strides = array<i32>} : memref<1x8x128xf32, #tpu.memory_space<vmem>>, vector<1x8x128xf32>,
    return
  }
  func.func @transform_0(%arg0: i32, %arg1: i32) -> (i32, i32) {
    %c1_i32 = arith.constant 1 : i32
    %0 = arith.muli %arg0, %c1_i32 : i32
    %1 = arith.addi %0, %arg1 : i32
    %c0_i32 = arith.constant 0 : i32
    %c0_i32_0 = arith.constant 0 : i32
    return %1, %c0_i32 : i32, i32
  }
  func.func @transform_1(%arg0: i32, %arg1: i32) -> (i32, i32) {
    %c1_i32 = arith.constant 1 : i32
    %0 = arith.muli %arg0, %c1_i32 : i32
    %1 = arith.addi %0, %arg1 : i32
    %c0_i32 = arith.constant 0 : i32
    %c0_i32_0 = arith.constant 0 : i32
    return %c0_i32, %1 : i32, i32
  }
  func.func @transform_2(%arg0: i32, %arg1: i32) -> (i32, i32) {
    %c1_i32 = arith.constant 1 : i32
    %0 = arith.muli %arg0, %c1_i32 : i32
    %1 = arith.addi %0, %arg1 : i32
    %c0_i32 = arith.constant 0 : i32
    %c0_i32_0 = arith.constant 0 : i32
    return %1, %c0_i32 : i32, i32
  }
  func.func @transform_3(%arg0: i32, %arg1: i32) -> (i32, i32) {
    %c0_i32 = arith.constant 0 : i32
    %c0_i32_0 = arith.constant 0 : i32
    %c0_i32_1 = arith.constant 0 : i32
    return %c0_i32, %c0_i32_0 : i32, i32
  }
  func.func @transform_4(%arg0: i32, %arg1: i32) -> (i32, i32) {
    %c0_i32 = arith.constant 0 : i32
    %c0_i32_0 = arith.constant 0 : i32
    %c0_i32_1 = arith.constant 0 : i32
    return %c0_i32, %c0_i32_0 : i32, i32
  }
  func.func @transform_5(%arg0: i32, %arg1: i32) -> (i32, i32) {
    %c0_i32 = arith.constant 0 : i32
    %c0_i32_0 = arith.constant 0 : i32
    %c0_i32_1 = arith.constant 0 : i32
    return %c0_i32, %c0_i32_0 : i32, i32
  }
  func.func @transform_6(%arg0: i32, %arg1: i32) -> (i32, i32) {
    %c0_i32 = arith.constant 0 : i32
    %c0_i32_0 = arith.constant 0 : i32
    %c0_i32_1 = arith.constant 0 : i32
    return %c0_i32, %c0_i32_0 : i32, i32
  }
  func.func @transform_7(%arg0: i32, %arg1: i32) -> (i32, i32) {
    %c0_i32 = arith.constant 0 : i32
    %c0_i32_0 = arith.constant 0 : i32
    %c0_i32_1 = arith.constant 0 : i32
    return %c0_i32, %c0_i32_0 : i32, i32
  }
  func.func @transform_8(%arg0: i32, %arg1: i32) -> (i32, i32) {
    %c0_i32 = arith.constant 0 : i32
    %c0_i32_0 = arith.constant 0 : i32
    %c0_i32_1 = arith.constant 0 : i32
    return %c0_i32, %c0_i32_0 : i32, i32
  }
  func.func @transform_9(%arg0: i32, %arg1: i32) -> (i32, i32) {
    %c0_i32 = arith.constant 0 : i32
    %c0_i32_0 = arith.constant 0 : i32
    %c0_i32_1 = arith.constant 0 : i32
    return %c0_i32, %c0_i32_0 : i32, i32
  }
  func.func @transform_10(%arg0: i32, %arg1: i32) -> (i32, i32, i32) {
    %c0_i32 = arith.constant 0 : i32
    %c0_i32_0 = arith.constant 0 : i32
    %c0_i32_1 = arith.constant 0 : i32
    return %arg0, %c0_i32, %c0_i32_0 : i32, i32, i32
  }
}

</mosaic_0001>

<llo_original>
// kernel: tpu_custom_call.1
$region0: #{tpu_custom_call.1}
  #allocation0 [shape = 'u32[]', space=smem, size = 0x4, offset = 0x4, fixed_abs, tag = 'smem constant byte address 0x4 - core index']
  #allocation1 [shape = 'u32[144,128]{1,0:T(1,128)}', space=vmem, size = 0x12000, scoped, tag = 'internal scratch']
  %s0 = inlined_call_operand.vmem [shape: f32[256,8], index: 0, kind: input, shape index: {}]
  %s1 = inlined_call_operand.vmem [shape: bf16[8,256], index: 1, kind: input, shape index: {}]
  %s2 = inlined_call_operand.vmem [shape: f32[256,1], index: 2, kind: input, shape index: {}]
  %s3 = inlined_call_operand.vmem [shape: f32[1,4], index: 3, kind: input, shape index: {}]
  %s4 = inlined_call_operand.vmem [shape: f32[8,128], index: 4, kind: input, shape index: {}]
  %s5 = inlined_call_operand.vmem [shape: f32[4,128], index: 5, kind: input, shape index: {}]
  %s6 = inlined_call_operand.vmem [shape: f32[4,128], index: 6, kind: input, shape index: {}]
  %s7 = inlined_call_operand.vmem [shape: f32[1,128], index: 7, kind: input, shape index: {}]
  %s8 = inlined_call_operand.vmem [shape: f32[1,128], index: 8, kind: input, shape index: {}]
  %s9 = inlined_call_operand.vmem [shape: f32[1,128], index: 9, kind: input, shape index: {}]
  %s10 = inlined_call_operand.hbm [shape: f32[2,8,128], index: 10, kind: output, shape index: {}]
  %s11 = sld [smem:[#allocation0]]
  $region77: #{tpu_custom_call.1} parent=0
    _
  %s13 = ssub.s32 1, %s11
  %s14 = scalar_select 0, %s13, %s11
  $region1: #{tpu_custom_call.1} parent=0
    #allocation2 [shape = 'u8[8192]{0}', space=vmem, size = 0x2000, scoped, tag = 'output window, operand 0']
    #allocation3 [shape = 's32[2]{0}', space=sflag, size = 0x8, scoped, tag = 'scoped memory for tpu_custom_call.1']
    %15 = vsyncpa [#allocation3], 0
    %s16 = scalar_lea.sflag [#allocation3], 1
    %17 = vsyncpa %s16, 0
    loop: start=0, step=1, limit=4
    $region2: #{tpu_custom_call.1} parent=1 // loop_pre_header
      _
    $region3: #{tpu_custom_call.1} parent=1 // loop_header
      %s19 = sphi 0, %s23
      %p20 = scmp.ge.s32.totalorder %s19, 4
      %s26 = sphi 0, %s38
      %s27 = sphi 0, %s34
      %s28 = sphi 0, %s26
      %s29 = sphi 0, %s27
      %s30 = sphi 0, %s28
      %s31 = sphi 0, %s29
      %s43 = sphi 0, %s45
      %s46 = sphi 0, %s43
      %s47 = sphi 0, %s46
      %s63 = sphi 0, %s47
      %s71 = sphi 0, %s73
      %s74 = sphi 0, %s71
      %s75 = sphi 0, %s74
      %s91 = sphi 0, %s75
      %s99 = sphi 0, %s101
      %s102 = sphi 0, %s99
      %s103 = sphi 0, %s102
      %s119 = sphi 0, %s103
      %s123 = sphi 0, %s123
      %s125 = sphi 0, %s123
      %s126 = sphi 0, %s125
      %s140 = sphi 0, %s126
      %s144 = sphi 0, %s144
      %s146 = sphi 0, %s144
      %s147 = sphi 0, %s146
      %s161 = sphi 0, %s147
      %s165 = sphi 0, %s165
      %s167 = sphi 0, %s165
      %s168 = sphi 0, %s167
      %s182 = sphi 0, %s168
      %s186 = sphi 0, %s186
      %s188 = sphi 0, %s186
      %s189 = sphi 0, %s188
      %s203 = sphi 0, %s189
      %s207 = sphi 0, %s207
      %s209 = sphi 0, %s207
      %s210 = sphi 0, %s209
      %s224 = sphi 0, %s210
      %s228 = sphi 0, %s228
      %s230 = sphi 0, %s228
      %s231 = sphi 0, %s230
      %s245 = sphi 0, %s231
      %s249 = sphi 0, %s249
      %s251 = sphi 0, %s249
      %s252 = sphi 0, %s251
      %s266 = sphi 0, %s252
      %s272 = sphi 0, %s274
      %s275 = sphi 0, %s272
      %s276 = sphi 0, %s275
      %s292 = sphi 0, %s276
    $region4: #{tpu_custom_call.1} parent=1 // loop_header_branch
      %22 = sbr.rel (%p20) target = $region8
    $region5: #{tpu_custom_call.1} parent=1 // loop_body
      %s24 = ssub.s32 %s19, 1
      %s25 = ssub.s32 %s19, 2
      %s32 = sadd.s32 1, %s27
      %p33 = scmp.ge.s32.totalorder %s32, 1
      %s34 = scalar_select %p33, 0, %s32
      %s35 = sadd.s32 1, %s26
      %s36 = scalar_select %p33, %s35, %s26
      %p37 = scmp.ge.s32.totalorder %s36, 2
      %s38 = scalar_select %p37, 0, %s36
      %s39 = sadd.s32 %s26, %s27
      %s40 = sadd.s32 %s38, %s34
      %s41 = ssub.s32 %s39, %s40
      %p42 = scmp.eq.s32.totalorder %s41, 0
      %s44 = sadd.s32 %s43, 1
      %s45 = scalar_select %p42, %s43, %s44
      %p48 = pneg %p42
      %p49 = scmp.eq.s32.totalorder %s19, 1
      %p50 = por %p48, %p49
      %p51 = scmp.ne.s32.totalorder %s43, %s46
      %p52 = scmp.eq.s32.totalorder %s19, 0
      %p53 = por %p51, %p52
      %p54 = scmp.ne.s32.totalorder %s43, %s46
      %p55 = scmp.eq.s32.totalorder %s24, 1
      %p56 = por %p54, %p55
      %p57 = scmp.ne.s32.totalorder %s46, %s47
      %p58 = scmp.eq.s32.totalorder %s24, 0
      %p59 = por %p57, %p58
      %p60 = scmp.ne.s32.totalorder %s46, %s47
      %p61 = scmp.eq.s32.totalorder %s25, 1
      %p62 = por %p60, %p61
      %p64 = scmp.ne.s32.totalorder %s47, %s63
      %p65 = scmp.eq.s32.totalorder %s25, 0
      %p66 = por %p64, %p65
      %s67 = sadd.s32 %s26, %s27
      %s68 = sadd.s32 %s38, %s34
      %s69 = ssub.s32 %s67, %s68
      %p70 = scmp.eq.s32.totalorder %s69, 0
      %s72 = sadd.s32 %s71, 1
      %s73 = scalar_select %p70, %s71, %s72
      %p76 = pneg %p70
      %p77 = scmp.eq.s32.totalorder %s19, 1
      %p78 = por %p76, %p77
      %p79 = scmp.ne.s32.totalorder %s71, %s74
      %p80 = scmp.eq.s32.totalorder %s19, 0
      %p81 = por %p79, %p80
      %p82 = scmp.ne.s32.totalorder %s71, %s74
      %p83 = scmp.eq.s32.totalorder %s24, 1
      %p84 = por %p82, %p83
      %p85 = scmp.ne.s32.totalorder %s74, %s75
      %p86 = scmp.eq.s32.totalorder %s24, 0
      %p87 = por %p85, %p86
      %p88 = scmp.ne.s32.totalorder %s74, %s75
      %p89 = scmp.eq.s32.totalorder %s25, 1
      %p90 = por %p88, %p89
      %p92 = scmp.ne.s32.totalorder %s75, %s91
      %p93 = scmp.eq.s32.totalorder %s25, 0
      %p94 = por %p92, %p93
      %s95 = sadd.s32 %s26, %s27
      %s96 = sadd.s32 %s38, %s34
      %s97 = ssub.s32 %s95, %s96
      %p98 = scmp.eq.s32.totalorder %s97, 0
      %s100 = sadd.s32 %s99, 1
      %s101 = scalar_select %p98, %s99, %s100
      %p104 = pneg %p98
      %p105 = scmp.eq.s32.totalorder %s19, 1
      %p106 = por %p104, %p105
      %p107 = scmp.ne.s32.totalorder %s99, %s102
      %p108 = scmp.eq.s32.totalorder %s19, 0
      %p109 = por %p107, %p108
      %p110 = scmp.ne.s32.totalorder %s99, %s102
      %p111 = scmp.eq.s32.totalorder %s24, 1
      %p112 = por %p110, %p111
      %p113 = scmp.ne.s32.totalorder %s102, %s103
      %p114 = scmp.eq.s32.totalorder %s24, 0
      %p115 = por %p113, %p114
      %p116 = scmp.ne.s32.totalorder %s102, %s103
      %p117 = scmp.eq.s32.totalorder %s25, 1
      %p118 = por %p116, %p117
      %p120 = scmp.ne.s32.totalorder %s103, %s119
      %p121 = scmp.eq.s32.totalorder %s25, 0
      %p122 = por %p120, %p121
      %s124 = sadd.s32 %s123, 1
      %p127 = scmp.eq.s32.totalorder %s19, 1
      %p128 = scmp.ne.s32.totalorder %s123, %s125
      %p129 = scmp.eq.s32.totalorder %s19, 0
      %p130 = por %p128, %p129
      %p131 = scmp.ne.s32.totalorder %s123, %s125
      %p132 = scmp.eq.s32.totalorder %s24, 1
      %p133 = por %p131, %p132
      %p134 = scmp.ne.s32.totalorder %s125, %s126
      %p135 = scmp.eq.s32.totalorder %s24, 0
      %p136 = por %p134, %p135
      %p137 = scmp.ne.s32.totalorder %s125, %s126
      %p138 = scmp.eq.s32.totalorder %s25, 1
      %p139 = por %p137, %p138
      %p141 = scmp.ne.s32.totalorder %s126, %s140
      %p142 = scmp.eq.s32.totalorder %s25, 0
      %p143 = por %p141, %p142
      %s145 = sadd.s32 %s144, 1
      %p148 = scmp.eq.s32.totalorder %s19, 1
      %p149 = scmp.ne.s32.totalorder %s144, %s146
      %p150 = scmp.eq.s32.totalorder %s19, 0
      %p151 = por %p149, %p150
      %p152 = scmp.ne.s32.totalorder %s144, %s146
      %p153 = scmp.eq.s32.totalorder %s24, 1
      %p154 = por %p152, %p153
      %p155 = scmp.ne.s32.totalorder %s146, %s147
      %p156 = scmp.eq.s32.totalorder %s24, 0
      %p157 = por %p155, %p156
      %p158 = scmp.ne.s32.totalorder %s146, %s147
      %p159 = scmp.eq.s32.totalorder %s25, 1
      %p160 = por %p158, %p159
      %p162 = scmp.ne.s32.totalorder %s147, %s161
      %p163 = scmp.eq.s32.totalorder %s25, 0
      %p164 = por %p162, %p163
      %s166 = sadd.s32 %s165, 1
      %p169 = scmp.eq.s32.totalorder %s19, 1
      %p170 = scmp.ne.s32.totalorder %s165, %s167
      %p171 = scmp.eq.s32.totalorder %s19, 0
      %p172 = por %p170, %p171
      %p173 = scmp.ne.s32.totalorder %s165, %s167
      %p174 = scmp.eq.s32.totalorder %s24, 1
      %p175 = por %p173, %p174
      %p176 = scmp.ne.s32.totalorder %s167, %s168
      %p177 = scmp.eq.s32.totalorder %s24, 0
      %p178 = por %p176, %p177
      %p179 = scmp.ne.s32.totalorder %s167, %s168
      %p180 = scmp.eq.s32.totalorder %s25, 1
      %p181 = por %p179, %p180
      %p183 = scmp.ne.s32.totalorder %s168, %s182
      %p184 = scmp.eq.s32.totalorder %s25, 0
      %p185 = por %p183, %p184
      %s187 = sadd.s32 %s186, 1
      %p190 = scmp.eq.s32.totalorder %s19, 1
      %p191 = scmp.ne.s32.totalorder %s186, %s188
      %p192 = scmp.eq.s32.totalorder %s19, 0
      %p193 = por %p191, %p192
      %p194 = scmp.ne.s32.totalorder %s186, %s188
      %p195 = scmp.eq.s32.totalorder %s24, 1
      %p196 = por %p194, %p195
      %p197 = scmp.ne.s32.totalorder %s188, %s189
      %p198 = scmp.eq.s32.totalorder %s24, 0
      %p199 = por %p197, %p198
      %p200 = scmp.ne.s32.totalorder %s188, %s189
      %p201 = scmp.eq.s32.totalorder %s25, 1
      %p202 = por %p200, %p201
      %p204 = scmp.ne.s32.totalorder %s189, %s203
      %p205 = scmp.eq.s32.totalorder %s25, 0
      %p206 = por %p204, %p205
      %s208 = sadd.s32 %s207, 1
      %p211 = scmp.eq.s32.totalorder %s19, 1
      %p212 = scmp.ne.s32.totalorder %s207, %s209
      %p213 = scmp.eq.s32.totalorder %s19, 0
      %p214 = por %p212, %p213
      %p215 = scmp.ne.s32.totalorder %s207, %s209
      %p216 = scmp.eq.s32.totalorder %s24, 1
      %p217 = por %p215, %p216
      %p218 = scmp.ne.s32.totalorder %s209, %s210
      %p219 = scmp.eq.s32.totalorder %s24, 0
      %p220 = por %p218, %p219
      %p221 = scmp.ne.s32.totalorder %s209, %s210
      %p222 = scmp.eq.s32.totalorder %s25, 1
      %p223 = por %p221, %p222
      %p225 = scmp.ne.s32.totalorder %s210, %s224
      %p226 = scmp.eq.s32.totalorder %s25, 0
      %p227 = por %p225, %p226
      %s229 = sadd.s32 %s228, 1
      %p232 = scmp.eq.s32.totalorder %s19, 1
      %p233 = scmp.ne.s32.totalorder %s228, %s230
      %p234 = scmp.eq.s32.totalorder %s19, 0
      %p235 = por %p233, %p234
      %p236 = scmp.ne.s32.totalorder %s228, %s230
      %p237 = scmp.eq.s32.totalorder %s24, 1
      %p238 = por %p236, %p237
      %p239 = scmp.ne.s32.totalorder %s230, %s231
      %p240 = scmp.eq.s32.totalorder %s24, 0
      %p241 = por %p239, %p240
      %p242 = scmp.ne.s32.totalorder %s230, %s231
      %p243 = scmp.eq.s32.totalorder %s25, 1
      %p244 = por %p242, %p243
      %p246 = scmp.ne.s32.totalorder %s231, %s245
      %p247 = scmp.eq.s32.totalorder %s25, 0
      %p248 = por %p246, %p247
      %s250 = sadd.s32 %s249, 1
      %p253 = scmp.eq.s32.totalorder %s19, 1
      %p254 = scmp.ne.s32.totalorder %s249, %s251
      %p255 = scmp.eq.s32.totalorder %s19, 0
      %p256 = por %p254, %p255
      %p257 = scmp.ne.s32.totalorder %s249, %s251
      %p258 = scmp.eq.s32.totalorder %s24, 1
      %p259 = por %p257, %p258
      %p260 = scmp.ne.s32.totalorder %s251, %s252
      %p261 = scmp.eq.s32.totalorder %s24, 0
      %p262 = por %p260, %p261
      %p263 = scmp.ne.s32.totalorder %s251, %s252
      %p264 = scmp.eq.s32.totalorder %s25, 1
      %p265 = por %p263, %p264
      %p267 = scmp.ne.s32.totalorder %s252, %s266
      %p268 = scmp.eq.s32.totalorder %s25, 0
      %p269 = por %p267, %p268
      %s270 = ssub.s32 %s26, %s38
      %p271 = scmp.eq.s32.totalorder %s270, 0
      %s273 = sadd.s32 %s272, 1
      %s274 = scalar_select %p271, %s272, %s273
      %p277 = pneg %p271
      %p278 = scmp.eq.s32.totalorder %s19, 1
      %p279 = por %p277, %p278
      %p280 = scmp.ne.s32.totalorder %s272, %s275
      %p281 = scmp.eq.s32.totalorder %s19, 0
      %p282 = por %p280, %p281
      %p283 = scmp.ne.s32.totalorder %s272, %s275
      %p284 = scmp.eq.s32.totalorder %s24, 1
      %p285 = por %p283, %p284
      %p286 = scmp.ne.s32.totalorder %s275, %s276
      %p287 = scmp.eq.s32.totalorder %s24, 0
      %p288 = por %p286, %p287
      %p289 = scmp.ne.s32.totalorder %s275, %s276
      %p290 = scmp.eq.s32.totalorder %s25, 1
      %p291 = por %p289, %p290
      %p293 = scmp.ne.s32.totalorder %s276, %s292
      %p294 = scmp.eq.s32.totalorder %s25, 0
      %p295 = por %p293, %p294
      %p296 = scmp.le.s32.totalorder 1, %s19
      %p297 = scmp.lt.s32.totalorder %s19, 3
      %p298 = pnand %p296, %p297
      %p299 = pneg %p298
      // Predicated region
      $region9: #{tpu_custom_call.1} parent=5 // pred_check
        _
      $region10: #{tpu_custom_call.1} parent=5 // pred_check_branch
        %301 = sbr.rel (%p298) target = $region12
      $region11: #{tpu_custom_call.1} parent=5 // pred_region
        %s302 = ssub.s32 %s19, 1
        // Predicated region
        $region13: #{tpu_custom_call.1} parent=11 // pred_check
          %p303 = pneg %p136
        $region14: #{tpu_custom_call.1} parent=11 // pred_check_branch
          %305 = sbr.rel (%p303) target = $region16
        $region15: #{tpu_custom_call.1} parent=11 // pred_region
          _
        $region16: #{tpu_custom_call.1} parent=11 // pred_fallthru
          _
        // Predicated region
        $region17: #{tpu_custom_call.1} parent=11 // pred_check
          %p306 = pneg %p157
        $region18: #{tpu_custom_call.1} parent=11 // pred_check_branch
          %308 = sbr.rel (%p306) target = $region20
        $region19: #{tpu_custom_call.1} parent=11 // pred_region
          _
        $region20: #{tpu_custom_call.1} parent=11 // pred_fallthru
          _
        // Predicated region
        $region21: #{tpu_custom_call.1} parent=11 // pred_check
          %p309 = pneg %p178
        $region22: #{tpu_custom_call.1} parent=11 // pred_check_branch
          %311 = sbr.rel (%p309) target = $region24
        $region23: #{tpu_custom_call.1} parent=11 // pred_region
          _
        $region24: #{tpu_custom_call.1} parent=11 // pred_fallthru
          _
        // Predicated region
        $region25: #{tpu_custom_call.1} parent=11 // pred_check
          %p312 = pneg %p199
        $region26: #{tpu_custom_call.1} parent=11 // pred_check_branch
          %314 = sbr.rel (%p312) target = $region28
        $region27: #{tpu_custom_call.1} parent=11 // pred_region
          _
        $region28: #{tpu_custom_call.1} parent=11 // pred_fallthru
          _
        // Predicated region
        $region29: #{tpu_custom_call.1} parent=11 // pred_check
          %p315 = pneg %p220
        $region30: #{tpu_custom_call.1} parent=11 // pred_check_branch
          %317 = sbr.rel (%p315) target = $region32
        $region31: #{tpu_custom_call.1} parent=11 // pred_region
          _
        $region32: #{tpu_custom_call.1} parent=11 // pred_fallthru
          _
        // Predicated region
        $region33: #{tpu_custom_call.1} parent=11 // pred_check
          %p318 = pneg %p241
        $region34: #{tpu_custom_call.1} parent=11 // pred_check_branch
          %320 = sbr.rel (%p318) target = $region36
        $region35: #{tpu_custom_call.1} parent=11 // pred_region
          _
        $region36: #{tpu_custom_call.1} parent=11 // pred_fallthru
          _
        // Predicated region
        $region37: #{tpu_custom_call.1} parent=11 // pred_check
          %p321 = pneg %p262
        $region38: #{tpu_custom_call.1} parent=11 // pred_check_branch
          %323 = sbr.rel (%p321) target = $region40
        $region39: #{tpu_custom_call.1} parent=11 // pred_region
          _
        $region40: #{tpu_custom_call.1} parent=11 // pred_fallthru
          _
      $region12: #{tpu_custom_call.1} parent=5 // pred_fallthru
        _
      %p324 = scmp.lt.s32.totalorder %s19, 2
      // Predicated region
      $region41: #{tpu_custom_call.1} parent=5 // pred_check
        %p325 = pneg %p324
      $region42: #{tpu_custom_call.1} parent=5 // pred_check_branch
        %327 = sbr.rel (%p325) target = $region44
      $region43: #{tpu_custom_call.1} parent=5 // pred_region
        // Predicated region
        $region45: #{tpu_custom_call.1} parent=43 // pred_check
          %p328 = pneg %p53
        $region46: #{tpu_custom_call.1} parent=43 // pred_check_branch
          %330 = sbr.rel (%p328) target = $region48
        $region47: #{tpu_custom_call.1} parent=43 // pred_region
          %s331 = sadd.s32 %s26, %s27
          %s332 = smul.u32 16, %s331
          %p333 = scmp.lt.s32.totalorder %s332, 31
          %s334 = scalar_select %p333, %s332, 31
          %s335 = smul.addr %s334, 8
          %s336 = scalar_lea.vmem %s0, %s335
          %s337 = sadd.s32 %s26, %s27
          %s338 = smul.u32 16, %s337
        $region48: #{tpu_custom_call.1} parent=43 // pred_fallthru
          _
        // Predicated region
        $region49: #{tpu_custom_call.1} parent=43 // pred_check
          %p339 = pneg %p81
        $region50: #{tpu_custom_call.1} parent=43 // pred_check_branch
          %341 = sbr.rel (%p339) target = $region52
        $region51: #{tpu_custom_call.1} parent=43 // pred_region
          %s342 = sadd.s32 %s26, %s27
          %p343 = scmp.lt.s32.totalorder %s342, 1
          %s344 = scalar_select %p343, %s342, 1
          %s345 = smul.addr %s344, 4
          %s346 = scalar_lea.vmem %s1, %s345
          %s347 = sadd.s32 %s26, %s27
        $region52: #{tpu_custom_call.1} parent=43 // pred_fallthru
          _
        // Predicated region
        $region53: #{tpu_custom_call.1} parent=43 // pred_check
          %p348 = pneg %p109
        $region54: #{tpu_custom_call.1} parent=43 // pred_check_branch
          %350 = sbr.rel (%p348) target = $region56
        $region55: #{tpu_custom_call.1} parent=43 // pred_region
          %s351 = sadd.s32 %s26, %s27
          %s352 = smul.u32 16, %s351
          %p353 = scmp.lt.s32.totalorder %s352, 31
          %s354 = scalar_select %p353, %s352, 31
          %s355 = smul.addr %s354, 8
          %s356 = scalar_lea.vmem %s2, %s355
          %s357 = sadd.s32 %s26, %s27
          %s358 = smul.u32 16, %s357
        $region56: #{tpu_custom_call.1} parent=43 // pred_fallthru
          _
      $region44: #{tpu_custom_call.1} parent=5 // pred_fallthru
        _
      %p359 = scmp.le.s32.totalorder 1, %s19
      %p360 = scmp.lt.s32.totalorder %s19, 3
      %p361 = pnand %p359, %p360
      %p362 = pneg %p361
      // Predicated region
      $region57: #{tpu_custom_call.1} parent=5 // pred_check
        _
      $region58: #{tpu_custom_call.1} parent=5 // pred_check_branch
        %364 = sbr.rel (%p361) target = $region60
      $region59: #{tpu_custom_call.1} parent=5 // pred_region
        %s365 = ssub.s32 %s19, 1
        %s366 = sadd.s32 %s28, %s29
        %s367 = smul.u32 16, %s366
        %p368 = scmp.lt.s32.totalorder %s367, 31
        %s369 = scalar_select %p368, %s367, 31
        %s370 = smul.addr %s369, 8
        %s371 = scalar_lea.vmem %s0, %s370
        %p372 = pneg %p59
        %p373 = pneg %p56
        %s374 = sadd.s32 %s28, %s29
        %p375 = scmp.lt.s32.totalorder %s374, 1
        %s376 = scalar_select %p375, %s374, 1
        %s377 = smul.addr %s376, 4
        %s378 = scalar_lea.vmem %s1, %s377
        %p379 = pneg %p87
        %p380 = pneg %p84
        %s381 = sadd.s32 %s28, %s29
        %s382 = smul.u32 16, %s381
        %p383 = scmp.lt.s32.totalorder %s382, 31
        %s384 = scalar_select %p383, %s382, 31
        %s385 = smul.addr %s384, 8
        %s386 = scalar_lea.vmem %s2, %s385
        %p387 = pneg %p115
        %p388 = pneg %p112
        %p389 = pneg %p136
        %p390 = pneg %p133
        %p391 = pneg %p157
        %p392 = pneg %p154
        %p393 = pneg %p178
        %p394 = pneg %p175
        %p395 = pneg %p199
        %p396 = pneg %p196
        %p397 = pneg %p220
        %p398 = pneg %p217
        %p399 = pneg %p241
        %p400 = pneg %p238
        %p401 = pneg %p262
        %p402 = pneg %p259
        %p403 = pneg %p288
        %p404 = pneg %p285
        %s405 = sand.u32 %s275, 1
        %s406 = scalar_lea.sflag [#allocation3], %s405
        %s407 = sand.u32 %s275, 1
        %s408 = smul.addr %s407, 8
        %s409 = scalar_lea.vmem [#allocation2], %s408
        %s410 = sadd.s32 %s28, %s29
        %s411 = smul.u32 16, %s410
        %p412 = scmp.lt.s32.totalorder %s411, 31
        %s413 = scalar_select %p412, %s411, 31
        %s414 = smul.addr %s413, 8
        %s415 = scalar_lea.vmem %s0, %s414
        %s416 = sadd.s32 %s28, %s29
        %s417 = smul.u32 16, %s416
        %s418 = sadd.s32 %s28, %s29
        %p419 = scmp.lt.s32.totalorder %s418, 1
        %s420 = scalar_select %p419, %s418, 1
        %s421 = smul.addr %s420, 4
        %s422 = scalar_lea.vmem %s1, %s421
        %s423 = sadd.s32 %s28, %s29
        %s424 = sadd.s32 %s28, %s29
        %s425 = smul.u32 16, %s424
        %p426 = scmp.lt.s32.totalorder %s425, 31
        %s427 = scalar_select %p426, %s425, 31
        %s428 = smul.addr %s427, 8
        %s429 = scalar_lea.vmem %s2, %s428
        %s430 = sadd.s32 %s28, %s29
        %s431 = smul.u32 16, %s430
        %p432 = scmp.eq.s32.totalorder %s29, 0
        // Predicated region
        $region61: #{tpu_custom_call.1} parent=59 // pred_check
          %p433 = pneg %p432
        $region62: #{tpu_custom_call.1} parent=59 // pred_check_branch
          %435 = sbr.rel (%p433) target = $region64
        $region63: #{tpu_custom_call.1} parent=59 // pred_region
          %436 = vst [vmem:[%s409] sm:$0xff] 0.0
        $region64: #{tpu_custom_call.1} parent=59 // pred_fallthru
          _
        %v437 = vld [vmem:[%s415] sm:$0xff]
        %v438 = vld [vmem:[%s415 + $0x8] sm:$0xff]
        %v439 = vld [vmem:[%s415 + $0x10] sm:$0xff]
        %v440 = vld [vmem:[%s415 + $0x18] sm:$0xff]
        %v441 = vld [vmem:[%s415 + $0x20] sm:$0xff]
        %v442 = vld [vmem:[%s415 + $0x28] sm:$0xff]
        %v443 = vld [vmem:[%s415 + $0x30] sm:$0xff]
        %v444 = vld [vmem:[%s415 + $0x38] sm:$0xff]
        %v445 = vld [vmem:[%s415 + $0x40] sm:$0xff]
        %v446 = vld [vmem:[%s415 + $0x48] sm:$0xff]
        %v447 = vld [vmem:[%s415 + $0x50] sm:$0xff]
        %v448 = vld [vmem:[%s415 + $0x58] sm:$0xff]
        %v449 = vld [vmem:[%s415 + $0x60] sm:$0xff]
        %v450 = vld [vmem:[%s415 + $0x68] sm:$0xff]
        %v451 = vld [vmem:[%s415 + $0x70] sm:$0xff]
        %v452 = vld [vmem:[%s415 + $0x78] sm:$0xff]
        %v453 = vld [vmem:[%s429] sm:$0xff]
        %v454 = vld [vmem:[%s429 + $0x8] sm:$0xff]
        %v455 = vld [vmem:[%s429 + $0x10] sm:$0xff]
        %v456 = vld [vmem:[%s429 + $0x18] sm:$0xff]
        %v457 = vld [vmem:[%s429 + $0x20] sm:$0xff]
        %v458 = vld [vmem:[%s429 + $0x28] sm:$0xff]
        %v459 = vld [vmem:[%s429 + $0x30] sm:$0xff]
        %v460 = vld [vmem:[%s429 + $0x38] sm:$0xff]
        %v461 = vld [vmem:[%s429 + $0x40] sm:$0xff]
        %v462 = vld [vmem:[%s429 + $0x48] sm:$0xff]
        %v463 = vld [vmem:[%s429 + $0x50] sm:$0xff]
        %v464 = vld [vmem:[%s429 + $0x58] sm:$0xff]
        %v465 = vld [vmem:[%s429 + $0x60] sm:$0xff]
        %v466 = vld [vmem:[%s429 + $0x68] sm:$0xff]
        %v467 = vld [vmem:[%s429 + $0x70] sm:$0xff]
        %v468 = vld [vmem:[%s429 + $0x78] sm:$0xff]
        %v469 = vld [vmem:[%s3] sm:$0x1]
        %471 = vset.pattern.permute.xlu0 0
        %472 = vperm.xlu0 %471, %v453
        %v473 = vpop.permute.xlu0 %472
        %476 = vset.pattern.permute.xlu0 0
        %477 = vperm.xlu0 %476, %v454
        %v478 = vpop.permute.xlu0 %477
        %481 = vset.pattern.permute.xlu0 0
        %482 = vperm.xlu0 %481, %v455
        %v483 = vpop.permute.xlu0 %482
        %486 = vset.pattern.permute.xlu0 0
        %487 = vperm.xlu0 %486, %v456
        %v488 = vpop.permute.xlu0 %487
        %491 = vset.pattern.permute.xlu0 0
        %492 = vperm.xlu0 %491, %v457
        %v493 = vpop.permute.xlu0 %492
        %496 = vset.pattern.permute.xlu0 0
        %497 = vperm.xlu0 %496, %v458
        %v498 = vpop.permute.xlu0 %497
        %501 = vset.pattern.permute.xlu0 0
        %502 = vperm.xlu0 %501, %v459
        %v503 = vpop.permute.xlu0 %502
        %506 = vset.pattern.permute.xlu0 0
        %507 = vperm.xlu0 %506, %v460
        %v508 = vpop.permute.xlu0 %507
        %511 = vset.pattern.permute.xlu0 0
        %512 = vperm.xlu0 %511, %v461
        %v513 = vpop.permute.xlu0 %512
        %516 = vset.pattern.permute.xlu0 0
        %517 = vperm.xlu0 %516, %v462
        %v518 = vpop.permute.xlu0 %517
        %521 = vset.pattern.permute.xlu0 0
        %522 = vperm.xlu0 %521, %v463
        %v523 = vpop.permute.xlu0 %522
        %526 = vset.pattern.permute.xlu0 0
        %527 = vperm.xlu0 %526, %v464
        %v528 = vpop.permute.xlu0 %527
        %531 = vset.pattern.permute.xlu0 0
        %532 = vperm.xlu0 %531, %v465
        %v533 = vpop.permute.xlu0 %532
        %536 = vset.pattern.permute.xlu0 0
        %537 = vperm.xlu0 %536, %v466
        %v538 = vpop.permute.xlu0 %537
        %541 = vset.pattern.permute.xlu0 0
        %542 = vperm.xlu0 %541, %v467
        %v543 = vpop.permute.xlu0 %542
        %546 = vset.pattern.permute.xlu0 0
        %547 = vperm.xlu0 %546, %v468
        %v548 = vpop.permute.xlu0 %547
        %v551 = vlaneseq
        %v552 = vshrl.u32 %v551, 7
        %v553 = vsub.s32 0, %v552
        %v554 = vrot.slane %v469, %v553
        %v556 = vmul.f32 %v473, %v554
        %v557 = vmul.f32 %v478, %v554
        %v558 = vmul.f32 %v483, %v554
        %v559 = vmul.f32 %v488, %v554
        %v560 = vmul.f32 %v493, %v554
        %v561 = vmul.f32 %v498, %v554
        %v562 = vmul.f32 %v503, %v554
        %v563 = vmul.f32 %v508, %v554
        %v564 = vmul.f32 %v513, %v554
        %v565 = vmul.f32 %v518, %v554
        %v566 = vmul.f32 %v523, %v554
        %v567 = vmul.f32 %v528, %v554
        %v568 = vmul.f32 %v533, %v554
        %v569 = vmul.f32 %v538, %v554
        %v570 = vmul.f32 %v543, %v554
        %v571 = vmul.f32 %v548, %v554
        %v572 = vand.u32 2147483647, %v556
        %vm573 = vcmp.le.f32.partialorder %v572, 0.7853982
        %vm574 = vcmp.lt.s32.totalorder %v556, 0
        %v575 = vand.u32 %v556, 2139095040
        %v576 = vshrl.u32 %v575, 23
        %v577 = vsub.s32 %v576, 127
        %v578 = vand.u32 2147483647, %v556
        %v579 = vand.u32 %v578, 8388607
        %v580 = vor.u32 %v579, 8388608
        %v581 = vsub.s32 0, %v580
        %v582 = vadd.s32 %v577, 1
        %vm583 = vcmp.gt.s32.totalorder %v582, 0
        %v584 = vsel %vm583, %v582, 0
        %v585 = vshrl.u32 %v584, 5
        %v586 = vand.u32 %v584, 31
        %v587 = vsub.s32 32, %v586
        %v588 = vshrl.u32 683565275, %v587
        %v589 = vshll.u32 683565275, %v586
        %v590 = vshrl.u32 2475754826, %v587
        %v591 = vor.u32 %v589, %v590
        %v592 = vshll.u32 2475754826, %v586
        %v593 = vshrl.u32 2131351028, %v587
        %v594 = vor.u32 %v592, %v593
        %v595 = vshll.u32 2131351028, %v586
        %v596 = vshrl.u32 2102212464, %v587
        %v597 = vor.u32 %v595, %v596
        %v598 = vshll.u32 2102212464, %v586
        %v599 = vshrl.u32 920167782, %v587
        %v600 = vor.u32 %v598, %v599
        %v601 = vshll.u32 920167782, %v586
        %v602 = vshrl.u32 1326507024, %v587
        %v603 = vor.u32 %v601, %v602
        %vm604 = vcmp.lt.s32.totalorder %v585, 1
        %vm605 = vcmp.lt.s32.totalorder %v585, 2
        %vm606 = vcmp.lt.s32.totalorder %v585, 3
        %vm607 = vcmp.lt.s32.totalorder %v585, 4
        %v608 = vsel %vm604, %v588, %v591
        %v609 = vsel %vm607, %v597, 2102212464
        %v610 = vsel %vm606, %v594, %v609
        %v611 = vsel %vm605, %v608, %v610
        %v612 = vsel %vm604, %v591, %v594
        %v613 = vsel %vm607, %v600, 920167782
        %v614 = vsel %vm606, %v597, %v613
        %v615 = vsel %vm605, %v612, %v614
        %v616 = vsel %vm604, %v594, %v597
        %v617 = vsel %vm607, %v603, 1326507024
        %v618 = vsel %vm606, %v600, %v617
        %v619 = vsel %vm605, %v616, %v618
        %v620 = vshll.u32 %v580, 8
        %v621 = vmul.u32.u64.compose %v620, %v619
        %v622 = vextract.low.u32 %v621
        %v623 = vextract.high.u32 %v621
        %v624 = vmul.u32.u64.compose %v620, %v615
        %v625 = vextract.low.u32 %v624
        %v626 = vextract.high.u32 %v624
        %v627 = vmul.u32 %v620, %v611
        %v628 = vadd.s32 %v623, %v625
        %vm629 = vc.u32 %v623, %v625
        %v630 = vadd.s32 %v626, 1
        %v631 = vsel %vm629, %v630, %v626
        %v632 = vadd.s32 %v627, %v631
        %v633 = vadd.s32 %v632, 536870912
        %v634 = vshrl.u32 %v633, 30
        %v635 = vshll.u32 %v634, 30
        %v636 = vsub.s32 %v632, %v635
        %vm637 = vcmp.lt.s32.totalorder %v636, 0
        %v638 = vsub.s32 0, %v636
        %v639 = vsel %vm637, %v638, %v636
        %v640 = vclz %v639
        %v641 = vsub.s32 %v640, 2
        %vm642 = vcmp.gt.s32.totalorder 0, %v641
        %v643 = vsel %vm642, 0, %v641
        %v644 = vsub.s32 32, %v643
        %v645 = vshll.u32 %v636, %v643
        %v646 = vshrl.u32 %v628, %v644
        %v647 = vor.u32 %v645, %v646
        %v648 = vsub.s32 4294967266, %v643
        %v649 = vadd.s32 %v648, 127
        %v650 = vshll.u32 %v649, 23
        %v651 = vor.u32 4788187, %v650
        %v652 = vand.u32 2147483647, %v651
        %v654 = vcvt.s32.f32 %v647
        %v655 = vmul.f32 %v654, %v652
        %v656 = vxor.u32 %v655, 2147483648
        %v657 = vsel %vm574, %v656, %v655
        %v658 = vsub.s32 4, %v634
        %v659 = vsel %vm574, %v658, %v634
        %v660 = vsel %vm573, %v556, %v657
        %v661 = vsel %vm573, 0, %v659
        %v662 = vcosq.f32.pop %v660
        %v663 = vsinq.f32.pop %v660
        %vm664 = vweird.f32 %v556
        %v665 = vadd.s32 %v661, 3
        %v666 = vand.u32 %v665, 3
        %vm667 = vcmp.lt.s32.totalorder %v666, 2
        %vm668 = vcmp.eq.s32.totalorder %v666, 0
        %v669 = vxor.u32 %v663, 2147483648
        %v670 = vsel %vm668, %v662, %v669
        %vm671 = vcmp.eq.s32.totalorder %v666, 2
        %v672 = vxor.u32 %v662, 2147483648
        %v673 = vsel %vm671, %v672, %v663
        %v674 = vsel %vm667, %v670, %v673
        %v675 = vsel %vm664, nan, %v674
        %v676 = vand.u32 2147483647, %v557
        %vm677 = vcmp.le.f32.partialorder %v676, 0.7853982
        %vm678 = vcmp.lt.s32.totalorder %v557, 0
        %v679 = vand.u32 %v557, 2139095040
        %v680 = vshrl.u32 %v679, 23
        %v681 = vsub.s32 %v680, 127
        %v682 = vand.u32 2147483647, %v557
        %v683 = vand.u32 %v682, 8388607
        %v684 = vor.u32 %v683, 8388608
        %v685 = vsub.s32 0, %v684
        %v686 = vadd.s32 %v681, 1
        %vm687 = vcmp.gt.s32.totalorder %v686, 0
        %v688 = vsel %vm687, %v686, 0
        %v689 = vshrl.u32 %v688, 5
        %v690 = vand.u32 %v688, 31
        %v691 = vsub.s32 32, %v690
        %v692 = vshrl.u32 683565275, %v691
        %v693 = vshll.u32 683565275, %v690
        %v694 = vshrl.u32 2475754826, %v691
        %v695 = vor.u32 %v693, %v694
        %v696 = vshll.u32 2475754826, %v690
        %v697 = vshrl.u32 2131351028, %v691
        %v698 = vor.u32 %v696, %v697
        %v699 = vshll.u32 2131351028, %v690
        %v700 = vshrl.u32 2102212464, %v691
        %v701 = vor.u32 %v699, %v700
        %v702 = vshll.u32 2102212464, %v690
        %v703 = vshrl.u32 920167782, %v691
        %v704 = vor.u32 %v702, %v703
        %v705 = vshll.u32 920167782, %v690
        %v706 = vshrl.u32 1326507024, %v691
        %v707 = vor.u32 %v705, %v706
        %vm708 = vcmp.lt.s32.totalorder %v689, 1
        %vm709 = vcmp.lt.s32.totalorder %v689, 2
        %vm710 = vcmp.lt.s32.totalorder %v689, 3
        %vm711 = vcmp.lt.s32.totalorder %v689, 4
        %v712 = vsel %vm708, %v692, %v695
        %v713 = vsel %vm711, %v701, 2102212464
        %v714 = vsel %vm710, %v698, %v713
        %v715 = vsel %vm709, %v712, %v714
        %v716 = vsel %vm708, %v695, %v698
        %v717 = vsel %vm711, %v704, 920167782
        %v718 = vsel %vm710, %v701, %v717
        %v719 = vsel %vm709, %v716, %v718
        %v720 = vsel %vm708, %v698, %v701
        %v721 = vsel %vm711, %v707, 1326507024
        %v722 = vsel %vm710, %v704, %v721
        %v723 = vsel %vm709, %v720, %v722
        %v724 = vshll.u32 %v684, 8
        %v725 = vmul.u32.u64.compose %v724, %v723
        %v726 = vextract.low.u32 %v725
        %v727 = vextract.high.u32 %v725
        %v728 = vmul.u32.u64.compose %v724, %v719
        %v729 = vextract.low.u32 %v728
        %v730 = vextract.high.u32 %v728
        %v731 = vmul.u32 %v724, %v715
        %v732 = vadd.s32 %v727, %v729
        %vm733 = vc.u32 %v727, %v729
        %v734 = vadd.s32 %v730, 1
        %v735 = vsel %vm733, %v734, %v730
        %v736 = vadd.s32 %v731, %v735
        %v737 = vadd.s32 %v736, 536870912
        %v738 = vshrl.u32 %v737, 30
        %v739 = vshll.u32 %v738, 30
        %v740 = vsub.s32 %v736, %v739
        %vm741 = vcmp.lt.s32.totalorder %v740, 0
        %v742 = vsub.s32 0, %v740
        %v743 = vsel %vm741, %v742, %v740
        %v744 = vclz %v743
        %v745 = vsub.s32 %v744, 2
        %vm746 = vcmp.gt.s32.totalorder 0, %v745
        %v747 = vsel %vm746, 0, %v745
        %v748 = vsub.s32 32, %v747
        %v749 = vshll.u32 %v740, %v747
        %v750 = vshrl.u32 %v732, %v748
        %v751 = vor.u32 %v749, %v750
        %v752 = vsub.s32 4294967266, %v747
        %v753 = vadd.s32 %v752, 127
        %v754 = vshll.u32 %v753, 23
        %v755 = vor.u32 4788187, %v754
        %v756 = vand.u32 2147483647, %v755
        %v758 = vcvt.s32.f32 %v751
        %v759 = vmul.f32 %v758, %v756
        %v760 = vxor.u32 %v759, 2147483648
        %v761 = vsel %vm678, %v760, %v759
        %v762 = vsub.s32 4, %v738
        %v763 = vsel %vm678, %v762, %v738
        %v764 = vsel %vm677, %v557, %v761
        %v765 = vsel %vm677, 0, %v763
        %v766 = vcosq.f32.pop %v764
        %v767 = vsinq.f32.pop %v764
        %vm768 = vweird.f32 %v557
        %v769 = vadd.s32 %v765, 3
        %v770 = vand.u32 %v769, 3
        %vm771 = vcmp.lt.s32.totalorder %v770, 2
        %vm772 = vcmp.eq.s32.totalorder %v770, 0
        %v773 = vxor.u32 %v767, 2147483648
        %v774 = vsel %vm772, %v766, %v773
        %vm775 = vcmp.eq.s32.totalorder %v770, 2
        %v776 = vxor.u32 %v766, 2147483648
        %v777 = vsel %vm775, %v776, %v767
        %v778 = vsel %vm771, %v774, %v777
        %v779 = vsel %vm768, nan, %v778
        %v780 = vand.u32 2147483647, %v558
        %vm781 = vcmp.le.f32.partialorder %v780, 0.7853982
        %vm782 = vcmp.lt.s32.totalorder %v558, 0
        %v783 = vand.u32 %v558, 2139095040
        %v784 = vshrl.u32 %v783, 23
        %v785 = vsub.s32 %v784, 127
        %v786 = vand.u32 2147483647, %v558
        %v787 = vand.u32 %v786, 8388607
        %v788 = vor.u32 %v787, 8388608
        %v789 = vsub.s32 0, %v788
        %v790 = vadd.s32 %v785, 1
        %vm791 = vcmp.gt.s32.totalorder %v790, 0
        %v792 = vsel %vm791, %v790, 0
        %v793 = vshrl.u32 %v792, 5
        %v794 = vand.u32 %v792, 31
        %v795 = vsub.s32 32, %v794
        %v796 = vshrl.u32 683565275, %v795
        %v797 = vshll.u32 683565275, %v794
        %v798 = vshrl.u32 2475754826, %v795
        %v799 = vor.u32 %v797, %v798
        %v800 = vshll.u32 2475754826, %v794
        %v801 = vshrl.u32 2131351028, %v795
        %v802 = vor.u32 %v800, %v801
        %v803 = vshll.u32 2131351028, %v794
        %v804 = vshrl.u32 2102212464, %v795
        %v805 = vor.u32 %v803, %v804
        %v806 = vshll.u32 2102212464, %v794
        %v807 = vshrl.u32 920167782, %v795
        %v808 = vor.u32 %v806, %v807
        %v809 = vshll.u32 920167782, %v794
        %v810 = vshrl.u32 1326507024, %v795
        %v811 = vor.u32 %v809, %v810
        %vm812 = vcmp.lt.s32.totalorder %v793, 1
        %vm813 = vcmp.lt.s32.totalorder %v793, 2
        %vm814 = vcmp.lt.s32.totalorder %v793, 3
        %vm815 = vcmp.lt.s32.totalorder %v793, 4
        %v816 = vsel %vm812, %v796, %v799
        %v817 = vsel %vm815, %v805, 2102212464
        %v818 = vsel %vm814, %v802, %v817
        %v819 = vsel %vm813, %v816, %v818
        %v820 = vsel %vm812, %v799, %v802
        %v821 = vsel %vm815, %v808, 920167782
        %v822 = vsel %vm814, %v805, %v821
        %v823 = vsel %vm813, %v820, %v822
        %v824 = vsel %vm812, %v802, %v805
        %v825 = vsel %vm815, %v811, 1326507024
        %v826 = vsel %vm814, %v808, %v825
        %v827 = vsel %vm813, %v824, %v826
        %v828 = vshll.u32 %v788, 8
        %v829 = vmul.u32.u64.compose %v828, %v827
        %v830 = vextract.low.u32 %v829
        %v831 = vextract.high.u32 %v829
        %v832 = vmul.u32.u64.compose %v828, %v823
        %v833 = vextract.low.u32 %v832
        %v834 = vextract.high.u32 %v832
        %v835 = vmul.u32 %v828, %v819
        %v836 = vadd.s32 %v831, %v833
        %vm837 = vc.u32 %v831, %v833
        %v838 = vadd.s32 %v834, 1
        %v839 = vsel %vm837, %v838, %v834
        %v840 = vadd.s32 %v835, %v839
        %v841 = vadd.s32 %v840, 536870912
        %v842 = vshrl.u32 %v841, 30
        %v843 = vshll.u32 %v842, 30
        %v844 = vsub.s32 %v840, %v843
        %vm845 = vcmp.lt.s32.totalorder %v844, 0
        %v846 = vsub.s32 0, %v844
        %v847 = vsel %vm845, %v846, %v844
        %v848 = vclz %v847
        %v849 = vsub.s32 %v848, 2
        %vm850 = vcmp.gt.s32.totalorder 0, %v849
        %v851 = vsel %vm850, 0, %v849
        %v852 = vsub.s32 32, %v851
        %v853 = vshll.u32 %v844, %v851
        %v854 = vshrl.u32 %v836, %v852
        %v855 = vor.u32 %v853, %v854
        %v856 = vsub.s32 4294967266, %v851
        %v857 = vadd.s32 %v856, 127
        %v858 = vshll.u32 %v857, 23
        %v859 = vor.u32 4788187, %v858
        %v860 = vand.u32 2147483647, %v859
        %v862 = vcvt.s32.f32 %v855
        %v863 = vmul.f32 %v862, %v860
        %v864 = vxor.u32 %v863, 2147483648
        %v865 = vsel %vm782, %v864, %v863
        %v866 = vsub.s32 4, %v842
        %v867 = vsel %vm782, %v866, %v842
        %v868 = vsel %vm781, %v558, %v865
        %v869 = vsel %vm781, 0, %v867
        %v870 = vcosq.f32.pop %v868
        %v871 = vsinq.f32.pop %v868
        %vm872 = vweird.f32 %v558
        %v873 = vadd.s32 %v869, 3
        %v874 = vand.u32 %v873, 3
        %vm875 = vcmp.lt.s32.totalorder %v874, 2
        %vm876 = vcmp.eq.s32.totalorder %v874, 0
        %v877 = vxor.u32 %v871, 2147483648
        %v878 = vsel %vm876, %v870, %v877
        %vm879 = vcmp.eq.s32.totalorder %v874, 2
        %v880 = vxor.u32 %v870, 2147483648
        %v881 = vsel %vm879, %v880, %v871
        %v882 = vsel %vm875, %v878, %v881
        %v883 = vsel %vm872, nan, %v882
        %v884 = vand.u32 2147483647, %v559
        %vm885 = vcmp.le.f32.partialorder %v884, 0.7853982
        %vm886 = vcmp.lt.s32.totalorder %v559, 0
        %v887 = vand.u32 %v559, 2139095040
        %v888 = vshrl.u32 %v887, 23
        %v889 = vsub.s32 %v888, 127
        %v890 = vand.u32 2147483647, %v559
        %v891 = vand.u32 %v890, 8388607
        %v892 = vor.u32 %v891, 8388608
        %v893 = vsub.s32 0, %v892
        %v894 = vadd.s32 %v889, 1
        %vm895 = vcmp.gt.s32.totalorder %v894, 0
        %v896 = vsel %vm895, %v894, 0
        %v897 = vshrl.u32 %v896, 5
        %v898 = vand.u32 %v896, 31
        %v899 = vsub.s32 32, %v898
        %v900 = vshrl.u32 683565275, %v899
        %v901 = vshll.u32 683565275, %v898
        %v902 = vshrl.u32 2475754826, %v899
        %v903 = vor.u32 %v901, %v902
        %v904 = vshll.u32 2475754826, %v898
        %v905 = vshrl.u32 2131351028, %v899
        %v906 = vor.u32 %v904, %v905
        %v907 = vshll.u32 2131351028, %v898
        %v908 = vshrl.u32 2102212464, %v899
        %v909 = vor.u32 %v907, %v908
        %v910 = vshll.u32 2102212464, %v898
        %v911 = vshrl.u32 920167782, %v899
        %v912 = vor.u32 %v910, %v911
        %v913 = vshll.u32 920167782, %v898
        %v914 = vshrl.u32 1326507024, %v899
        %v915 = vor.u32 %v913, %v914
        %vm916 = vcmp.lt.s32.totalorder %v897, 1
        %vm917 = vcmp.lt.s32.totalorder %v897, 2
        %vm918 = vcmp.lt.s32.totalorder %v897, 3
        %vm919 = vcmp.lt.s32.totalorder %v897, 4
        %v920 = vsel %vm916, %v900, %v903
        %v921 = vsel %vm919, %v909, 2102212464
        %v922 = vsel %vm918, %v906, %v921
        %v923 = vsel %vm917, %v920, %v922
        %v924 = vsel %vm916, %v903, %v906
        %v925 = vsel %vm919, %v912, 920167782
        %v926 = vsel %vm918, %v909, %v925
        %v927 = vsel %vm917, %v924, %v926
        %v928 = vsel %vm916, %v906, %v909
        %v929 = vsel %vm919, %v915, 1326507024
        %v930 = vsel %vm918, %v912, %v929
        %v931 = vsel %vm917, %v928, %v930
        %v932 = vshll.u32 %v892, 8
        %v933 = vmul.u32.u64.compose %v932, %v931
        %v934 = vextract.low.u32 %v933
        %v935 = vextract.high.u32 %v933
        %v936 = vmul.u32.u64.compose %v932, %v927
        %v937 = vextract.low.u32 %v936
        %v938 = vextract.high.u32 %v936
        %v939 = vmul.u32 %v932, %v923
        %v940 = vadd.s32 %v935, %v937
        %vm941 = vc.u32 %v935, %v937
        %v942 = vadd.s32 %v938, 1
        %v943 = vsel %vm941, %v942, %v938
        %v944 = vadd.s32 %v939, %v943
        %v945 = vadd.s32 %v944, 536870912
        %v946 = vshrl.u32 %v945, 30
        %v947 = vshll.u32 %v946, 30
        %v948 = vsub.s32 %v944, %v947
        %vm949 = vcmp.lt.s32.totalorder %v948, 0
        %v950 = vsub.s32 0, %v948
        %v951 = vsel %vm949, %v950, %v948
        %v952 = vclz %v951
        %v953 = vsub.s32 %v952, 2
        %vm954 = vcmp.gt.s32.totalorder 0, %v953
        %v955 = vsel %vm954, 0, %v953
        %v956 = vsub.s32 32, %v955
        %v957 = vshll.u32 %v948, %v955
        %v958 = vshrl.u32 %v940, %v956
        %v959 = vor.u32 %v957, %v958
        %v960 = vsub.s32 4294967266, %v955
        %v961 = vadd.s32 %v960, 127
        %v962 = vshll.u32 %v961, 23
        %v963 = vor.u32 4788187, %v962
        %v964 = vand.u32 2147483647, %v963
        %v966 = vcvt.s32.f32 %v959
        %v967 = vmul.f32 %v966, %v964
        %v968 = vxor.u32 %v967, 2147483648
        %v969 = vsel %vm886, %v968, %v967
        %v970 = vsub.s32 4, %v946
        %v971 = vsel %vm886, %v970, %v946
        %v972 = vsel %vm885, %v559, %v969
        %v973 = vsel %vm885, 0, %v971
        %v974 = vcosq.f32.pop %v972
        %v975 = vsinq.f32.pop %v972
        %vm976 = vweird.f32 %v559
        %v977 = vadd.s32 %v973, 3
        %v978 = vand.u32 %v977, 3
        %vm979 = vcmp.lt.s32.totalorder %v978, 2
        %vm980 = vcmp.eq.s32.totalorder %v978, 0
        %v981 = vxor.u32 %v975, 2147483648
        %v982 = vsel %vm980, %v974, %v981
        %vm983 = vcmp.eq.s32.totalorder %v978, 2
        %v984 = vxor.u32 %v974, 2147483648
        %v985 = vsel %vm983, %v984, %v975
        %v986 = vsel %vm979, %v982, %v985
        %v987 = vsel %vm976, nan, %v986
        %v988 = vand.u32 2147483647, %v560
        %vm989 = vcmp.le.f32.partialorder %v988, 0.7853982
        %vm990 = vcmp.lt.s32.totalorder %v560, 0
        %v991 = vand.u32 %v560, 2139095040
        %v992 = vshrl.u32 %v991, 23
        %v993 = vsub.s32 %v992, 127
        %v994 = vand.u32 2147483647, %v560
        %v995 = vand.u32 %v994, 8388607
        %v996 = vor.u32 %v995, 8388608
        %v997 = vsub.s32 0, %v996
        %v998 = vadd.s32 %v993, 1
        %vm999 = vcmp.gt.s32.totalorder %v998, 0
        %v1000 = vsel %vm999, %v998, 0
        %v1001 = vshrl.u32 %v1000, 5
        %v1002 = vand.u32 %v1000, 31
        %v1003 = vsub.s32 32, %v1002
        %v1004 = vshrl.u32 683565275, %v1003
        %v1005 = vshll.u32 683565275, %v1002
        %v1006 = vshrl.u32 2475754826, %v1003
        %v1007 = vor.u32 %v1005, %v1006
        %v1008 = vshll.u32 2475754826, %v1002
        %v1009 = vshrl.u32 2131351028, %v1003
        %v1010 = vor.u32 %v1008, %v1009
        %v1011 = vshll.u32 2131351028, %v1002
        %v1012 = vshrl.u32 2102212464, %v1003
        %v1013 = vor.u32 %v1011, %v1012
        %v1014 = vshll.u32 2102212464, %v1002
        %v1015 = vshrl.u32 920167782, %v1003
        %v1016 = vor.u32 %v1014, %v1015
        %v1017 = vshll.u32 920167782, %v1002
        %v1018 = vshrl.u32 1326507024, %v1003
        %v1019 = vor.u32 %v1017, %v1018
        %vm1020 = vcmp.lt.s32.totalorder %v1001, 1
        %vm1021 = vcmp.lt.s32.totalorder %v1001, 2
        %vm1022 = vcmp.lt.s32.totalorder %v1001, 3
        %vm1023 = vcmp.lt.s32.totalorder %v1001, 4
        %v1024 = vsel %vm1020, %v1004, %v1007
        %v1025 = vsel %vm1023, %v1013, 2102212464
        %v1026 = vsel %vm1022, %v1010, %v1025
        %v1027 = vsel %vm1021, %v1024, %v1026
        %v1028 = vsel %vm1020, %v1007, %v1010
        %v1029 = vsel %vm1023, %v1016, 920167782
        %v1030 = vsel %vm1022, %v1013, %v1029
        %v1031 = vsel %vm1021, %v1028, %v1030
        %v1032 = vsel %vm1020, %v1010, %v1013
        %v1033 = vsel %vm1023, %v1019, 1326507024
        %v1034 = vsel %vm1022, %v1016, %v1033
        %v1035 = vsel %vm1021, %v1032, %v1034
        %v1036 = vshll.u32 %v996, 8
        %v1037 = vmul.u32.u64.compose %v1036, %v1035
        %v1038 = vextract.low.u32 %v1037
        %v1039 = vextract.high.u32 %v1037
        %v1040 = vmul.u32.u64.compose %v1036, %v1031
        %v1041 = vextract.low.u32 %v1040
        %v1042 = vextract.high.u32 %v1040
        %v1043 = vmul.u32 %v1036, %v1027
        %v1044 = vadd.s32 %v1039, %v1041
        %vm1045 = vc.u32 %v1039, %v1041
        %v1046 = vadd.s32 %v1042, 1
        %v1047 = vsel %vm1045, %v1046, %v1042
        %v1048 = vadd.s32 %v1043, %v1047
        %v1049 = vadd.s32 %v1048, 536870912
        %v1050 = vshrl.u32 %v1049, 30
        %v1051 = vshll.u32 %v1050, 30
        %v1052 = vsub.s32 %v1048, %v1051
        %vm1053 = vcmp.lt.s32.totalorder %v1052, 0
        %v1054 = vsub.s32 0, %v1052
        %v1055 = vsel %vm1053, %v1054, %v1052
        %v1056 = vclz %v1055
        %v1057 = vsub.s32 %v1056, 2
        %vm1058 = vcmp.gt.s32.totalorder 0, %v1057
        %v1059 = vsel %vm1058, 0, %v1057
        %v1060 = vsub.s32 32, %v1059
        %v1061 = vshll.u32 %v1052, %v1059
        %v1062 = vshrl.u32 %v1044, %v1060
        %v1063 = vor.u32 %v1061, %v1062
        %v1064 = vsub.s32 4294967266, %v1059
        %v1065 = vadd.s32 %v1064, 127
        %v1066 = vshll.u32 %v1065, 23
        %v1067 = vor.u32 4788187, %v1066
        %v1068 = vand.u32 2147483647, %v1067
        %v1070 = vcvt.s32.f32 %v1063
        %v1071 = vmul.f32 %v1070, %v1068
        %v1072 = vxor.u32 %v1071, 2147483648
        %v1073 = vsel %vm990, %v1072, %v1071
        %v1074 = vsub.s32 4, %v1050
        %v1075 = vsel %vm990, %v1074, %v1050
        %v1076 = vsel %vm989, %v560, %v1073
        %v1077 = vsel %vm989, 0, %v1075
        %v1078 = vcosq.f32.pop %v1076
        %v1079 = vsinq.f32.pop %v1076
        %vm1080 = vweird.f32 %v560
        %v1081 = vadd.s32 %v1077, 3
        %v1082 = vand.u32 %v1081, 3
        %vm1083 = vcmp.lt.s32.totalorder %v1082, 2
        %vm1084 = vcmp.eq.s32.totalorder %v1082, 0
        %v1085 = vxor.u32 %v1079, 2147483648
        %v1086 = vsel %vm1084, %v1078, %v1085
        %vm1087 = vcmp.eq.s32.totalorder %v1082, 2
        %v1088 = vxor.u32 %v1078, 2147483648
        %v1089 = vsel %vm1087, %v1088, %v1079
        %v1090 = vsel %vm1083, %v1086, %v1089
        %v1091 = vsel %vm1080, nan, %v1090
        %v1092 = vand.u32 2147483647, %v561
        %vm1093 = vcmp.le.f32.partialorder %v1092, 0.7853982
        %vm1094 = vcmp.lt.s32.totalorder %v561, 0
        %v1095 = vand.u32 %v561, 2139095040
        %v1096 = vshrl.u32 %v1095, 23
        %v1097 = vsub.s32 %v1096, 127
        %v1098 = vand.u32 2147483647, %v561
        %v1099 = vand.u32 %v1098, 8388607
        %v1100 = vor.u32 %v1099, 8388608
        %v1101 = vsub.s32 0, %v1100
        %v1102 = vadd.s32 %v1097, 1
        %vm1103 = vcmp.gt.s32.totalorder %v1102, 0
        %v1104 = vsel %vm1103, %v1102, 0
        %v1105 = vshrl.u32 %v1104, 5
        %v1106 = vand.u32 %v1104, 31
        %v1107 = vsub.s32 32, %v1106
        %v1108 = vshrl.u32 683565275, %v1107
        %v1109 = vshll.u32 683565275, %v1106
        %v1110 = vshrl.u32 2475754826, %v1107
        %v1111 = vor.u32 %v1109, %v1110
        %v1112 = vshll.u32 2475754826, %v1106
        %v1113 = vshrl.u32 2131351028, %v1107
        %v1114 = vor.u32 %v1112, %v1113
        %v1115 = vshll.u32 2131351028, %v1106
        %v1116 = vshrl.u32 2102212464, %v1107
        %v1117 = vor.u32 %v1115, %v1116
        %v1118 = vshll.u32 2102212464, %v1106
        %v1119 = vshrl.u32 920167782, %v1107
        %v1120 = vor.u32 %v1118, %v1119
        %v1121 = vshll.u32 920167782, %v1106
        %v1122 = vshrl.u32 1326507024, %v1107
        %v1123 = vor.u32 %v1121, %v1122
        %vm1124 = vcmp.lt.s32.totalorder %v1105, 1
        %vm1125 = vcmp.lt.s32.totalorder %v1105, 2
        %vm1126 = vcmp.lt.s32.totalorder %v1105, 3
        %vm1127 = vcmp.lt.s32.totalorder %v1105, 4
        %v1128 = vsel %vm1124, %v1108, %v1111
        %v1129 = vsel %vm1127, %v1117, 2102212464
        %v1130 = vsel %vm1126, %v1114, %v1129
        %v1131 = vsel %vm1125, %v1128, %v1130
        %v1132 = vsel %vm1124, %v1111, %v1114
        %v1133 = vsel %vm1127, %v1120, 920167782
        %v1134 = vsel %vm1126, %v1117, %v1133
        %v1135 = vsel %vm1125, %v1132, %v1134
        %v1136 = vsel %vm1124, %v1114, %v1117
        %v1137 = vsel %vm1127, %v1123, 1326507024
        %v1138 = vsel %vm1126, %v1120, %v1137
        %v1139 = vsel %vm1125, %v1136, %v1138
        %v1140 = vshll.u32 %v1100, 8
        %v1141 = vmul.u32.u64.compose %v1140, %v1139
        %v1142 = vextract.low.u32 %v1141
        %v1143 = vextract.high.u32 %v1141
        %v1144 = vmul.u32.u64.compose %v1140, %v1135
        %v1145 = vextract.low.u32 %v1144
        %v1146 = vextract.high.u32 %v1144
        %v1147 = vmul.u32 %v1140, %v1131
        %v1148 = vadd.s32 %v1143, %v1145
        %vm1149 = vc.u32 %v1143, %v1145
        %v1150 = vadd.s32 %v1146, 1
        %v1151 = vsel %vm1149, %v1150, %v1146
        %v1152 = vadd.s32 %v1147, %v1151
        %v1153 = vadd.s32 %v1152, 536870912
        %v1154 = vshrl.u32 %v1153, 30
        %v1155 = vshll.u32 %v1154, 30
        %v1156 = vsub.s32 %v1152, %v1155
        %vm1157 = vcmp.lt.s32.totalorder %v1156, 0
        %v1158 = vsub.s32 0, %v1156
        %v1159 = vsel %vm1157, %v1158, %v1156
        %v1160 = vclz %v1159
        %v1161 = vsub.s32 %v1160, 2
        %vm1162 = vcmp.gt.s32.totalorder 0, %v1161
        %v1163 = vsel %vm1162, 0, %v1161
        %v1164 = vsub.s32 32, %v1163
        %v1165 = vshll.u32 %v1156, %v1163
        %v1166 = vshrl.u32 %v1148, %v1164
        %v1167 = vor.u32 %v1165, %v1166
        %v1168 = vsub.s32 4294967266, %v1163
        %v1169 = vadd.s32 %v1168, 127
        %v1170 = vshll.u32 %v1169, 23
        %v1171 = vor.u32 4788187, %v1170
        %v1172 = vand.u32 2147483647, %v1171
        %v1174 = vcvt.s32.f32 %v1167
        %v1175 = vmul.f32 %v1174, %v1172
        %v1176 = vxor.u32 %v1175, 2147483648
        %v1177 = vsel %vm1094, %v1176, %v1175
        %v1178 = vsub.s32 4, %v1154
        %v1179 = vsel %vm1094, %v1178, %v1154
        %v1180 = vsel %vm1093, %v561, %v1177
        %v1181 = vsel %vm1093, 0, %v1179
        %v1182 = vcosq.f32.pop %v1180
        %v1183 = vsinq.f32.pop %v1180
        %vm1184 = vweird.f32 %v561
        %v1185 = vadd.s32 %v1181, 3
        %v1186 = vand.u32 %v1185, 3
        %vm1187 = vcmp.lt.s32.totalorder %v1186, 2
        %vm1188 = vcmp.eq.s32.totalorder %v1186, 0
        %v1189 = vxor.u32 %v1183, 2147483648
        %v1190 = vsel %vm1188, %v1182, %v1189
        %vm1191 = vcmp.eq.s32.totalorder %v1186, 2
        %v1192 = vxor.u32 %v1182, 2147483648
        %v1193 = vsel %vm1191, %v1192, %v1183
        %v1194 = vsel %vm1187, %v1190, %v1193
        %v1195 = vsel %vm1184, nan, %v1194
        %v1196 = vand.u32 2147483647, %v562
        %vm1197 = vcmp.le.f32.partialorder %v1196, 0.7853982
        %vm1198 = vcmp.lt.s32.totalorder %v562, 0
        %v1199 = vand.u32 %v562, 2139095040
        %v1200 = vshrl.u32 %v1199, 23
        %v1201 = vsub.s32 %v1200, 127
        %v1202 = vand.u32 2147483647, %v562
        %v1203 = vand.u32 %v1202, 8388607
        %v1204 = vor.u32 %v1203, 8388608
        %v1205 = vsub.s32 0, %v1204
        %v1206 = vadd.s32 %v1201, 1
        %vm1207 = vcmp.gt.s32.totalorder %v1206, 0
        %v1208 = vsel %vm1207, %v1206, 0
        %v1209 = vshrl.u32 %v1208, 5
        %v1210 = vand.u32 %v1208, 31
        %v1211 = vsub.s32 32, %v1210
        %v1212 = vshrl.u32 683565275, %v1211
        %v1213 = vshll.u32 683565275, %v1210
        %v1214 = vshrl.u32 2475754826, %v1211
        %v1215 = vor.u32 %v1213, %v1214
        %v1216 = vshll.u32 2475754826, %v1210
        %v1217 = vshrl.u32 2131351028, %v1211
        %v1218 = vor.u32 %v1216, %v1217
        %v1219 = vshll.u32 2131351028, %v1210
        %v1220 = vshrl.u32 2102212464, %v1211
        %v1221 = vor.u32 %v1219, %v1220
        %v1222 = vshll.u32 2102212464, %v1210
        %v1223 = vshrl.u32 920167782, %v1211
        %v1224 = vor.u32 %v1222, %v1223
        %v1225 = vshll.u32 920167782, %v1210
        %v1226 = vshrl.u32 1326507024, %v1211
        %v1227 = vor.u32 %v1225, %v1226
        %vm1228 = vcmp.lt.s32.totalorder %v1209, 1
        %vm1229 = vcmp.lt.s32.totalorder %v1209, 2
        %vm1230 = vcmp.lt.s32.totalorder %v1209, 3
        %vm1231 = vcmp.lt.s32.totalorder %v1209, 4
        %v1232 = vsel %vm1228, %v1212, %v1215
        %v1233 = vsel %vm1231, %v1221, 2102212464
        %v1234 = vsel %vm1230, %v1218, %v1233
        %v1235 = vsel %vm1229, %v1232, %v1234
        %v1236 = vsel %vm1228, %v1215, %v1218
        %v1237 = vsel %vm1231, %v1224, 920167782
        %v1238 = vsel %vm1230, %v1221, %v1237
        %v1239 = vsel %vm1229, %v1236, %v1238
        %v1240 = vsel %vm1228, %v1218, %v1221
        %v1241 = vsel %vm1231, %v1227, 1326507024
        %v1242 = vsel %vm1230, %v1224, %v1241
        %v1243 = vsel %vm1229, %v1240, %v1242
        %v1244 = vshll.u32 %v1204, 8
        %v1245 = vmul.u32.u64.compose %v1244, %v1243
        %v1246 = vextract.low.u32 %v1245
        %v1247 = vextract.high.u32 %v1245
        %v1248 = vmul.u32.u64.compose %v1244, %v1239
        %v1249 = vextract.low.u32 %v1248
        %v1250 = vextract.high.u32 %v1248
        %v1251 = vmul.u32 %v1244, %v1235
        %v1252 = vadd.s32 %v1247, %v1249
        %vm1253 = vc.u32 %v1247, %v1249
        %v1254 = vadd.s32 %v1250, 1
        %v1255 = vsel %vm1253, %v1254, %v1250
        %v1256 = vadd.s32 %v1251, %v1255
        %v1257 = vadd.s32 %v1256, 536870912
        %v1258 = vshrl.u32 %v1257, 30
        %v1259 = vshll.u32 %v1258, 30
        %v1260 = vsub.s32 %v1256, %v1259
        %vm1261 = vcmp.lt.s32.totalorder %v1260, 0
        %v1262 = vsub.s32 0, %v1260
        %v1263 = vsel %vm1261, %v1262, %v1260
        %v1264 = vclz %v1263
        %v1265 = vsub.s32 %v1264, 2
        %vm1266 = vcmp.gt.s32.totalorder 0, %v1265
        %v1267 = vsel %vm1266, 0, %v1265
        %v1268 = vsub.s32 32, %v1267
        %v1269 = vshll.u32 %v1260, %v1267
        %v1270 = vshrl.u32 %v1252, %v1268
        %v1271 = vor.u32 %v1269, %v1270
        %v1272 = vsub.s32 4294967266, %v1267
        %v1273 = vadd.s32 %v1272, 127
        %v1274 = vshll.u32 %v1273, 23
        %v1275 = vor.u32 4788187, %v1274
        %v1276 = vand.u32 2147483647, %v1275
        %v1278 = vcvt.s32.f32 %v1271
        %v1279 = vmul.f32 %v1278, %v1276
        %v1280 = vxor.u32 %v1279, 2147483648
        %v1281 = vsel %vm1198, %v1280, %v1279
        %v1282 = vsub.s32 4, %v1258
        %v1283 = vsel %vm1198, %v1282, %v1258
        %v1284 = vsel %vm1197, %v562, %v1281
        %v1285 = vsel %vm1197, 0, %v1283
        %v1286 = vcosq.f32.pop %v1284
        %v1287 = vsinq.f32.pop %v1284
        %vm1288 = vweird.f32 %v562
        %v1289 = vadd.s32 %v1285, 3
        %v1290 = vand.u32 %v1289, 3
        %vm1291 = vcmp.lt.s32.totalorder %v1290, 2
        %vm1292 = vcmp.eq.s32.totalorder %v1290, 0
        %v1293 = vxor.u32 %v1287, 2147483648
        %v1294 = vsel %vm1292, %v1286, %v1293
        %vm1295 = vcmp.eq.s32.totalorder %v1290, 2
        %v1296 = vxor.u32 %v1286, 2147483648
        %v1297 = vsel %vm1295, %v1296, %v1287
        %v1298 = vsel %vm1291, %v1294, %v1297
        %v1299 = vsel %vm1288, nan, %v1298
        %v1300 = vand.u32 2147483647, %v563
        %vm1301 = vcmp.le.f32.partialorder %v1300, 0.7853982
        %vm1302 = vcmp.lt.s32.totalorder %v563, 0
        %v1303 = vand.u32 %v563, 2139095040
        %v1304 = vshrl.u32 %v1303, 23
        %v1305 = vsub.s32 %v1304, 127
        %v1306 = vand.u32 2147483647, %v563
        %v1307 = vand.u32 %v1306, 8388607
        %v1308 = vor.u32 %v1307, 8388608
        %v1309 = vsub.s32 0, %v1308
        %v1310 = vadd.s32 %v1305, 1
        %vm1311 = vcmp.gt.s32.totalorder %v1310, 0
        %v1312 = vsel %vm1311, %v1310, 0
        %v1313 = vshrl.u32 %v1312, 5
        %v1314 = vand.u32 %v1312, 31
        %v1315 = vsub.s32 32, %v1314
        %v1316 = vshrl.u32 683565275, %v1315
        %v1317 = vshll.u32 683565275, %v1314
        %v1318 = vshrl.u32 2475754826, %v1315
        %v1319 = vor.u32 %v1317, %v1318
        %v1320 = vshll.u32 2475754826, %v1314
        %v1321 = vshrl.u32 2131351028, %v1315
        %v1322 = vor.u32 %v1320, %v1321
        %v1323 = vshll.u32 2131351028, %v1314
        %v1324 = vshrl.u32 2102212464, %v1315
        %v1325 = vor.u32 %v1323, %v1324
        %v1326 = vshll.u32 2102212464, %v1314
        %v1327 = vshrl.u32 920167782, %v1315
        %v1328 = vor.u32 %v1326, %v1327
        %v1329 = vshll.u32 920167782, %v1314
        %v1330 = vshrl.u32 1326507024, %v1315
        %v1331 = vor.u32 %v1329, %v1330
        %vm1332 = vcmp.lt.s32.totalorder %v1313, 1
        %vm1333 = vcmp.lt.s32.totalorder %v1313, 2
        %vm1334 = vcmp.lt.s32.totalorder %v1313, 3
        %vm1335 = vcmp.lt.s32.totalorder %v1313, 4
        %v1336 = vsel %vm1332, %v1316, %v1319
        %v1337 = vsel %vm1335, %v1325, 2102212464
        %v1338 = vsel %vm1334, %v1322, %v1337
        %v1339 = vsel %vm1333, %v1336, %v1338
        %v1340 = vsel %vm1332, %v1319, %v1322
        %v1341 = vsel %vm1335, %v1328, 920167782
        %v1342 = vsel %vm1334, %v1325, %v1341
        %v1343 = vsel %vm1333, %v1340, %v1342
        %v1344 = vsel %vm1332, %v1322, %v1325
        %v1345 = vsel %vm1335, %v1331, 1326507024
        %v1346 = vsel %vm1334, %v1328, %v1345
        %v1347 = vsel %vm1333, %v1344, %v1346
        %v1348 = vshll.u32 %v1308, 8
        %v1349 = vmul.u32.u64.compose %v1348, %v1347
        %v1350 = vextract.low.u32 %v1349
        %v1351 = vextract.high.u32 %v1349
        %v1352 = vmul.u32.u64.compose %v1348, %v1343
        %v1353 = vextract.low.u32 %v1352
        %v1354 = vextract.high.u32 %v1352
        %v1355 = vmul.u32 %v1348, %v1339
        %v1356 = vadd.s32 %v1351, %v1353
        %vm1357 = vc.u32 %v1351, %v1353
        %v1358 = vadd.s32 %v1354, 1
        %v1359 = vsel %vm1357, %v1358, %v1354
        %v1360 = vadd.s32 %v1355, %v1359
        %v1361 = vadd.s32 %v1360, 536870912
        %v1362 = vshrl.u32 %v1361, 30
        %v1363 = vshll.u32 %v1362, 30
        %v1364 = vsub.s32 %v1360, %v1363
        %vm1365 = vcmp.lt.s32.totalorder %v1364, 0
        %v1366 = vsub.s32 0, %v1364
        %v1367 = vsel %vm1365, %v1366, %v1364
        %v1368 = vclz %v1367
        %v1369 = vsub.s32 %v1368, 2
        %vm1370 = vcmp.gt.s32.totalorder 0, %v1369
        %v1371 = vsel %vm1370, 0, %v1369
        %v1372 = vsub.s32 32, %v1371
        %v1373 = vshll.u32 %v1364, %v1371
        %v1374 = vshrl.u32 %v1356, %v1372
        %v1375 = vor.u32 %v1373, %v1374
        %v1376 = vsub.s32 4294967266, %v1371
        %v1377 = vadd.s32 %v1376, 127
        %v1378 = vshll.u32 %v1377, 23
        %v1379 = vor.u32 4788187, %v1378
        %v1380 = vand.u32 2147483647, %v1379
        %v1382 = vcvt.s32.f32 %v1375
        %v1383 = vmul.f32 %v1382, %v1380
        %v1384 = vxor.u32 %v1383, 2147483648
        %v1385 = vsel %vm1302, %v1384, %v1383
        %v1386 = vsub.s32 4, %v1362
        %v1387 = vsel %vm1302, %v1386, %v1362
        %v1388 = vsel %vm1301, %v563, %v1385
        %v1389 = vsel %vm1301, 0, %v1387
        %v1390 = vcosq.f32.pop %v1388
        %v1391 = vsinq.f32.pop %v1388
        %vm1392 = vweird.f32 %v563
        %v1393 = vadd.s32 %v1389, 3
        %v1394 = vand.u32 %v1393, 3
        %vm1395 = vcmp.lt.s32.totalorder %v1394, 2
        %vm1396 = vcmp.eq.s32.totalorder %v1394, 0
        %v1397 = vxor.u32 %v1391, 2147483648
        %v1398 = vsel %vm1396, %v1390, %v1397
        %vm1399 = vcmp.eq.s32.totalorder %v1394, 2
        %v1400 = vxor.u32 %v1390, 2147483648
        %v1401 = vsel %vm1399, %v1400, %v1391
        %v1402 = vsel %vm1395, %v1398, %v1401
        %v1403 = vsel %vm1392, nan, %v1402
        %v1404 = vand.u32 2147483647, %v564
        %vm1405 = vcmp.le.f32.partialorder %v1404, 0.7853982
        %vm1406 = vcmp.lt.s32.totalorder %v564, 0
        %v1407 = vand.u32 %v564, 2139095040
        %v1408 = vshrl.u32 %v1407, 23
        %v1409 = vsub.s32 %v1408, 127
        %v1410 = vand.u32 2147483647, %v564
        %v1411 = vand.u32 %v1410, 8388607
        %v1412 = vor.u32 %v1411, 8388608
        %v1413 = vsub.s32 0, %v1412
        %v1414 = vadd.s32 %v1409, 1
        %vm1415 = vcmp.gt.s32.totalorder %v1414, 0
        %v1416 = vsel %vm1415, %v1414, 0
        %v1417 = vshrl.u32 %v1416, 5
        %v1418 = vand.u32 %v1416, 31
        %v1419 = vsub.s32 32, %v1418
        %v1420 = vshrl.u32 683565275, %v1419
        %v1421 = vshll.u32 683565275, %v1418
        %v1422 = vshrl.u32 2475754826, %v1419
        %v1423 = vor.u32 %v1421, %v1422
        %v1424 = vshll.u32 2475754826, %v1418
        %v1425 = vshrl.u32 2131351028, %v1419
        %v1426 = vor.u32 %v1424, %v1425
        %v1427 = vshll.u32 2131351028, %v1418
        %v1428 = vshrl.u32 2102212464, %v1419
        %v1429 = vor.u32 %v1427, %v1428
        %v1430 = vshll.u32 2102212464, %v1418
        %v1431 = vshrl.u32 920167782, %v1419
        %v1432 = vor.u32 %v1430, %v1431
        %v1433 = vshll.u32 920167782, %v1418
        %v1434 = vshrl.u32 1326507024, %v1419
        %v1435 = vor.u32 %v1433, %v1434
        %vm1436 = vcmp.lt.s32.totalorder %v1417, 1
        %vm1437 = vcmp.lt.s32.totalorder %v1417, 2
        %vm1438 = vcmp.lt.s32.totalorder %v1417, 3
        %vm1439 = vcmp.lt.s32.totalorder %v1417, 4
        %v1440 = vsel %vm1436, %v1420, %v1423
        %v1441 = vsel %vm1439, %v1429, 2102212464
        %v1442 = vsel %vm1438, %v1426, %v1441
        %v1443 = vsel %vm1437, %v1440, %v1442
        %v1444 = vsel %vm1436, %v1423, %v1426
        %v1445 = vsel %vm1439, %v1432, 920167782
        %v1446 = vsel %vm1438, %v1429, %v1445
        %v1447 = vsel %vm1437, %v1444, %v1446
        %v1448 = vsel %vm1436, %v1426, %v1429
        %v1449 = vsel %vm1439, %v1435, 1326507024
        %v1450 = vsel %vm1438, %v1432, %v1449
        %v1451 = vsel %vm1437, %v1448, %v1450
        %v1452 = vshll.u32 %v1412, 8
        %v1453 = vmul.u32.u64.compose %v1452, %v1451
        %v1454 = vextract.low.u32 %v1453
        %v1455 = vextract.high.u32 %v1453
        %v1456 = vmul.u32.u64.compose %v1452, %v1447
        %v1457 = vextract.low.u32 %v1456
        %v1458 = vextract.high.u32 %v1456
        %v1459 = vmul.u32 %v1452, %v1443
        %v1460 = vadd.s32 %v1455, %v1457
        %vm1461 = vc.u32 %v1455, %v1457
        %v1462 = vadd.s32 %v1458, 1
        %v1463 = vsel %vm1461, %v1462, %v1458
        %v1464 = vadd.s32 %v1459, %v1463
        %v1465 = vadd.s32 %v1464, 536870912
        %v1466 = vshrl.u32 %v1465, 30
        %v1467 = vshll.u32 %v1466, 30
        %v1468 = vsub.s32 %v1464, %v1467
        %vm1469 = vcmp.lt.s32.totalorder %v1468, 0
        %v1470 = vsub.s32 0, %v1468
        %v1471 = vsel %vm1469, %v1470, %v1468
        %v1472 = vclz %v1471
        %v1473 = vsub.s32 %v1472, 2
        %vm1474 = vcmp.gt.s32.totalorder 0, %v1473
        %v1475 = vsel %vm1474, 0, %v1473
        %v1476 = vsub.s32 32, %v1475
        %v1477 = vshll.u32 %v1468, %v1475
        %v1478 = vshrl.u32 %v1460, %v1476
        %v1479 = vor.u32 %v1477, %v1478
        %v1480 = vsub.s32 4294967266, %v1475
        %v1481 = vadd.s32 %v1480, 127
        %v1482 = vshll.u32 %v1481, 23
        %v1483 = vor.u32 4788187, %v1482
        %v1484 = vand.u32 2147483647, %v1483
        %v1486 = vcvt.s32.f32 %v1479
        %v1487 = vmul.f32 %v1486, %v1484
        %v1488 = vxor.u32 %v1487, 2147483648
        %v1489 = vsel %vm1406, %v1488, %v1487
        %v1490 = vsub.s32 4, %v1466
        %v1491 = vsel %vm1406, %v1490, %v1466
        %v1492 = vsel %vm1405, %v564, %v1489
        %v1493 = vsel %vm1405, 0, %v1491
        %v1494 = vcosq.f32.pop %v1492
        %v1495 = vsinq.f32.pop %v1492
        %vm1496 = vweird.f32 %v564
        %v1497 = vadd.s32 %v1493, 3
        %v1498 = vand.u32 %v1497, 3
        %vm1499 = vcmp.lt.s32.totalorder %v1498, 2
        %vm1500 = vcmp.eq.s32.totalorder %v1498, 0
        %v1501 = vxor.u32 %v1495, 2147483648
        %v1502 = vsel %vm1500, %v1494, %v1501
        %vm1503 = vcmp.eq.s32.totalorder %v1498, 2
        %v1504 = vxor.u32 %v1494, 2147483648
        %v1505 = vsel %vm1503, %v1504, %v1495
        %v1506 = vsel %vm1499, %v1502, %v1505
        %v1507 = vsel %vm1496, nan, %v1506
        %v1508 = vand.u32 2147483647, %v565
        %vm1509 = vcmp.le.f32.partialorder %v1508, 0.7853982
        %vm1510 = vcmp.lt.s32.totalorder %v565, 0
        %v1511 = vand.u32 %v565, 2139095040
        %v1512 = vshrl.u32 %v1511, 23
        %v1513 = vsub.s32 %v1512, 127
        %v1514 = vand.u32 2147483647, %v565
        %v1515 = vand.u32 %v1514, 8388607
        %v1516 = vor.u32 %v1515, 8388608
        %v1517 = vsub.s32 0, %v1516
        %v1518 = vadd.s32 %v1513, 1
        %vm1519 = vcmp.gt.s32.totalorder %v1518, 0
        %v1520 = vsel %vm1519, %v1518, 0
        %v1521 = vshrl.u32 %v1520, 5
        %v1522 = vand.u32 %v1520, 31
        %v1523 = vsub.s32 32, %v1522
        %v1524 = vshrl.u32 683565275, %v1523
        %v1525 = vshll.u32 683565275, %v1522
        %v1526 = vshrl.u32 2475754826, %v1523
        %v1527 = vor.u32 %v1525, %v1526
        %v1528 = vshll.u32 2475754826, %v1522
        %v1529 = vshrl.u32 2131351028, %v1523
        %v1530 = vor.u32 %v1528, %v1529
        %v1531 = vshll.u32 2131351028, %v1522
        %v1532 = vshrl.u32 2102212464, %v1523
        %v1533 = vor.u32 %v1531, %v1532
        %v1534 = vshll.u32 2102212464, %v1522
        %v1535 = vshrl.u32 920167782, %v1523
        %v1536 = vor.u32 %v1534, %v1535
        %v1537 = vshll.u32 920167782, %v1522
        %v1538 = vshrl.u32 1326507024, %v1523
        %v1539 = vor.u32 %v1537, %v1538
        %vm1540 = vcmp.lt.s32.totalorder %v1521, 1
        %vm1541 = vcmp.lt.s32.totalorder %v1521, 2
        %vm1542 = vcmp.lt.s32.totalorder %v1521, 3
        %vm1543 = vcmp.lt.s32.totalorder %v1521, 4
        %v1544 = vsel %vm1540, %v1524, %v1527
        %v1545 = vsel %vm1543, %v1533, 2102212464
        %v1546 = vsel %vm1542, %v1530, %v1545
        %v1547 = vsel %vm1541, %v1544, %v1546
        %v1548 = vsel %vm1540, %v1527, %v1530
        %v1549 = vsel %vm1543, %v1536, 920167782
        %v1550 = vsel %vm1542, %v1533, %v1549
        %v1551 = vsel %vm1541, %v1548, %v1550
        %v1552 = vsel %vm1540, %v1530, %v1533
        %v1553 = vsel %vm1543, %v1539, 1326507024
        %v1554 = vsel %vm1542, %v1536, %v1553
        %v1555 = vsel %vm1541, %v1552, %v1554
        %v1556 = vshll.u32 %v1516, 8
        %v1557 = vmul.u32.u64.compose %v1556, %v1555
        %v1558 = vextract.low.u32 %v1557
        %v1559 = vextract.high.u32 %v1557
        %v1560 = vmul.u32.u64.compose %v1556, %v1551
        %v1561 = vextract.low.u32 %v1560
        %v1562 = vextract.high.u32 %v1560
        %v1563 = vmul.u32 %v1556, %v1547
        %v1564 = vadd.s32 %v1559, %v1561
        %vm1565 = vc.u32 %v1559, %v1561
        %v1566 = vadd.s32 %v1562, 1
        %v1567 = vsel %vm1565, %v1566, %v1562
        %v1568 = vadd.s32 %v1563, %v1567
        %v1569 = vadd.s32 %v1568, 536870912
        %v1570 = vshrl.u32 %v1569, 30
        %v1571 = vshll.u32 %v1570, 30
        %v1572 = vsub.s32 %v1568, %v1571
        %vm1573 = vcmp.lt.s32.totalorder %v1572, 0
        %v1574 = vsub.s32 0, %v1572
        %v1575 = vsel %vm1573, %v1574, %v1572
        %v1576 = vclz %v1575
        %v1577 = vsub.s32 %v1576, 2
        %vm1578 = vcmp.gt.s32.totalorder 0, %v1577
        %v1579 = vsel %vm1578, 0, %v1577
        %v1580 = vsub.s32 32, %v1579
        %v1581 = vshll.u32 %v1572, %v1579
        %v1582 = vshrl.u32 %v1564, %v1580
        %v1583 = vor.u32 %v1581, %v1582
        %v1584 = vsub.s32 4294967266, %v1579
        %v1585 = vadd.s32 %v1584, 127
        %v1586 = vshll.u32 %v1585, 23
        %v1587 = vor.u32 4788187, %v1586
        %v1588 = vand.u32 2147483647, %v1587
        %v1590 = vcvt.s32.f32 %v1583
        %v1591 = vmul.f32 %v1590, %v1588
        %v1592 = vxor.u32 %v1591, 2147483648
        %v1593 = vsel %vm1510, %v1592, %v1591
        %v1594 = vsub.s32 4, %v1570
        %v1595 = vsel %vm1510, %v1594, %v1570
        %v1596 = vsel %vm1509, %v565, %v1593
        %v1597 = vsel %vm1509, 0, %v1595
        %v1598 = vcosq.f32.pop %v1596
        %v1599 = vsinq.f32.pop %v1596
        %vm1600 = vweird.f32 %v565
        %v1601 = vadd.s32 %v1597, 3
        %v1602 = vand.u32 %v1601, 3
        %vm1603 = vcmp.lt.s32.totalorder %v1602, 2
        %vm1604 = vcmp.eq.s32.totalorder %v1602, 0
        %v1605 = vxor.u32 %v1599, 2147483648
        %v1606 = vsel %vm1604, %v1598, %v1605
        %vm1607 = vcmp.eq.s32.totalorder %v1602, 2
        %v1608 = vxor.u32 %v1598, 2147483648
        %v1609 = vsel %vm1607, %v1608, %v1599
        %v1610 = vsel %vm1603, %v1606, %v1609
        %v1611 = vsel %vm1600, nan, %v1610
        %v1612 = vand.u32 2147483647, %v566
        %vm1613 = vcmp.le.f32.partialorder %v1612, 0.7853982
        %vm1614 = vcmp.lt.s32.totalorder %v566, 0
        %v1615 = vand.u32 %v566, 2139095040
        %v1616 = vshrl.u32 %v1615, 23
        %v1617 = vsub.s32 %v1616, 127
        %v1618 = vand.u32 2147483647, %v566
        %v1619 = vand.u32 %v1618, 8388607
        %v1620 = vor.u32 %v1619, 8388608
        %v1621 = vsub.s32 0, %v1620
        %v1622 = vadd.s32 %v1617, 1
        %vm1623 = vcmp.gt.s32.totalorder %v1622, 0
        %v1624 = vsel %vm1623, %v1622, 0
        %v1625 = vshrl.u32 %v1624, 5
        %v1626 = vand.u32 %v1624, 31
        %v1627 = vsub.s32 32, %v1626
        %v1628 = vshrl.u32 683565275, %v1627
        %v1629 = vshll.u32 683565275, %v1626
        %v1630 = vshrl.u32 2475754826, %v1627
        %v1631 = vor.u32 %v1629, %v1630
        %v1632 = vshll.u32 2475754826, %v1626
        %v1633 = vshrl.u32 2131351028, %v1627
        %v1634 = vor.u32 %v1632, %v1633
        %v1635 = vshll.u32 2131351028, %v1626
        %v1636 = vshrl.u32 2102212464, %v1627
        %v1637 = vor.u32 %v1635, %v1636
        %v1638 = vshll.u32 2102212464, %v1626
        %v1639 = vshrl.u32 920167782, %v1627
        %v1640 = vor.u32 %v1638, %v1639
        %v1641 = vshll.u32 920167782, %v1626
        %v1642 = vshrl.u32 1326507024, %v1627
        %v1643 = vor.u32 %v1641, %v1642
        %vm1644 = vcmp.lt.s32.totalorder %v1625, 1
        %vm1645 = vcmp.lt.s32.totalorder %v1625, 2
        %vm1646 = vcmp.lt.s32.totalorder %v1625, 3
        %vm1647 = vcmp.lt.s32.totalorder %v1625, 4
        %v1648 = vsel %vm1644, %v1628, %v1631
        %v1649 = vsel %vm1647, %v1637, 2102212464
        %v1650 = vsel %vm1646, %v1634, %v1649
        %v1651 = vsel %vm1645, %v1648, %v1650
        %v1652 = vsel %vm1644, %v1631, %v1634
        %v1653 = vsel %vm1647, %v1640, 920167782
        %v1654 = vsel %vm1646, %v1637, %v1653
        %v1655 = vsel %vm1645, %v1652, %v1654
        %v1656 = vsel %vm1644, %v1634, %v1637
        %v1657 = vsel %vm1647, %v1643, 1326507024
        %v1658 = vsel %vm1646, %v1640, %v1657
        %v1659 = vsel %vm1645, %v1656, %v1658
        %v1660 = vshll.u32 %v1620, 8
        %v1661 = vmul.u32.u64.compose %v1660, %v1659
        %v1662 = vextract.low.u32 %v1661
        %v1663 = vextract.high.u32 %v1661
        %v1664 = vmul.u32.u64.compose %v1660, %v1655
        %v1665 = vextract.low.u32 %v1664
        %v1666 = vextract.high.u32 %v1664
        %v1667 = vmul.u32 %v1660, %v1651
        %v1668 = vadd.s32 %v1663, %v1665
        %vm1669 = vc.u32 %v1663, %v1665
        %v1670 = vadd.s32 %v1666, 1
        %v1671 = vsel %vm1669, %v1670, %v1666
        %v1672 = vadd.s32 %v1667, %v1671
        %v1673 = vadd.s32 %v1672, 536870912
        %v1674 = vshrl.u32 %v1673, 30
        %v1675 = vshll.u32 %v1674, 30
        %v1676 = vsub.s32 %v1672, %v1675
        %vm1677 = vcmp.lt.s32.totalorder %v1676, 0
        %v1678 = vsub.s32 0, %v1676
        %v1679 = vsel %vm1677, %v1678, %v1676
        %v1680 = vclz %v1679
        %v1681 = vsub.s32 %v1680, 2
        %vm1682 = vcmp.gt.s32.totalorder 0, %v1681
        %v1683 = vsel %vm1682, 0, %v1681
        %v1684 = vsub.s32 32, %v1683
        %v1685 = vshll.u32 %v1676, %v1683
        %v1686 = vshrl.u32 %v1668, %v1684
        %v1687 = vor.u32 %v1685, %v1686
        %v1688 = vsub.s32 4294967266, %v1683
        %v1689 = vadd.s32 %v1688, 127
        %v1690 = vshll.u32 %v1689, 23
        %v1691 = vor.u32 4788187, %v1690
        %v1692 = vand.u32 2147483647, %v1691
        %v1694 = vcvt.s32.f32 %v1687
        %v1695 = vmul.f32 %v1694, %v1692
        %v1696 = vxor.u32 %v1695, 2147483648
        %v1697 = vsel %vm1614, %v1696, %v1695
        %v1698 = vsub.s32 4, %v1674
        %v1699 = vsel %vm1614, %v1698, %v1674
        %v1700 = vsel %vm1613, %v566, %v1697
        %v1701 = vsel %vm1613, 0, %v1699
        %v1702 = vcosq.f32.pop %v1700
        %v1703 = vsinq.f32.pop %v1700
        %vm1704 = vweird.f32 %v566
        %v1705 = vadd.s32 %v1701, 3
        %v1706 = vand.u32 %v1705, 3
        %vm1707 = vcmp.lt.s32.totalorder %v1706, 2
        %vm1708 = vcmp.eq.s32.totalorder %v1706, 0
        %v1709 = vxor.u32 %v1703, 2147483648
        %v1710 = vsel %vm1708, %v1702, %v1709
        %vm1711 = vcmp.eq.s32.totalorder %v1706, 2
        %v1712 = vxor.u32 %v1702, 2147483648
        %v1713 = vsel %vm1711, %v1712, %v1703
        %v1714 = vsel %vm1707, %v1710, %v1713
        %v1715 = vsel %vm1704, nan, %v1714
        %v1716 = vand.u32 2147483647, %v567
        %vm1717 = vcmp.le.f32.partialorder %v1716, 0.7853982
        %vm1718 = vcmp.lt.s32.totalorder %v567, 0
        %v1719 = vand.u32 %v567, 2139095040
        %v1720 = vshrl.u32 %v1719, 23
        %v1721 = vsub.s32 %v1720, 127
        %v1722 = vand.u32 2147483647, %v567
        %v1723 = vand.u32 %v1722, 8388607
        %v1724 = vor.u32 %v1723, 8388608
        %v1725 = vsub.s32 0, %v1724
        %v1726 = vadd.s32 %v1721, 1
        %vm1727 = vcmp.gt.s32.totalorder %v1726, 0
        %v1728 = vsel %vm1727, %v1726, 0
        %v1729 = vshrl.u32 %v1728, 5
        %v1730 = vand.u32 %v1728, 31
        %v1731 = vsub.s32 32, %v1730
        %v1732 = vshrl.u32 683565275, %v1731
        %v1733 = vshll.u32 683565275, %v1730
        %v1734 = vshrl.u32 2475754826, %v1731
        %v1735 = vor.u32 %v1733, %v1734
        %v1736 = vshll.u32 2475754826, %v1730
        %v1737 = vshrl.u32 2131351028, %v1731
        %v1738 = vor.u32 %v1736, %v1737
        %v1739 = vshll.u32 2131351028, %v1730
        %v1740 = vshrl.u32 2102212464, %v1731
        %v1741 = vor.u32 %v1739, %v1740
        %v1742 = vshll.u32 2102212464, %v1730
        %v1743 = vshrl.u32 920167782, %v1731
        %v1744 = vor.u32 %v1742, %v1743
        %v1745 = vshll.u32 920167782, %v1730
        %v1746 = vshrl.u32 1326507024, %v1731
        %v1747 = vor.u32 %v1745, %v1746
        %vm1748 = vcmp.lt.s32.totalorder %v1729, 1
        %vm1749 = vcmp.lt.s32.totalorder %v1729, 2
        %vm1750 = vcmp.lt.s32.totalorder %v1729, 3
        %vm1751 = vcmp.lt.s32.totalorder %v1729, 4
        %v1752 = vsel %vm1748, %v1732, %v1735
        %v1753 = vsel %vm1751, %v1741, 2102212464
        %v1754 = vsel %vm1750, %v1738, %v1753
        %v1755 = vsel %vm1749, %v1752, %v1754
        %v1756 = vsel %vm1748, %v1735, %v1738
        %v1757 = vsel %vm1751, %v1744, 920167782
        %v1758 = vsel %vm1750, %v1741, %v1757
        %v1759 = vsel %vm1749, %v1756, %v1758
        %v1760 = vsel %vm1748, %v1738, %v1741
        %v1761 = vsel %vm1751, %v1747, 1326507024
        %v1762 = vsel %vm1750, %v1744, %v1761
        %v1763 = vsel %vm1749, %v1760, %v1762
        %v1764 = vshll.u32 %v1724, 8
        %v1765 = vmul.u32.u64.compose %v1764, %v1763
        %v1766 = vextract.low.u32 %v1765
        %v1767 = vextract.high.u32 %v1765
        %v1768 = vmul.u32.u64.compose %v1764, %v1759
        %v1769 = vextract.low.u32 %v1768
        %v1770 = vextract.high.u32 %v1768
        %v1771 = vmul.u32 %v1764, %v1755
        %v1772 = vadd.s32 %v1767, %v1769
        %vm1773 = vc.u32 %v1767, %v1769
        %v1774 = vadd.s32 %v1770, 1
        %v1775 = vsel %vm1773, %v1774, %v1770
        %v1776 = vadd.s32 %v1771, %v1775
        %v1777 = vadd.s32 %v1776, 536870912
        %v1778 = vshrl.u32 %v1777, 30
        %v1779 = vshll.u32 %v1778, 30
        %v1780 = vsub.s32 %v1776, %v1779
        %vm1781 = vcmp.lt.s32.totalorder %v1780, 0
        %v1782 = vsub.s32 0, %v1780
        %v1783 = vsel %vm1781, %v1782, %v1780
        %v1784 = vclz %v1783
        %v1785 = vsub.s32 %v1784, 2
        %vm1786 = vcmp.gt.s32.totalorder 0, %v1785
        %v1787 = vsel %vm1786, 0, %v1785
        %v1788 = vsub.s32 32, %v1787
        %v1789 = vshll.u32 %v1780, %v1787
        %v1790 = vshrl.u32 %v1772, %v1788
        %v1791 = vor.u32 %v1789, %v1790
        %v1792 = vsub.s32 4294967266, %v1787
        %v1793 = vadd.s32 %v1792, 127
        %v1794 = vshll.u32 %v1793, 23
        %v1795 = vor.u32 4788187, %v1794
        %v1796 = vand.u32 2147483647, %v1795
        %v1798 = vcvt.s32.f32 %v1791
        %v1799 = vmul.f32 %v1798, %v1796
        %v1800 = vxor.u32 %v1799, 2147483648
        %v1801 = vsel %vm1718, %v1800, %v1799
        %v1802 = vsub.s32 4, %v1778
        %v1803 = vsel %vm1718, %v1802, %v1778
        %v1804 = vsel %vm1717, %v567, %v1801
        %v1805 = vsel %vm1717, 0, %v1803
        %v1806 = vcosq.f32.pop %v1804
        %v1807 = vsinq.f32.pop %v1804
        %vm1808 = vweird.f32 %v567
        %v1809 = vadd.s32 %v1805, 3
        %v1810 = vand.u32 %v1809, 3
        %vm1811 = vcmp.lt.s32.totalorder %v1810, 2
        %vm1812 = vcmp.eq.s32.totalorder %v1810, 0
        %v1813 = vxor.u32 %v1807, 2147483648
        %v1814 = vsel %vm1812, %v1806, %v1813
        %vm1815 = vcmp.eq.s32.totalorder %v1810, 2
        %v1816 = vxor.u32 %v1806, 2147483648
        %v1817 = vsel %vm1815, %v1816, %v1807
        %v1818 = vsel %vm1811, %v1814, %v1817
        %v1819 = vsel %vm1808, nan, %v1818
        %v1820 = vand.u32 2147483647, %v568
        %vm1821 = vcmp.le.f32.partialorder %v1820, 0.7853982
        %vm1822 = vcmp.lt.s32.totalorder %v568, 0
        %v1823 = vand.u32 %v568, 2139095040
        %v1824 = vshrl.u32 %v1823, 23
        %v1825 = vsub.s32 %v1824, 127
        %v1826 = vand.u32 2147483647, %v568
        %v1827 = vand.u32 %v1826, 8388607
        %v1828 = vor.u32 %v1827, 8388608
        %v1829 = vsub.s32 0, %v1828
        %v1830 = vadd.s32 %v1825, 1
        %vm1831 = vcmp.gt.s32.totalorder %v1830, 0
        %v1832 = vsel %vm1831, %v1830, 0
        %v1833 = vshrl.u32 %v1832, 5
        %v1834 = vand.u32 %v1832, 31
        %v1835 = vsub.s32 32, %v1834
        %v1836 = vshrl.u32 683565275, %v1835
        %v1837 = vshll.u32 683565275, %v1834
        %v1838 = vshrl.u32 2475754826, %v1835
        %v1839 = vor.u32 %v1837, %v1838
        %v1840 = vshll.u32 2475754826, %v1834
        %v1841 = vshrl.u32 2131351028, %v1835
        %v1842 = vor.u32 %v1840, %v1841
        %v1843 = vshll.u32 2131351028, %v1834
        %v1844 = vshrl.u32 2102212464, %v1835
        %v1845 = vor.u32 %v1843, %v1844
        %v1846 = vshll.u32 2102212464, %v1834
        %v1847 = vshrl.u32 920167782, %v1835
        %v1848 = vor.u32 %v1846, %v1847
        %v1849 = vshll.u32 920167782, %v1834
        %v1850 = vshrl.u32 1326507024, %v1835
        %v1851 = vor.u32 %v1849, %v1850
        %vm1852 = vcmp.lt.s32.totalorder %v1833, 1
        %vm1853 = vcmp.lt.s32.totalorder %v1833, 2
        %vm1854 = vcmp.lt.s32.totalorder %v1833, 3
        %vm1855 = vcmp.lt.s32.totalorder %v1833, 4
        %v1856 = vsel %vm1852, %v1836, %v1839
        %v1857 = vsel %vm1855, %v1845, 2102212464
        %v1858 = vsel %vm1854, %v1842, %v1857
        %v1859 = vsel %vm1853, %v1856, %v1858
        %v1860 = vsel %vm1852, %v1839, %v1842
        %v1861 = vsel %vm1855, %v1848, 920167782
        %v1862 = vsel %vm1854, %v1845, %v1861
        %v1863 = vsel %vm1853, %v1860, %v1862
        %v1864 = vsel %vm1852, %v1842, %v1845
        %v1865 = vsel %vm1855, %v1851, 1326507024
        %v1866 = vsel %vm1854, %v1848, %v1865
        %v1867 = vsel %vm1853, %v1864, %v1866
        %v1868 = vshll.u32 %v1828, 8
        %v1869 = vmul.u32.u64.compose %v1868, %v1867
        %v1870 = vextract.low.u32 %v1869
        %v1871 = vextract.high.u32 %v1869
        %v1872 = vmul.u32.u64.compose %v1868, %v1863
        %v1873 = vextract.low.u32 %v1872
        %v1874 = vextract.high.u32 %v1872
        %v1875 = vmul.u32 %v1868, %v1859
        %v1876 = vadd.s32 %v1871, %v1873
        %vm1877 = vc.u32 %v1871, %v1873
        %v1878 = vadd.s32 %v1874, 1
        %v1879 = vsel %vm1877, %v1878, %v1874
        %v1880 = vadd.s32 %v1875, %v1879
        %v1881 = vadd.s32 %v1880, 536870912
        %v1882 = vshrl.u32 %v1881, 30
        %v1883 = vshll.u32 %v1882, 30
        %v1884 = vsub.s32 %v1880, %v1883
        %vm1885 = vcmp.lt.s32.totalorder %v1884, 0
        %v1886 = vsub.s32 0, %v1884
        %v1887 = vsel %vm1885, %v1886, %v1884
        %v1888 = vclz %v1887
        %v1889 = vsub.s32 %v1888, 2
        %vm1890 = vcmp.gt.s32.totalorder 0, %v1889
        %v1891 = vsel %vm1890, 0, %v1889
        %v1892 = vsub.s32 32, %v1891
        %v1893 = vshll.u32 %v1884, %v1891
        %v1894 = vshrl.u32 %v1876, %v1892
        %v1895 = vor.u32 %v1893, %v1894
        %v1896 = vsub.s32 4294967266, %v1891
        %v1897 = vadd.s32 %v1896, 127
        %v1898 = vshll.u32 %v1897, 23
        %v1899 = vor.u32 4788187, %v1898
        %v1900 = vand.u32 2147483647, %v1899
        %v1902 = vcvt.s32.f32 %v1895
        %v1903 = vmul.f32 %v1902, %v1900
        %v1904 = vxor.u32 %v1903, 2147483648
        %v1905 = vsel %vm1822, %v1904, %v1903
        %v1906 = vsub.s32 4, %v1882
        %v1907 = vsel %vm1822, %v1906, %v1882
        %v1908 = vsel %vm1821, %v568, %v1905
        %v1909 = vsel %vm1821, 0, %v1907
        %v1910 = vcosq.f32.pop %v1908
        %v1911 = vsinq.f32.pop %v1908
        %vm1912 = vweird.f32 %v568
        %v1913 = vadd.s32 %v1909, 3
        %v1914 = vand.u32 %v1913, 3
        %vm1915 = vcmp.lt.s32.totalorder %v1914, 2
        %vm1916 = vcmp.eq.s32.totalorder %v1914, 0
        %v1917 = vxor.u32 %v1911, 2147483648
        %v1918 = vsel %vm1916, %v1910, %v1917
        %vm1919 = vcmp.eq.s32.totalorder %v1914, 2
        %v1920 = vxor.u32 %v1910, 2147483648
        %v1921 = vsel %vm1919, %v1920, %v1911
        %v1922 = vsel %vm1915, %v1918, %v1921
        %v1923 = vsel %vm1912, nan, %v1922
        %v1924 = vand.u32 2147483647, %v569
        %vm1925 = vcmp.le.f32.partialorder %v1924, 0.7853982
        %vm1926 = vcmp.lt.s32.totalorder %v569, 0
        %v1927 = vand.u32 %v569, 2139095040
        %v1928 = vshrl.u32 %v1927, 23
        %v1929 = vsub.s32 %v1928, 127
        %v1930 = vand.u32 2147483647, %v569
        %v1931 = vand.u32 %v1930, 8388607
        %v1932 = vor.u32 %v1931, 8388608
        %v1933 = vsub.s32 0, %v1932
        %v1934 = vadd.s32 %v1929, 1
        %vm1935 = vcmp.gt.s32.totalorder %v1934, 0
        %v1936 = vsel %vm1935, %v1934, 0
        %v1937 = vshrl.u32 %v1936, 5
        %v1938 = vand.u32 %v1936, 31
        %v1939 = vsub.s32 32, %v1938
        %v1940 = vshrl.u32 683565275, %v1939
        %v1941 = vshll.u32 683565275, %v1938
        %v1942 = vshrl.u32 2475754826, %v1939
        %v1943 = vor.u32 %v1941, %v1942
        %v1944 = vshll.u32 2475754826, %v1938
        %v1945 = vshrl.u32 2131351028, %v1939
        %v1946 = vor.u32 %v1944, %v1945
        %v1947 = vshll.u32 2131351028, %v1938
        %v1948 = vshrl.u32 2102212464, %v1939
        %v1949 = vor.u32 %v1947, %v1948
        %v1950 = vshll.u32 2102212464, %v1938
        %v1951 = vshrl.u32 920167782, %v1939
        %v1952 = vor.u32 %v1950, %v1951
        %v1953 = vshll.u32 920167782, %v1938
        %v1954 = vshrl.u32 1326507024, %v1939
        %v1955 = vor.u32 %v1953, %v1954
        %vm1956 = vcmp.lt.s32.totalorder %v1937, 1
        %vm1957 = vcmp.lt.s32.totalorder %v1937, 2
        %vm1958 = vcmp.lt.s32.totalorder %v1937, 3
        %vm1959 = vcmp.lt.s32.totalorder %v1937, 4
        %v1960 = vsel %vm1956, %v1940, %v1943
        %v1961 = vsel %vm1959, %v1949, 2102212464
        %v1962 = vsel %vm1958, %v1946, %v1961
        %v1963 = vsel %vm1957, %v1960, %v1962
        %v1964 = vsel %vm1956, %v1943, %v1946
        %v1965 = vsel %vm1959, %v1952, 920167782
        %v1966 = vsel %vm1958, %v1949, %v1965
        %v1967 = vsel %vm1957, %v1964, %v1966
        %v1968 = vsel %vm1956, %v1946, %v1949
        %v1969 = vsel %vm1959, %v1955, 1326507024
        %v1970 = vsel %vm1958, %v1952, %v1969
        %v1971 = vsel %vm1957, %v1968, %v1970
        %v1972 = vshll.u32 %v1932, 8
        %v1973 = vmul.u32.u64.compose %v1972, %v1971
        %v1974 = vextract.low.u32 %v1973
        %v1975 = vextract.high.u32 %v1973
        %v1976 = vmul.u32.u64.compose %v1972, %v1967
        %v1977 = vextract.low.u32 %v1976
        %v1978 = vextract.high.u32 %v1976
        %v1979 = vmul.u32 %v1972, %v1963
        %v1980 = vadd.s32 %v1975, %v1977
        %vm1981 = vc.u32 %v1975, %v1977
        %v1982 = vadd.s32 %v1978, 1
        %v1983 = vsel %vm1981, %v1982, %v1978
        %v1984 = vadd.s32 %v1979, %v1983
        %v1985 = vadd.s32 %v1984, 536870912
        %v1986 = vshrl.u32 %v1985, 30
        %v1987 = vshll.u32 %v1986, 30
        %v1988 = vsub.s32 %v1984, %v1987
        %vm1989 = vcmp.lt.s32.totalorder %v1988, 0
        %v1990 = vsub.s32 0, %v1988
        %v1991 = vsel %vm1989, %v1990, %v1988
        %v1992 = vclz %v1991
        %v1993 = vsub.s32 %v1992, 2
        %vm1994 = vcmp.gt.s32.totalorder 0, %v1993
        %v1995 = vsel %vm1994, 0, %v1993
        %v1996 = vsub.s32 32, %v1995
        %v1997 = vshll.u32 %v1988, %v1995
        %v1998 = vshrl.u32 %v1980, %v1996
        %v1999 = vor.u32 %v1997, %v1998
        %v2000 = vsub.s32 4294967266, %v1995
        %v2001 = vadd.s32 %v2000, 127
        %v2002 = vshll.u32 %v2001, 23
        %v2003 = vor.u32 4788187, %v2002
        %v2004 = vand.u32 2147483647, %v2003
        %v2006 = vcvt.s32.f32 %v1999
        %v2007 = vmul.f32 %v2006, %v2004
        %v2008 = vxor.u32 %v2007, 2147483648
        %v2009 = vsel %vm1926, %v2008, %v2007
        %v2010 = vsub.s32 4, %v1986
        %v2011 = vsel %vm1926, %v2010, %v1986
        %v2012 = vsel %vm1925, %v569, %v2009
        %v2013 = vsel %vm1925, 0, %v2011
        %v2014 = vcosq.f32.pop %v2012
        %v2015 = vsinq.f32.pop %v2012
        %vm2016 = vweird.f32 %v569
        %v2017 = vadd.s32 %v2013, 3
        %v2018 = vand.u32 %v2017, 3
        %vm2019 = vcmp.lt.s32.totalorder %v2018, 2
        %vm2020 = vcmp.eq.s32.totalorder %v2018, 0
        %v2021 = vxor.u32 %v2015, 2147483648
        %v2022 = vsel %vm2020, %v2014, %v2021
        %vm2023 = vcmp.eq.s32.totalorder %v2018, 2
        %v2024 = vxor.u32 %v2014, 2147483648
        %v2025 = vsel %vm2023, %v2024, %v2015
        %v2026 = vsel %vm2019, %v2022, %v2025
        %v2027 = vsel %vm2016, nan, %v2026
        %v2028 = vand.u32 2147483647, %v570
        %vm2029 = vcmp.le.f32.partialorder %v2028, 0.7853982
        %vm2030 = vcmp.lt.s32.totalorder %v570, 0
        %v2031 = vand.u32 %v570, 2139095040
        %v2032 = vshrl.u32 %v2031, 23
        %v2033 = vsub.s32 %v2032, 127
        %v2034 = vand.u32 2147483647, %v570
        %v2035 = vand.u32 %v2034, 8388607
        %v2036 = vor.u32 %v2035, 8388608
        %v2037 = vsub.s32 0, %v2036
        %v2038 = vadd.s32 %v2033, 1
        %vm2039 = vcmp.gt.s32.totalorder %v2038, 0
        %v2040 = vsel %vm2039, %v2038, 0
        %v2041 = vshrl.u32 %v2040, 5
        %v2042 = vand.u32 %v2040, 31
        %v2043 = vsub.s32 32, %v2042
        %v2044 = vshrl.u32 683565275, %v2043
        %v2045 = vshll.u32 683565275, %v2042
        %v2046 = vshrl.u32 2475754826, %v2043
        %v2047 = vor.u32 %v2045, %v2046
        %v2048 = vshll.u32 2475754826, %v2042
        %v2049 = vshrl.u32 2131351028, %v2043
        %v2050 = vor.u32 %v2048, %v2049
        %v2051 = vshll.u32 2131351028, %v2042
        %v2052 = vshrl.u32 2102212464, %v2043
        %v2053 = vor.u32 %v2051, %v2052
        %v2054 = vshll.u32 2102212464, %v2042
        %v2055 = vshrl.u32 920167782, %v2043
        %v2056 = vor.u32 %v2054, %v2055
        %v2057 = vshll.u32 920167782, %v2042
        %v2058 = vshrl.u32 1326507024, %v2043
        %v2059 = vor.u32 %v2057, %v2058
        %vm2060 = vcmp.lt.s32.totalorder %v2041, 1
        %vm2061 = vcmp.lt.s32.totalorder %v2041, 2
        %vm2062 = vcmp.lt.s32.totalorder %v2041, 3
        %vm2063 = vcmp.lt.s32.totalorder %v2041, 4
        %v2064 = vsel %vm2060, %v2044, %v2047
        %v2065 = vsel %vm2063, %v2053, 2102212464
        %v2066 = vsel %vm2062, %v2050, %v2065
        %v2067 = vsel %vm2061, %v2064, %v2066
        %v2068 = vsel %vm2060, %v2047, %v2050
        %v2069 = vsel %vm2063, %v2056, 920167782
        %v2070 = vsel %vm2062, %v2053, %v2069
        %v2071 = vsel %vm2061, %v2068, %v2070
        %v2072 = vsel %vm2060, %v2050, %v2053
        %v2073 = vsel %vm2063, %v2059, 1326507024
        %v2074 = vsel %vm2062, %v2056, %v2073
        %v2075 = vsel %vm2061, %v2072, %v2074
        %v2076 = vshll.u32 %v2036, 8
        %v2077 = vmul.u32.u64.compose %v2076, %v2075
        %v2078 = vextract.low.u32 %v2077
        %v2079 = vextract.high.u32 %v2077
        %v2080 = vmul.u32.u64.compose %v2076, %v2071
        %v2081 = vextract.low.u32 %v2080
        %v2082 = vextract.high.u32 %v2080
        %v2083 = vmul.u32 %v2076, %v2067
        %v2084 = vadd.s32 %v2079, %v2081
        %vm2085 = vc.u32 %v2079, %v2081
        %v2086 = vadd.s32 %v2082, 1
        %v2087 = vsel %vm2085, %v2086, %v2082
        %v2088 = vadd.s32 %v2083, %v2087
        %v2089 = vadd.s32 %v2088, 536870912
        %v2090 = vshrl.u32 %v2089, 30
        %v2091 = vshll.u32 %v2090, 30
        %v2092 = vsub.s32 %v2088, %v2091
        %vm2093 = vcmp.lt.s32.totalorder %v2092, 0
        %v2094 = vsub.s32 0, %v2092
        %v2095 = vsel %vm2093, %v2094, %v2092
        %v2096 = vclz %v2095
        %v2097 = vsub.s32 %v2096, 2
        %vm2098 = vcmp.gt.s32.totalorder 0, %v2097
        %v2099 = vsel %vm2098, 0, %v2097
        %v2100 = vsub.s32 32, %v2099
        %v2101 = vshll.u32 %v2092, %v2099
        %v2102 = vshrl.u32 %v2084, %v2100
        %v2103 = vor.u32 %v2101, %v2102
        %v2104 = vsub.s32 4294967266, %v2099
        %v2105 = vadd.s32 %v2104, 127
        %v2106 = vshll.u32 %v2105, 23
        %v2107 = vor.u32 4788187, %v2106
        %v2108 = vand.u32 2147483647, %v2107
        %v2110 = vcvt.s32.f32 %v2103
        %v2111 = vmul.f32 %v2110, %v2108
        %v2112 = vxor.u32 %v2111, 2147483648
        %v2113 = vsel %vm2030, %v2112, %v2111
        %v2114 = vsub.s32 4, %v2090
        %v2115 = vsel %vm2030, %v2114, %v2090
        %v2116 = vsel %vm2029, %v570, %v2113
        %v2117 = vsel %vm2029, 0, %v2115
        %v2118 = vcosq.f32.pop %v2116
        %v2119 = vsinq.f32.pop %v2116
        %vm2120 = vweird.f32 %v570
        %v2121 = vadd.s32 %v2117, 3
        %v2122 = vand.u32 %v2121, 3
        %vm2123 = vcmp.lt.s32.totalorder %v2122, 2
        %vm2124 = vcmp.eq.s32.totalorder %v2122, 0
        %v2125 = vxor.u32 %v2119, 2147483648
        %v2126 = vsel %vm2124, %v2118, %v2125
        %vm2127 = vcmp.eq.s32.totalorder %v2122, 2
        %v2128 = vxor.u32 %v2118, 2147483648
        %v2129 = vsel %vm2127, %v2128, %v2119
        %v2130 = vsel %vm2123, %v2126, %v2129
        %v2131 = vsel %vm2120, nan, %v2130
        %v2132 = vand.u32 2147483647, %v571
        %vm2133 = vcmp.le.f32.partialorder %v2132, 0.7853982
        %vm2134 = vcmp.lt.s32.totalorder %v571, 0
        %v2135 = vand.u32 %v571, 2139095040
        %v2136 = vshrl.u32 %v2135, 23
        %v2137 = vsub.s32 %v2136, 127
        %v2138 = vand.u32 2147483647, %v571
        %v2139 = vand.u32 %v2138, 8388607
        %v2140 = vor.u32 %v2139, 8388608
        %v2141 = vsub.s32 0, %v2140
        %v2142 = vadd.s32 %v2137, 1
        %vm2143 = vcmp.gt.s32.totalorder %v2142, 0
        %v2144 = vsel %vm2143, %v2142, 0
        %v2145 = vshrl.u32 %v2144, 5
        %v2146 = vand.u32 %v2144, 31
        %v2147 = vsub.s32 32, %v2146
        %v2148 = vshrl.u32 683565275, %v2147
        %v2149 = vshll.u32 683565275, %v2146
        %v2150 = vshrl.u32 2475754826, %v2147
        %v2151 = vor.u32 %v2149, %v2150
        %v2152 = vshll.u32 2475754826, %v2146
        %v2153 = vshrl.u32 2131351028, %v2147
        %v2154 = vor.u32 %v2152, %v2153
        %v2155 = vshll.u32 2131351028, %v2146
        %v2156 = vshrl.u32 2102212464, %v2147
        %v2157 = vor.u32 %v2155, %v2156
        %v2158 = vshll.u32 2102212464, %v2146
        %v2159 = vshrl.u32 920167782, %v2147
        %v2160 = vor.u32 %v2158, %v2159
        %v2161 = vshll.u32 920167782, %v2146
        %v2162 = vshrl.u32 1326507024, %v2147
        %v2163 = vor.u32 %v2161, %v2162
        %vm2164 = vcmp.lt.s32.totalorder %v2145, 1
        %vm2165 = vcmp.lt.s32.totalorder %v2145, 2
        %vm2166 = vcmp.lt.s32.totalorder %v2145, 3
        %vm2167 = vcmp.lt.s32.totalorder %v2145, 4
        %v2168 = vsel %vm2164, %v2148, %v2151
        %v2169 = vsel %vm2167, %v2157, 2102212464
        %v2170 = vsel %vm2166, %v2154, %v2169
        %v2171 = vsel %vm2165, %v2168, %v2170
        %v2172 = vsel %vm2164, %v2151, %v2154
        %v2173 = vsel %vm2167, %v2160, 920167782
        %v2174 = vsel %vm2166, %v2157, %v2173
        %v2175 = vsel %vm2165, %v2172, %v2174
        %v2176 = vsel %vm2164, %v2154, %v2157
        %v2177 = vsel %vm2167, %v2163, 1326507024
        %v2178 = vsel %vm2166, %v2160, %v2177
        %v2179 = vsel %vm2165, %v2176, %v2178
        %v2180 = vshll.u32 %v2140, 8
        %v2181 = vmul.u32.u64.compose %v2180, %v2179
        %v2182 = vextract.low.u32 %v2181
        %v2183 = vextract.high.u32 %v2181
        %v2184 = vmul.u32.u64.compose %v2180, %v2175
        %v2185 = vextract.low.u32 %v2184
        %v2186 = vextract.high.u32 %v2184
        %v2187 = vmul.u32 %v2180, %v2171
        %v2188 = vadd.s32 %v2183, %v2185
        %vm2189 = vc.u32 %v2183, %v2185
        %v2190 = vadd.s32 %v2186, 1
        %v2191 = vsel %vm2189, %v2190, %v2186
        %v2192 = vadd.s32 %v2187, %v2191
        %v2193 = vadd.s32 %v2192, 536870912
        %v2194 = vshrl.u32 %v2193, 30
        %v2195 = vshll.u32 %v2194, 30
        %v2196 = vsub.s32 %v2192, %v2195
        %vm2197 = vcmp.lt.s32.totalorder %v2196, 0
        %v2198 = vsub.s32 0, %v2196
        %v2199 = vsel %vm2197, %v2198, %v2196
        %v2200 = vclz %v2199
        %v2201 = vsub.s32 %v2200, 2
        %vm2202 = vcmp.gt.s32.totalorder 0, %v2201
        %v2203 = vsel %vm2202, 0, %v2201
        %v2204 = vsub.s32 32, %v2203
        %v2205 = vshll.u32 %v2196, %v2203
        %v2206 = vshrl.u32 %v2188, %v2204
        %v2207 = vor.u32 %v2205, %v2206
        %v2208 = vsub.s32 4294967266, %v2203
        %v2209 = vadd.s32 %v2208, 127
        %v2210 = vshll.u32 %v2209, 23
        %v2211 = vor.u32 4788187, %v2210
        %v2212 = vand.u32 2147483647, %v2211
        %v2214 = vcvt.s32.f32 %v2207
        %v2215 = vmul.f32 %v2214, %v2212
        %v2216 = vxor.u32 %v2215, 2147483648
        %v2217 = vsel %vm2134, %v2216, %v2215
        %v2218 = vsub.s32 4, %v2194
        %v2219 = vsel %vm2134, %v2218, %v2194
        %v2220 = vsel %vm2133, %v571, %v2217
        %v2221 = vsel %vm2133, 0, %v2219
        %v2222 = vcosq.f32.pop %v2220
        %v2223 = vsinq.f32.pop %v2220
        %vm2224 = vweird.f32 %v571
        %v2225 = vadd.s32 %v2221, 3
        %v2226 = vand.u32 %v2225, 3
        %vm2227 = vcmp.lt.s32.totalorder %v2226, 2
        %vm2228 = vcmp.eq.s32.totalorder %v2226, 0
        %v2229 = vxor.u32 %v2223, 2147483648
        %v2230 = vsel %vm2228, %v2222, %v2229
        %vm2231 = vcmp.eq.s32.totalorder %v2226, 2
        %v2232 = vxor.u32 %v2222, 2147483648
        %v2233 = vsel %vm2231, %v2232, %v2223
        %v2234 = vsel %vm2227, %v2230, %v2233
        %v2235 = vsel %vm2224, nan, %v2234
        %v2236 = vand.u32 2147483647, %v556
        %vm2237 = vcmp.le.f32.partialorder %v2236, 0.7853982
        %vm2238 = vcmp.lt.s32.totalorder %v556, 0
        %v2239 = vand.u32 %v556, 2139095040
        %v2240 = vshrl.u32 %v2239, 23
        %v2241 = vsub.s32 %v2240, 127
        %v2242 = vand.u32 2147483647, %v556
        %v2243 = vand.u32 %v2242, 8388607
        %v2244 = vor.u32 %v2243, 8388608
        %v2245 = vsub.s32 0, %v2244
        %v2246 = vadd.s32 %v2241, 1
        %vm2247 = vcmp.gt.s32.totalorder %v2246, 0
        %v2248 = vsel %vm2247, %v2246, 0
        %v2249 = vshrl.u32 %v2248, 5
        %v2250 = vand.u32 %v2248, 31
        %v2251 = vsub.s32 32, %v2250
        %v2252 = vshrl.u32 683565275, %v2251
        %v2253 = vshll.u32 683565275, %v2250
        %v2254 = vshrl.u32 2475754826, %v2251
        %v2255 = vor.u32 %v2253, %v2254
        %v2256 = vshll.u32 2475754826, %v2250
        %v2257 = vshrl.u32 2131351028, %v2251
        %v2258 = vor.u32 %v2256, %v2257
        %v2259 = vshll.u32 2131351028, %v2250
        %v2260 = vshrl.u32 2102212464, %v2251
        %v2261 = vor.u32 %v2259, %v2260
        %v2262 = vshll.u32 2102212464, %v2250
        %v2263 = vshrl.u32 920167782, %v2251
        %v2264 = vor.u32 %v2262, %v2263
        %v2265 = vshll.u32 920167782, %v2250
        %v2266 = vshrl.u32 1326507024, %v2251
        %v2267 = vor.u32 %v2265, %v2266
        %vm2268 = vcmp.lt.s32.totalorder %v2249, 1
        %vm2269 = vcmp.lt.s32.totalorder %v2249, 2
        %vm2270 = vcmp.lt.s32.totalorder %v2249, 3
        %vm2271 = vcmp.lt.s32.totalorder %v2249, 4
        %v2272 = vsel %vm2268, %v2252, %v2255
        %v2273 = vsel %vm2271, %v2261, 2102212464
        %v2274 = vsel %vm2270, %v2258, %v2273
        %v2275 = vsel %vm2269, %v2272, %v2274
        %v2276 = vsel %vm2268, %v2255, %v2258
        %v2277 = vsel %vm2271, %v2264, 920167782
        %v2278 = vsel %vm2270, %v2261, %v2277
        %v2279 = vsel %vm2269, %v2276, %v2278
        %v2280 = vsel %vm2268, %v2258, %v2261
        %v2281 = vsel %vm2271, %v2267, 1326507024
        %v2282 = vsel %vm2270, %v2264, %v2281
        %v2283 = vsel %vm2269, %v2280, %v2282
        %v2284 = vshll.u32 %v2244, 8
        %v2285 = vmul.u32.u64.compose %v2284, %v2283
        %v2286 = vextract.low.u32 %v2285
        %v2287 = vextract.high.u32 %v2285
        %v2288 = vmul.u32.u64.compose %v2284, %v2279
        %v2289 = vextract.low.u32 %v2288
        %v2290 = vextract.high.u32 %v2288
        %v2291 = vmul.u32 %v2284, %v2275
        %v2292 = vadd.s32 %v2287, %v2289
        %vm2293 = vc.u32 %v2287, %v2289
        %v2294 = vadd.s32 %v2290, 1
        %v2295 = vsel %vm2293, %v2294, %v2290
        %v2296 = vadd.s32 %v2291, %v2295
        %v2297 = vadd.s32 %v2296, 536870912
        %v2298 = vshrl.u32 %v2297, 30
        %v2299 = vshll.u32 %v2298, 30
        %v2300 = vsub.s32 %v2296, %v2299
        %vm2301 = vcmp.lt.s32.totalorder %v2300, 0
        %v2302 = vsub.s32 0, %v2300
        %v2303 = vsel %vm2301, %v2302, %v2300
        %v2304 = vclz %v2303
        %v2305 = vsub.s32 %v2304, 2
        %vm2306 = vcmp.gt.s32.totalorder 0, %v2305
        %v2307 = vsel %vm2306, 0, %v2305
        %v2308 = vsub.s32 32, %v2307
        %v2309 = vshll.u32 %v2300, %v2307
        %v2310 = vshrl.u32 %v2292, %v2308
        %v2311 = vor.u32 %v2309, %v2310
        %v2312 = vsub.s32 4294967266, %v2307
        %v2313 = vadd.s32 %v2312, 127
        %v2314 = vshll.u32 %v2313, 23
        %v2315 = vor.u32 4788187, %v2314
        %v2316 = vand.u32 2147483647, %v2315
        %v2318 = vcvt.s32.f32 %v2311
        %v2319 = vmul.f32 %v2318, %v2316
        %v2320 = vxor.u32 %v2319, 2147483648
        %v2321 = vsel %vm2238, %v2320, %v2319
        %v2322 = vsub.s32 4, %v2298
        %v2323 = vsel %vm2238, %v2322, %v2298
        %v2324 = vsel %vm2237, %v556, %v2321
        %v2325 = vsel %vm2237, 0, %v2323
        %v2326 = vcosq.f32.pop %v2324
        %v2327 = vsinq.f32.pop %v2324
        %vm2328 = vweird.f32 %v556
        %v2329 = vand.u32 %v2325, 3
        %vm2330 = vcmp.lt.s32.totalorder %v2329, 2
        %vm2331 = vcmp.eq.s32.totalorder %v2329, 0
        %v2332 = vxor.u32 %v2327, 2147483648
        %v2333 = vsel %vm2331, %v2326, %v2332
        %vm2334 = vcmp.eq.s32.totalorder %v2329, 2
        %v2335 = vxor.u32 %v2326, 2147483648
        %v2336 = vsel %vm2334, %v2335, %v2327
        %v2337 = vsel %vm2330, %v2333, %v2336
        %v2338 = vsel %vm2328, nan, %v2337
        %v2339 = vand.u32 2147483647, %v557
        %vm2340 = vcmp.le.f32.partialorder %v2339, 0.7853982
        %vm2341 = vcmp.lt.s32.totalorder %v557, 0
        %v2342 = vand.u32 %v557, 2139095040
        %v2343 = vshrl.u32 %v2342, 23
        %v2344 = vsub.s32 %v2343, 127
        %v2345 = vand.u32 2147483647, %v557
        %v2346 = vand.u32 %v2345, 8388607
        %v2347 = vor.u32 %v2346, 8388608
        %v2348 = vsub.s32 0, %v2347
        %v2349 = vadd.s32 %v2344, 1
        %vm2350 = vcmp.gt.s32.totalorder %v2349, 0
        %v2351 = vsel %vm2350, %v2349, 0
        %v2352 = vshrl.u32 %v2351, 5
        %v2353 = vand.u32 %v2351, 31
        %v2354 = vsub.s32 32, %v2353
        %v2355 = vshrl.u32 683565275, %v2354
        %v2356 = vshll.u32 683565275, %v2353
        %v2357 = vshrl.u32 2475754826, %v2354
        %v2358 = vor.u32 %v2356, %v2357
        %v2359 = vshll.u32 2475754826, %v2353
        %v2360 = vshrl.u32 2131351028, %v2354
        %v2361 = vor.u32 %v2359, %v2360
        %v2362 = vshll.u32 2131351028, %v2353
        %v2363 = vshrl.u32 2102212464, %v2354
        %v2364 = vor.u32 %v2362, %v2363
        %v2365 = vshll.u32 2102212464, %v2353
        %v2366 = vshrl.u32 920167782, %v2354
        %v2367 = vor.u32 %v2365, %v2366
        %v2368 = vshll.u32 920167782, %v2353
        %v2369 = vshrl.u32 1326507024, %v2354
        %v2370 = vor.u32 %v2368, %v2369
        %vm2371 = vcmp.lt.s32.totalorder %v2352, 1
        %vm2372 = vcmp.lt.s32.totalorder %v2352, 2
        %vm2373 = vcmp.lt.s32.totalorder %v2352, 3
        %vm2374 = vcmp.lt.s32.totalorder %v2352, 4
        %v2375 = vsel %vm2371, %v2355, %v2358
        %v2376 = vsel %vm2374, %v2364, 2102212464
        %v2377 = vsel %vm2373, %v2361, %v2376
        %v2378 = vsel %vm2372, %v2375, %v2377
        %v2379 = vsel %vm2371, %v2358, %v2361
        %v2380 = vsel %vm2374, %v2367, 920167782
        %v2381 = vsel %vm2373, %v2364, %v2380
        %v2382 = vsel %vm2372, %v2379, %v2381
        %v2383 = vsel %vm2371, %v2361, %v2364
        %v2384 = vsel %vm2374, %v2370, 1326507024
        %v2385 = vsel %vm2373, %v2367, %v2384
        %v2386 = vsel %vm2372, %v2383, %v2385
        %v2387 = vshll.u32 %v2347, 8
        %v2388 = vmul.u32.u64.compose %v2387, %v2386
        %v2389 = vextract.low.u32 %v2388
        %v2390 = vextract.high.u32 %v2388
        %v2391 = vmul.u32.u64.compose %v2387, %v2382
        %v2392 = vextract.low.u32 %v2391
        %v2393 = vextract.high.u32 %v2391
        %v2394 = vmul.u32 %v2387, %v2378
        %v2395 = vadd.s32 %v2390, %v2392
        %vm2396 = vc.u32 %v2390, %v2392
        %v2397 = vadd.s32 %v2393, 1
        %v2398 = vsel %vm2396, %v2397, %v2393
        %v2399 = vadd.s32 %v2394, %v2398
        %v2400 = vadd.s32 %v2399, 536870912
        %v2401 = vshrl.u32 %v2400, 30
        %v2402 = vshll.u32 %v2401, 30
        %v2403 = vsub.s32 %v2399, %v2402
        %vm2404 = vcmp.lt.s32.totalorder %v2403, 0
        %v2405 = vsub.s32 0, %v2403
        %v2406 = vsel %vm2404, %v2405, %v2403
        %v2407 = vclz %v2406
        %v2408 = vsub.s32 %v2407, 2
        %vm2409 = vcmp.gt.s32.totalorder 0, %v2408
        %v2410 = vsel %vm2409, 0, %v2408
        %v2411 = vsub.s32 32, %v2410
        %v2412 = vshll.u32 %v2403, %v2410
        %v2413 = vshrl.u32 %v2395, %v2411
        %v2414 = vor.u32 %v2412, %v2413
        %v2415 = vsub.s32 4294967266, %v2410
        %v2416 = vadd.s32 %v2415, 127
        %v2417 = vshll.u32 %v2416, 23
        %v2418 = vor.u32 4788187, %v2417
        %v2419 = vand.u32 2147483647, %v2418
        %v2421 = vcvt.s32.f32 %v2414
        %v2422 = vmul.f32 %v2421, %v2419
        %v2423 = vxor.u32 %v2422, 2147483648
        %v2424 = vsel %vm2341, %v2423, %v2422
        %v2425 = vsub.s32 4, %v2401
        %v2426 = vsel %vm2341, %v2425, %v2401
        %v2427 = vsel %vm2340, %v557, %v2424
        %v2428 = vsel %vm2340, 0, %v2426
        %v2429 = vcosq.f32.pop %v2427
        %v2430 = vsinq.f32.pop %v2427
        %vm2431 = vweird.f32 %v557
        %v2432 = vand.u32 %v2428, 3
        %vm2433 = vcmp.lt.s32.totalorder %v2432, 2
        %vm2434 = vcmp.eq.s32.totalorder %v2432, 0
        %v2435 = vxor.u32 %v2430, 2147483648
        %v2436 = vsel %vm2434, %v2429, %v2435
        %vm2437 = vcmp.eq.s32.totalorder %v2432, 2
        %v2438 = vxor.u32 %v2429, 2147483648
        %v2439 = vsel %vm2437, %v2438, %v2430
        %v2440 = vsel %vm2433, %v2436, %v2439
        %v2441 = vsel %vm2431, nan, %v2440
        %v2442 = vand.u32 2147483647, %v558
        %vm2443 = vcmp.le.f32.partialorder %v2442, 0.7853982
        %vm2444 = vcmp.lt.s32.totalorder %v558, 0
        %v2445 = vand.u32 %v558, 2139095040
        %v2446 = vshrl.u32 %v2445, 23
        %v2447 = vsub.s32 %v2446, 127
        %v2448 = vand.u32 2147483647, %v558
        %v2449 = vand.u32 %v2448, 8388607
        %v2450 = vor.u32 %v2449, 8388608
        %v2451 = vsub.s32 0, %v2450
        %v2452 = vadd.s32 %v2447, 1
        %vm2453 = vcmp.gt.s32.totalorder %v2452, 0
        %v2454 = vsel %vm2453, %v2452, 0
        %v2455 = vshrl.u32 %v2454, 5
        %v2456 = vand.u32 %v2454, 31
        %v2457 = vsub.s32 32, %v2456
        %v2458 = vshrl.u32 683565275, %v2457
        %v2459 = vshll.u32 683565275, %v2456
        %v2460 = vshrl.u32 2475754826, %v2457
        %v2461 = vor.u32 %v2459, %v2460
        %v2462 = vshll.u32 2475754826, %v2456
        %v2463 = vshrl.u32 2131351028, %v2457
        %v2464 = vor.u32 %v2462, %v2463
        %v2465 = vshll.u32 2131351028, %v2456
        %v2466 = vshrl.u32 2102212464, %v2457
        %v2467 = vor.u32 %v2465, %v2466
        %v2468 = vshll.u32 2102212464, %v2456
        %v2469 = vshrl.u32 920167782, %v2457
        %v2470 = vor.u32 %v2468, %v2469
        %v2471 = vshll.u32 920167782, %v2456
        %v2472 = vshrl.u32 1326507024, %v2457
        %v2473 = vor.u32 %v2471, %v2472
        %vm2474 = vcmp.lt.s32.totalorder %v2455, 1
        %vm2475 = vcmp.lt.s32.totalorder %v2455, 2
        %vm2476 = vcmp.lt.s32.totalorder %v2455, 3
        %vm2477 = vcmp.lt.s32.totalorder %v2455, 4
        %v2478 = vsel %vm2474, %v2458, %v2461
        %v2479 = vsel %vm2477, %v2467, 2102212464
        %v2480 = vsel %vm2476, %v2464, %v2479
        %v2481 = vsel %vm2475, %v2478, %v2480
        %v2482 = vsel %vm2474, %v2461, %v2464
        %v2483 = vsel %vm2477, %v2470, 920167782
        %v2484 = vsel %vm2476, %v2467, %v2483
        %v2485 = vsel %vm2475, %v2482, %v2484
        %v2486 = vsel %vm2474, %v2464, %v2467
        %v2487 = vsel %vm2477, %v2473, 1326507024
        %v2488 = vsel %vm2476, %v2470, %v2487
        %v2489 = vsel %vm2475, %v2486, %v2488
        %v2490 = vshll.u32 %v2450, 8
        %v2491 = vmul.u32.u64.compose %v2490, %v2489
        %v2492 = vextract.low.u32 %v2491
        %v2493 = vextract.high.u32 %v2491
        %v2494 = vmul.u32.u64.compose %v2490, %v2485
        %v2495 = vextract.low.u32 %v2494
        %v2496 = vextract.high.u32 %v2494
        %v2497 = vmul.u32 %v2490, %v2481
        %v2498 = vadd.s32 %v2493, %v2495
        %vm2499 = vc.u32 %v2493, %v2495
        %v2500 = vadd.s32 %v2496, 1
        %v2501 = vsel %vm2499, %v2500, %v2496
        %v2502 = vadd.s32 %v2497, %v2501
        %v2503 = vadd.s32 %v2502, 536870912
        %v2504 = vshrl.u32 %v2503, 30
        %v2505 = vshll.u32 %v2504, 30
        %v2506 = vsub.s32 %v2502, %v2505
        %vm2507 = vcmp.lt.s32.totalorder %v2506, 0
        %v2508 = vsub.s32 0, %v2506
        %v2509 = vsel %vm2507, %v2508, %v2506
        %v2510 = vclz %v2509
        %v2511 = vsub.s32 %v2510, 2
        %vm2512 = vcmp.gt.s32.totalorder 0, %v2511
        %v2513 = vsel %vm2512, 0, %v2511
        %v2514 = vsub.s32 32, %v2513
        %v2515 = vshll.u32 %v2506, %v2513
        %v2516 = vshrl.u32 %v2498, %v2514
        %v2517 = vor.u32 %v2515, %v2516
        %v2518 = vsub.s32 4294967266, %v2513
        %v2519 = vadd.s32 %v2518, 127
        %v2520 = vshll.u32 %v2519, 23
        %v2521 = vor.u32 4788187, %v2520
        %v2522 = vand.u32 2147483647, %v2521
        %v2524 = vcvt.s32.f32 %v2517
        %v2525 = vmul.f32 %v2524, %v2522
        %v2526 = vxor.u32 %v2525, 2147483648
        %v2527 = vsel %vm2444, %v2526, %v2525
        %v2528 = vsub.s32 4, %v2504
        %v2529 = vsel %vm2444, %v2528, %v2504
        %v2530 = vsel %vm2443, %v558, %v2527
        %v2531 = vsel %vm2443, 0, %v2529
        %v2532 = vcosq.f32.pop %v2530
        %v2533 = vsinq.f32.pop %v2530
        %vm2534 = vweird.f32 %v558
        %v2535 = vand.u32 %v2531, 3
        %vm2536 = vcmp.lt.s32.totalorder %v2535, 2
        %vm2537 = vcmp.eq.s32.totalorder %v2535, 0
        %v2538 = vxor.u32 %v2533, 2147483648
        %v2539 = vsel %vm2537, %v2532, %v2538
        %vm2540 = vcmp.eq.s32.totalorder %v2535, 2
        %v2541 = vxor.u32 %v2532, 2147483648
        %v2542 = vsel %vm2540, %v2541, %v2533
        %v2543 = vsel %vm2536, %v2539, %v2542
        %v2544 = vsel %vm2534, nan, %v2543
        %v2545 = vand.u32 2147483647, %v559
        %vm2546 = vcmp.le.f32.partialorder %v2545, 0.7853982
        %vm2547 = vcmp.lt.s32.totalorder %v559, 0
        %v2548 = vand.u32 %v559, 2139095040
        %v2549 = vshrl.u32 %v2548, 23
        %v2550 = vsub.s32 %v2549, 127
        %v2551 = vand.u32 2147483647, %v559
        %v2552 = vand.u32 %v2551, 8388607
        %v2553 = vor.u32 %v2552, 8388608
        %v2554 = vsub.s32 0, %v2553
        %v2555 = vadd.s32 %v2550, 1
        %vm2556 = vcmp.gt.s32.totalorder %v2555, 0
        %v2557 = vsel %vm2556, %v2555, 0
        %v2558 = vshrl.u32 %v2557, 5
        %v2559 = vand.u32 %v2557, 31
        %v2560 = vsub.s32 32, %v2559
        %v2561 = vshrl.u32 683565275, %v2560
        %v2562 = vshll.u32 683565275, %v2559
        %v2563 = vshrl.u32 2475754826, %v2560
        %v2564 = vor.u32 %v2562, %v2563
        %v2565 = vshll.u32 2475754826, %v2559
        %v2566 = vshrl.u32 2131351028, %v2560
        %v2567 = vor.u32 %v2565, %v2566
        %v2568 = vshll.u32 2131351028, %v2559
        %v2569 = vshrl.u32 2102212464, %v2560
        %v2570 = vor.u32 %v2568, %v2569
        %v2571 = vshll.u32 2102212464, %v2559
        %v2572 = vshrl.u32 920167782, %v2560
        %v2573 = vor.u32 %v2571, %v2572
        %v2574 = vshll.u32 920167782, %v2559
        %v2575 = vshrl.u32 1326507024, %v2560
        %v2576 = vor.u32 %v2574, %v2575
        %vm2577 = vcmp.lt.s32.totalorder %v2558, 1
        %vm2578 = vcmp.lt.s32.totalorder %v2558, 2
        %vm2579 = vcmp.lt.s32.totalorder %v2558, 3
        %vm2580 = vcmp.lt.s32.totalorder %v2558, 4
        %v2581 = vsel %vm2577, %v2561, %v2564
        %v2582 = vsel %vm2580, %v2570, 2102212464
        %v2583 = vsel %vm2579, %v2567, %v2582
        %v2584 = vsel %vm2578, %v2581, %v2583
        %v2585 = vsel %vm2577, %v2564, %v2567
        %v2586 = vsel %vm2580, %v2573, 920167782
        %v2587 = vsel %vm2579, %v2570, %v2586
        %v2588 = vsel %vm2578, %v2585, %v2587
        %v2589 = vsel %vm2577, %v2567, %v2570
        %v2590 = vsel %vm2580, %v2576, 1326507024
        %v2591 = vsel %vm2579, %v2573, %v2590
        %v2592 = vsel %vm2578, %v2589, %v2591
        %v2593 = vshll.u32 %v2553, 8
        %v2594 = vmul.u32.u64.compose %v2593, %v2592
        %v2595 = vextract.low.u32 %v2594
        %v2596 = vextract.high.u32 %v2594
        %v2597 = vmul.u32.u64.compose %v2593, %v2588
        %v2598 = vextract.low.u32 %v2597
        %v2599 = vextract.high.u32 %v2597
        %v2600 = vmul.u32 %v2593, %v2584
        %v2601 = vadd.s32 %v2596, %v2598
        %vm2602 = vc.u32 %v2596, %v2598
        %v2603 = vadd.s32 %v2599, 1
        %v2604 = vsel %vm2602, %v2603, %v2599
        %v2605 = vadd.s32 %v2600, %v2604
        %v2606 = vadd.s32 %v2605, 536870912
        %v2607 = vshrl.u32 %v2606, 30
        %v2608 = vshll.u32 %v2607, 30
        %v2609 = vsub.s32 %v2605, %v2608
        %vm2610 = vcmp.lt.s32.totalorder %v2609, 0
        %v2611 = vsub.s32 0, %v2609
        %v2612 = vsel %vm2610, %v2611, %v2609
        %v2613 = vclz %v2612
        %v2614 = vsub.s32 %v2613, 2
        %vm2615 = vcmp.gt.s32.totalorder 0, %v2614
        %v2616 = vsel %vm2615, 0, %v2614
        %v2617 = vsub.s32 32, %v2616
        %v2618 = vshll.u32 %v2609, %v2616
        %v2619 = vshrl.u32 %v2601, %v2617
        %v2620 = vor.u32 %v2618, %v2619
        %v2621 = vsub.s32 4294967266, %v2616
        %v2622 = vadd.s32 %v2621, 127
        %v2623 = vshll.u32 %v2622, 23
        %v2624 = vor.u32 4788187, %v2623
        %v2625 = vand.u32 2147483647, %v2624
        %v2627 = vcvt.s32.f32 %v2620
        %v2628 = vmul.f32 %v2627, %v2625
        %v2629 = vxor.u32 %v2628, 2147483648
        %v2630 = vsel %vm2547, %v2629, %v2628
        %v2631 = vsub.s32 4, %v2607
        %v2632 = vsel %vm2547, %v2631, %v2607
        %v2633 = vsel %vm2546, %v559, %v2630
        %v2634 = vsel %vm2546, 0, %v2632
        %v2635 = vcosq.f32.pop %v2633
        %v2636 = vsinq.f32.pop %v2633
        %vm2637 = vweird.f32 %v559
        %v2638 = vand.u32 %v2634, 3
        %vm2639 = vcmp.lt.s32.totalorder %v2638, 2
        %vm2640 = vcmp.eq.s32.totalorder %v2638, 0
        %v2641 = vxor.u32 %v2636, 2147483648
        %v2642 = vsel %vm2640, %v2635, %v2641
        %vm2643 = vcmp.eq.s32.totalorder %v2638, 2
        %v2644 = vxor.u32 %v2635, 2147483648
        %v2645 = vsel %vm2643, %v2644, %v2636
        %v2646 = vsel %vm2639, %v2642, %v2645
        %v2647 = vsel %vm2637, nan, %v2646
        %v2648 = vand.u32 2147483647, %v560
        %vm2649 = vcmp.le.f32.partialorder %v2648, 0.7853982
        %vm2650 = vcmp.lt.s32.totalorder %v560, 0
        %v2651 = vand.u32 %v560, 2139095040
        %v2652 = vshrl.u32 %v2651, 23
        %v2653 = vsub.s32 %v2652, 127
        %v2654 = vand.u32 2147483647, %v560
        %v2655 = vand.u32 %v2654, 8388607
        %v2656 = vor.u32 %v2655, 8388608
        %v2657 = vsub.s32 0, %v2656
        %v2658 = vadd.s32 %v2653, 1
        %vm2659 = vcmp.gt.s32.totalorder %v2658, 0
        %v2660 = vsel %vm2659, %v2658, 0
        %v2661 = vshrl.u32 %v2660, 5
        %v2662 = vand.u32 %v2660, 31
        %v2663 = vsub.s32 32, %v2662
        %v2664 = vshrl.u32 683565275, %v2663
        %v2665 = vshll.u32 683565275, %v2662
        %v2666 = vshrl.u32 2475754826, %v2663
        %v2667 = vor.u32 %v2665, %v2666
        %v2668 = vshll.u32 2475754826, %v2662
        %v2669 = vshrl.u32 2131351028, %v2663
        %v2670 = vor.u32 %v2668, %v2669
        %v2671 = vshll.u32 2131351028, %v2662
        %v2672 = vshrl.u32 2102212464, %v2663
        %v2673 = vor.u32 %v2671, %v2672
        %v2674 = vshll.u32 2102212464, %v2662
        %v2675 = vshrl.u32 920167782, %v2663
        %v2676 = vor.u32 %v2674, %v2675
        %v2677 = vshll.u32 920167782, %v2662
        %v2678 = vshrl.u32 1326507024, %v2663
        %v2679 = vor.u32 %v2677, %v2678
        %vm2680 = vcmp.lt.s32.totalorder %v2661, 1
        %vm2681 = vcmp.lt.s32.totalorder %v2661, 2
        %vm2682 = vcmp.lt.s32.totalorder %v2661, 3
        %vm2683 = vcmp.lt.s32.totalorder %v2661, 4
        %v2684 = vsel %vm2680, %v2664, %v2667
        %v2685 = vsel %vm2683, %v2673, 2102212464
        %v2686 = vsel %vm2682, %v2670, %v2685
        %v2687 = vsel %vm2681, %v2684, %v2686
        %v2688 = vsel %vm2680, %v2667, %v2670
        %v2689 = vsel %vm2683, %v2676, 920167782
        %v2690 = vsel %vm2682, %v2673, %v2689
        %v2691 = vsel %vm2681, %v2688, %v2690
        %v2692 = vsel %vm2680, %v2670, %v2673
        %v2693 = vsel %vm2683, %v2679, 1326507024
        %v2694 = vsel %vm2682, %v2676, %v2693
        %v2695 = vsel %vm2681, %v2692, %v2694
        %v2696 = vshll.u32 %v2656, 8
        %v2697 = vmul.u32.u64.compose %v2696, %v2695
        %v2698 = vextract.low.u32 %v2697
        %v2699 = vextract.high.u32 %v2697
        %v2700 = vmul.u32.u64.compose %v2696, %v2691
        %v2701 = vextract.low.u32 %v2700
        %v2702 = vextract.high.u32 %v2700
        %v2703 = vmul.u32 %v2696, %v2687
        %v2704 = vadd.s32 %v2699, %v2701
        %vm2705 = vc.u32 %v2699, %v2701
        %v2706 = vadd.s32 %v2702, 1
        %v2707 = vsel %vm2705, %v2706, %v2702
        %v2708 = vadd.s32 %v2703, %v2707
        %v2709 = vadd.s32 %v2708, 536870912
        %v2710 = vshrl.u32 %v2709, 30
        %v2711 = vshll.u32 %v2710, 30
        %v2712 = vsub.s32 %v2708, %v2711
        %vm2713 = vcmp.lt.s32.totalorder %v2712, 0
        %v2714 = vsub.s32 0, %v2712
        %v2715 = vsel %vm2713, %v2714, %v2712
        %v2716 = vclz %v2715
        %v2717 = vsub.s32 %v2716, 2
        %vm2718 = vcmp.gt.s32.totalorder 0, %v2717
        %v2719 = vsel %vm2718, 0, %v2717
        %v2720 = vsub.s32 32, %v2719
        %v2721 = vshll.u32 %v2712, %v2719
        %v2722 = vshrl.u32 %v2704, %v2720
        %v2723 = vor.u32 %v2721, %v2722
        %v2724 = vsub.s32 4294967266, %v2719
        %v2725 = vadd.s32 %v2724, 127
        %v2726 = vshll.u32 %v2725, 23
        %v2727 = vor.u32 4788187, %v2726
        %v2728 = vand.u32 2147483647, %v2727
        %v2730 = vcvt.s32.f32 %v2723
        %v2731 = vmul.f32 %v2730, %v2728
        %v2732 = vxor.u32 %v2731, 2147483648
        %v2733 = vsel %vm2650, %v2732, %v2731
        %v2734 = vsub.s32 4, %v2710
        %v2735 = vsel %vm2650, %v2734, %v2710
        %v2736 = vsel %vm2649, %v560, %v2733
        %v2737 = vsel %vm2649, 0, %v2735
        %v2738 = vcosq.f32.pop %v2736
        %v2739 = vsinq.f32.pop %v2736
        %vm2740 = vweird.f32 %v560
        %v2741 = vand.u32 %v2737, 3
        %vm2742 = vcmp.lt.s32.totalorder %v2741, 2
        %vm2743 = vcmp.eq.s32.totalorder %v2741, 0
        %v2744 = vxor.u32 %v2739, 2147483648
        %v2745 = vsel %vm2743, %v2738, %v2744
        %vm2746 = vcmp.eq.s32.totalorder %v2741, 2
        %v2747 = vxor.u32 %v2738, 2147483648
        %v2748 = vsel %vm2746, %v2747, %v2739
        %v2749 = vsel %vm2742, %v2745, %v2748
        %v2750 = vsel %vm2740, nan, %v2749
        %v2751 = vand.u32 2147483647, %v561
        %vm2752 = vcmp.le.f32.partialorder %v2751, 0.7853982
        %vm2753 = vcmp.lt.s32.totalorder %v561, 0
        %v2754 = vand.u32 %v561, 2139095040
        %v2755 = vshrl.u32 %v2754, 23
        %v2756 = vsub.s32 %v2755, 127
        %v2757 = vand.u32 2147483647, %v561
        %v2758 = vand.u32 %v2757, 8388607
        %v2759 = vor.u32 %v2758, 8388608
        %v2760 = vsub.s32 0, %v2759
        %v2761 = vadd.s32 %v2756, 1
        %vm2762 = vcmp.gt.s32.totalorder %v2761, 0
        %v2763 = vsel %vm2762, %v2761, 0
        %v2764 = vshrl.u32 %v2763, 5
        %v2765 = vand.u32 %v2763, 31
        %v2766 = vsub.s32 32, %v2765
        %v2767 = vshrl.u32 683565275, %v2766
        %v2768 = vshll.u32 683565275, %v2765
        %v2769 = vshrl.u32 2475754826, %v2766
        %v2770 = vor.u32 %v2768, %v2769
        %v2771 = vshll.u32 2475754826, %v2765
        %v2772 = vshrl.u32 2131351028, %v2766
        %v2773 = vor.u32 %v2771, %v2772
        %v2774 = vshll.u32 2131351028, %v2765
        %v2775 = vshrl.u32 2102212464, %v2766
        %v2776 = vor.u32 %v2774, %v2775
        %v2777 = vshll.u32 2102212464, %v2765
        %v2778 = vshrl.u32 920167782, %v2766
        %v2779 = vor.u32 %v2777, %v2778
        %v2780 = vshll.u32 920167782, %v2765
        %v2781 = vshrl.u32 1326507024, %v2766
        %v2782 = vor.u32 %v2780, %v2781
        %vm2783 = vcmp.lt.s32.totalorder %v2764, 1
        %vm2784 = vcmp.lt.s32.totalorder %v2764, 2
        %vm2785 = vcmp.lt.s32.totalorder %v2764, 3
        %vm2786 = vcmp.lt.s32.totalorder %v2764, 4
        %v2787 = vsel %vm2783, %v2767, %v2770
        %v2788 = vsel %vm2786, %v2776, 2102212464
        %v2789 = vsel %vm2785, %v2773, %v2788
        %v2790 = vsel %vm2784, %v2787, %v2789
        %v2791 = vsel %vm2783, %v2770, %v2773
        %v2792 = vsel %vm2786, %v2779, 920167782
        %v2793 = vsel %vm2785, %v2776, %v2792
        %v2794 = vsel %vm2784, %v2791, %v2793
        %v2795 = vsel %vm2783, %v2773, %v2776
        %v2796 = vsel %vm2786, %v2782, 1326507024
        %v2797 = vsel %vm2785, %v2779, %v2796
        %v2798 = vsel %vm2784, %v2795, %v2797
        %v2799 = vshll.u32 %v2759, 8
        %v2800 = vmul.u32.u64.compose %v2799, %v2798
        %v2801 = vextract.low.u32 %v2800
        %v2802 = vextract.high.u32 %v2800
        %v2803 = vmul.u32.u64.compose %v2799, %v2794
        %v2804 = vextract.low.u32 %v2803
        %v2805 = vextract.high.u32 %v2803
        %v2806 = vmul.u32 %v2799, %v2790
        %v2807 = vadd.s32 %v2802, %v2804
        %vm2808 = vc.u32 %v2802, %v2804
        %v2809 = vadd.s32 %v2805, 1
        %v2810 = vsel %vm2808, %v2809, %v2805
        %v2811 = vadd.s32 %v2806, %v2810
        %v2812 = vadd.s32 %v2811, 536870912
        %v2813 = vshrl.u32 %v2812, 30
        %v2814 = vshll.u32 %v2813, 30
        %v2815 = vsub.s32 %v2811, %v2814
        %vm2816 = vcmp.lt.s32.totalorder %v2815, 0
        %v2817 = vsub.s32 0, %v2815
        %v2818 = vsel %vm2816, %v2817, %v2815
        %v2819 = vclz %v2818
        %v2820 = vsub.s32 %v2819, 2
        %vm2821 = vcmp.gt.s32.totalorder 0, %v2820
        %v2822 = vsel %vm2821, 0, %v2820
        %v2823 = vsub.s32 32, %v2822
        %v2824 = vshll.u32 %v2815, %v2822
        %v2825 = vshrl.u32 %v2807, %v2823
        %v2826 = vor.u32 %v2824, %v2825
        %v2827 = vsub.s32 4294967266, %v2822
        %v2828 = vadd.s32 %v2827, 127
        %v2829 = vshll.u32 %v2828, 23
        %v2830 = vor.u32 4788187, %v2829
        %v2831 = vand.u32 2147483647, %v2830
        %v2833 = vcvt.s32.f32 %v2826
        %v2834 = vmul.f32 %v2833, %v2831
        %v2835 = vxor.u32 %v2834, 2147483648
        %v2836 = vsel %vm2753, %v2835, %v2834
        %v2837 = vsub.s32 4, %v2813
        %v2838 = vsel %vm2753, %v2837, %v2813
        %v2839 = vsel %vm2752, %v561, %v2836
        %v2840 = vsel %vm2752, 0, %v2838
        %v2841 = vcosq.f32.pop %v2839
        %v2842 = vsinq.f32.pop %v2839
        %vm2843 = vweird.f32 %v561
        %v2844 = vand.u32 %v2840, 3
        %vm2845 = vcmp.lt.s32.totalorder %v2844, 2
        %vm2846 = vcmp.eq.s32.totalorder %v2844, 0
        %v2847 = vxor.u32 %v2842, 2147483648
        %v2848 = vsel %vm2846, %v2841, %v2847
        %vm2849 = vcmp.eq.s32.totalorder %v2844, 2
        %v2850 = vxor.u32 %v2841, 2147483648
        %v2851 = vsel %vm2849, %v2850, %v2842
        %v2852 = vsel %vm2845, %v2848, %v2851
        %v2853 = vsel %vm2843, nan, %v2852
        %v2854 = vand.u32 2147483647, %v562
        %vm2855 = vcmp.le.f32.partialorder %v2854, 0.7853982
        %vm2856 = vcmp.lt.s32.totalorder %v562, 0
        %v2857 = vand.u32 %v562, 2139095040
        %v2858 = vshrl.u32 %v2857, 23
        %v2859 = vsub.s32 %v2858, 127
        %v2860 = vand.u32 2147483647, %v562
        %v2861 = vand.u32 %v2860, 8388607
        %v2862 = vor.u32 %v2861, 8388608
        %v2863 = vsub.s32 0, %v2862
        %v2864 = vadd.s32 %v2859, 1
        %vm2865 = vcmp.gt.s32.totalorder %v2864, 0
        %v2866 = vsel %vm2865, %v2864, 0
        %v2867 = vshrl.u32 %v2866, 5
        %v2868 = vand.u32 %v2866, 31
        %v2869 = vsub.s32 32, %v2868
        %v2870 = vshrl.u32 683565275, %v2869
        %v2871 = vshll.u32 683565275, %v2868
        %v2872 = vshrl.u32 2475754826, %v2869
        %v2873 = vor.u32 %v2871, %v2872
        %v2874 = vshll.u32 2475754826, %v2868
        %v2875 = vshrl.u32 2131351028, %v2869
        %v2876 = vor.u32 %v2874, %v2875
        %v2877 = vshll.u32 2131351028, %v2868
        %v2878 = vshrl.u32 2102212464, %v2869
        %v2879 = vor.u32 %v2877, %v2878
        %v2880 = vshll.u32 2102212464, %v2868
        %v2881 = vshrl.u32 920167782, %v2869
        %v2882 = vor.u32 %v2880, %v2881
        %v2883 = vshll.u32 920167782, %v2868
        %v2884 = vshrl.u32 1326507024, %v2869
        %v2885 = vor.u32 %v2883, %v2884
        %vm2886 = vcmp.lt.s32.totalorder %v2867, 1
        %vm2887 = vcmp.lt.s32.totalorder %v2867, 2
        %vm2888 = vcmp.lt.s32.totalorder %v2867, 3
        %vm2889 = vcmp.lt.s32.totalorder %v2867, 4
        %v2890 = vsel %vm2886, %v2870, %v2873
        %v2891 = vsel %vm2889, %v2879, 2102212464
        %v2892 = vsel %vm2888, %v2876, %v2891
        %v2893 = vsel %vm2887, %v2890, %v2892
        %v2894 = vsel %vm2886, %v2873, %v2876
        %v2895 = vsel %vm2889, %v2882, 920167782
        %v2896 = vsel %vm2888, %v2879, %v2895
        %v2897 = vsel %vm2887, %v2894, %v2896
        %v2898 = vsel %vm2886, %v2876, %v2879
        %v2899 = vsel %vm2889, %v2885, 1326507024
        %v2900 = vsel %vm2888, %v2882, %v2899
        %v2901 = vsel %vm2887, %v2898, %v2900
        %v2902 = vshll.u32 %v2862, 8
        %v2903 = vmul.u32.u64.compose %v2902, %v2901
        %v2904 = vextract.low.u32 %v2903
        %v2905 = vextract.high.u32 %v2903
        %v2906 = vmul.u32.u64.compose %v2902, %v2897
        %v2907 = vextract.low.u32 %v2906
        %v2908 = vextract.high.u32 %v2906
        %v2909 = vmul.u32 %v2902, %v2893
        %v2910 = vadd.s32 %v2905, %v2907
        %vm2911 = vc.u32 %v2905, %v2907
        %v2912 = vadd.s32 %v2908, 1
        %v2913 = vsel %vm2911, %v2912, %v2908
        %v2914 = vadd.s32 %v2909, %v2913
        %v2915 = vadd.s32 %v2914, 536870912
        %v2916 = vshrl.u32 %v2915, 30
        %v2917 = vshll.u32 %v2916, 30
        %v2918 = vsub.s32 %v2914, %v2917
        %vm2919 = vcmp.lt.s32.totalorder %v2918, 0
        %v2920 = vsub.s32 0, %v2918
        %v2921 = vsel %vm2919, %v2920, %v2918
        %v2922 = vclz %v2921
        %v2923 = vsub.s32 %v2922, 2
        %vm2924 = vcmp.gt.s32.totalorder 0, %v2923
        %v2925 = vsel %vm2924, 0, %v2923
        %v2926 = vsub.s32 32, %v2925
        %v2927 = vshll.u32 %v2918, %v2925
        %v2928 = vshrl.u32 %v2910, %v2926
        %v2929 = vor.u32 %v2927, %v2928
        %v2930 = vsub.s32 4294967266, %v2925
        %v2931 = vadd.s32 %v2930, 127
        %v2932 = vshll.u32 %v2931, 23
        %v2933 = vor.u32 4788187, %v2932
        %v2934 = vand.u32 2147483647, %v2933
        %v2936 = vcvt.s32.f32 %v2929
        %v2937 = vmul.f32 %v2936, %v2934
        %v2938 = vxor.u32 %v2937, 2147483648
        %v2939 = vsel %vm2856, %v2938, %v2937
        %v2940 = vsub.s32 4, %v2916
        %v2941 = vsel %vm2856, %v2940, %v2916
        %v2942 = vsel %vm2855, %v562, %v2939
        %v2943 = vsel %vm2855, 0, %v2941
        %v2944 = vcosq.f32.pop %v2942
        %v2945 = vsinq.f32.pop %v2942
        %vm2946 = vweird.f32 %v562
        %v2947 = vand.u32 %v2943, 3
        %vm2948 = vcmp.lt.s32.totalorder %v2947, 2
        %vm2949 = vcmp.eq.s32.totalorder %v2947, 0
        %v2950 = vxor.u32 %v2945, 2147483648
        %v2951 = vsel %vm2949, %v2944, %v2950
        %vm2952 = vcmp.eq.s32.totalorder %v2947, 2
        %v2953 = vxor.u32 %v2944, 2147483648
        %v2954 = vsel %vm2952, %v2953, %v2945
        %v2955 = vsel %vm2948, %v2951, %v2954
        %v2956 = vsel %vm2946, nan, %v2955
        %v2957 = vand.u32 2147483647, %v563
        %vm2958 = vcmp.le.f32.partialorder %v2957, 0.7853982
        %vm2959 = vcmp.lt.s32.totalorder %v563, 0
        %v2960 = vand.u32 %v563, 2139095040
        %v2961 = vshrl.u32 %v2960, 23
        %v2962 = vsub.s32 %v2961, 127
        %v2963 = vand.u32 2147483647, %v563
        %v2964 = vand.u32 %v2963, 8388607
        %v2965 = vor.u32 %v2964, 8388608
        %v2966 = vsub.s32 0, %v2965
        %v2967 = vadd.s32 %v2962, 1
        %vm2968 = vcmp.gt.s32.totalorder %v2967, 0
        %v2969 = vsel %vm2968, %v2967, 0
        %v2970 = vshrl.u32 %v2969, 5
        %v2971 = vand.u32 %v2969, 31
        %v2972 = vsub.s32 32, %v2971
        %v2973 = vshrl.u32 683565275, %v2972
        %v2974 = vshll.u32 683565275, %v2971
        %v2975 = vshrl.u32 2475754826, %v2972
        %v2976 = vor.u32 %v2974, %v2975
        %v2977 = vshll.u32 2475754826, %v2971
        %v2978 = vshrl.u32 2131351028, %v2972
        %v2979 = vor.u32 %v2977, %v2978
        %v2980 = vshll.u32 2131351028, %v2971
        %v2981 = vshrl.u32 2102212464, %v2972
        %v2982 = vor.u32 %v2980, %v2981
        %v2983 = vshll.u32 2102212464, %v2971
        %v2984 = vshrl.u32 920167782, %v2972
        %v2985 = vor.u32 %v2983, %v2984
        %v2986 = vshll.u32 920167782, %v2971
        %v2987 = vshrl.u32 1326507024, %v2972
        %v2988 = vor.u32 %v2986, %v2987
        %vm2989 = vcmp.lt.s32.totalorder %v2970, 1
        %vm2990 = vcmp.lt.s32.totalorder %v2970, 2
        %vm2991 = vcmp.lt.s32.totalorder %v2970, 3
        %vm2992 = vcmp.lt.s32.totalorder %v2970, 4
        %v2993 = vsel %vm2989, %v2973, %v2976
        %v2994 = vsel %vm2992, %v2982, 2102212464
        %v2995 = vsel %vm2991, %v2979, %v2994
        %v2996 = vsel %vm2990, %v2993, %v2995
        %v2997 = vsel %vm2989, %v2976, %v2979
        %v2998 = vsel %vm2992, %v2985, 920167782
        %v2999 = vsel %vm2991, %v2982, %v2998
        %v3000 = vsel %vm2990, %v2997, %v2999
        %v3001 = vsel %vm2989, %v2979, %v2982
        %v3002 = vsel %vm2992, %v2988, 1326507024
        %v3003 = vsel %vm2991, %v2985, %v3002
        %v3004 = vsel %vm2990, %v3001, %v3003
        %v3005 = vshll.u32 %v2965, 8
        %v3006 = vmul.u32.u64.compose %v3005, %v3004
        %v3007 = vextract.low.u32 %v3006
        %v3008 = vextract.high.u32 %v3006
        %v3009 = vmul.u32.u64.compose %v3005, %v3000
        %v3010 = vextract.low.u32 %v3009
        %v3011 = vextract.high.u32 %v3009
        %v3012 = vmul.u32 %v3005, %v2996
        %v3013 = vadd.s32 %v3008, %v3010
        %vm3014 = vc.u32 %v3008, %v3010
        %v3015 = vadd.s32 %v3011, 1
        %v3016 = vsel %vm3014, %v3015, %v3011
        %v3017 = vadd.s32 %v3012, %v3016
        %v3018 = vadd.s32 %v3017, 536870912
        %v3019 = vshrl.u32 %v3018, 30
        %v3020 = vshll.u32 %v3019, 30
        %v3021 = vsub.s32 %v3017, %v3020
        %vm3022 = vcmp.lt.s32.totalorder %v3021, 0
        %v3023 = vsub.s32 0, %v3021
        %v3024 = vsel %vm3022, %v3023, %v3021
        %v3025 = vclz %v3024
        %v3026 = vsub.s32 %v3025, 2
        %vm3027 = vcmp.gt.s32.totalorder 0, %v3026
        %v3028 = vsel %vm3027, 0, %v3026
        %v3029 = vsub.s32 32, %v3028
        %v3030 = vshll.u32 %v3021, %v3028
        %v3031 = vshrl.u32 %v3013, %v3029
        %v3032 = vor.u32 %v3030, %v3031
        %v3033 = vsub.s32 4294967266, %v3028
        %v3034 = vadd.s32 %v3033, 127
        %v3035 = vshll.u32 %v3034, 23
        %v3036 = vor.u32 4788187, %v3035
        %v3037 = vand.u32 2147483647, %v3036
        %v3039 = vcvt.s32.f32 %v3032
        %v3040 = vmul.f32 %v3039, %v3037
        %v3041 = vxor.u32 %v3040, 2147483648
        %v3042 = vsel %vm2959, %v3041, %v3040
        %v3043 = vsub.s32 4, %v3019
        %v3044 = vsel %vm2959, %v3043, %v3019
        %v3045 = vsel %vm2958, %v563, %v3042
        %v3046 = vsel %vm2958, 0, %v3044
        %v3047 = vcosq.f32.pop %v3045
        %v3048 = vsinq.f32.pop %v3045
        %vm3049 = vweird.f32 %v563
        %v3050 = vand.u32 %v3046, 3
        %vm3051 = vcmp.lt.s32.totalorder %v3050, 2
        %vm3052 = vcmp.eq.s32.totalorder %v3050, 0
        %v3053 = vxor.u32 %v3048, 2147483648
        %v3054 = vsel %vm3052, %v3047, %v3053
        %vm3055 = vcmp.eq.s32.totalorder %v3050, 2
        %v3056 = vxor.u32 %v3047, 2147483648
        %v3057 = vsel %vm3055, %v3056, %v3048
        %v3058 = vsel %vm3051, %v3054, %v3057
        %v3059 = vsel %vm3049, nan, %v3058
        %v3060 = vand.u32 2147483647, %v564
        %vm3061 = vcmp.le.f32.partialorder %v3060, 0.7853982
        %vm3062 = vcmp.lt.s32.totalorder %v564, 0
        %v3063 = vand.u32 %v564, 2139095040
        %v3064 = vshrl.u32 %v3063, 23
        %v3065 = vsub.s32 %v3064, 127
        %v3066 = vand.u32 2147483647, %v564
        %v3067 = vand.u32 %v3066, 8388607
        %v3068 = vor.u32 %v3067, 8388608
        %v3069 = vsub.s32 0, %v3068
        %v3070 = vadd.s32 %v3065, 1
        %vm3071 = vcmp.gt.s32.totalorder %v3070, 0
        %v3072 = vsel %vm3071, %v3070, 0
        %v3073 = vshrl.u32 %v3072, 5
        %v3074 = vand.u32 %v3072, 31
        %v3075 = vsub.s32 32, %v3074
        %v3076 = vshrl.u32 683565275, %v3075
        %v3077 = vshll.u32 683565275, %v3074
        %v3078 = vshrl.u32 2475754826, %v3075
        %v3079 = vor.u32 %v3077, %v3078
        %v3080 = vshll.u32 2475754826, %v3074
        %v3081 = vshrl.u32 2131351028, %v3075
        %v3082 = vor.u32 %v3080, %v3081
        %v3083 = vshll.u32 2131351028, %v3074
        %v3084 = vshrl.u32 2102212464, %v3075
        %v3085 = vor.u32 %v3083, %v3084
        %v3086 = vshll.u32 2102212464, %v3074
        %v3087 = vshrl.u32 920167782, %v3075
        %v3088 = vor.u32 %v3086, %v3087
        %v3089 = vshll.u32 920167782, %v3074
        %v3090 = vshrl.u32 1326507024, %v3075
        %v3091 = vor.u32 %v3089, %v3090
        %vm3092 = vcmp.lt.s32.totalorder %v3073, 1
        %vm3093 = vcmp.lt.s32.totalorder %v3073, 2
        %vm3094 = vcmp.lt.s32.totalorder %v3073, 3
        %vm3095 = vcmp.lt.s32.totalorder %v3073, 4
        %v3096 = vsel %vm3092, %v3076, %v3079
        %v3097 = vsel %vm3095, %v3085, 2102212464
        %v3098 = vsel %vm3094, %v3082, %v3097
        %v3099 = vsel %vm3093, %v3096, %v3098
        %v3100 = vsel %vm3092, %v3079, %v3082
        %v3101 = vsel %vm3095, %v3088, 920167782
        %v3102 = vsel %vm3094, %v3085, %v3101
        %v3103 = vsel %vm3093, %v3100, %v3102
        %v3104 = vsel %vm3092, %v3082, %v3085
        %v3105 = vsel %vm3095, %v3091, 1326507024
        %v3106 = vsel %vm3094, %v3088, %v3105
        %v3107 = vsel %vm3093, %v3104, %v3106
        %v3108 = vshll.u32 %v3068, 8
        %v3109 = vmul.u32.u64.compose %v3108, %v3107
        %v3110 = vextract.low.u32 %v3109
        %v3111 = vextract.high.u32 %v3109
        %v3112 = vmul.u32.u64.compose %v3108, %v3103
        %v3113 = vextract.low.u32 %v3112
        %v3114 = vextract.high.u32 %v3112
        %v3115 = vmul.u32 %v3108, %v3099
        %v3116 = vadd.s32 %v3111, %v3113
        %vm3117 = vc.u32 %v3111, %v3113
        %v3118 = vadd.s32 %v3114, 1
        %v3119 = vsel %vm3117, %v3118, %v3114
        %v3120 = vadd.s32 %v3115, %v3119
        %v3121 = vadd.s32 %v3120, 536870912
        %v3122 = vshrl.u32 %v3121, 30
        %v3123 = vshll.u32 %v3122, 30
        %v3124 = vsub.s32 %v3120, %v3123
        %vm3125 = vcmp.lt.s32.totalorder %v3124, 0
        %v3126 = vsub.s32 0, %v3124
        %v3127 = vsel %vm3125, %v3126, %v3124
        %v3128 = vclz %v3127
        %v3129 = vsub.s32 %v3128, 2
        %vm3130 = vcmp.gt.s32.totalorder 0, %v3129
        %v3131 = vsel %vm3130, 0, %v3129
        %v3132 = vsub.s32 32, %v3131
        %v3133 = vshll.u32 %v3124, %v3131
        %v3134 = vshrl.u32 %v3116, %v3132
        %v3135 = vor.u32 %v3133, %v3134
        %v3136 = vsub.s32 4294967266, %v3131
        %v3137 = vadd.s32 %v3136, 127
        %v3138 = vshll.u32 %v3137, 23
        %v3139 = vor.u32 4788187, %v3138
        %v3140 = vand.u32 2147483647, %v3139
        %v3142 = vcvt.s32.f32 %v3135
        %v3143 = vmul.f32 %v3142, %v3140
        %v3144 = vxor.u32 %v3143, 2147483648
        %v3145 = vsel %vm3062, %v3144, %v3143
        %v3146 = vsub.s32 4, %v3122
        %v3147 = vsel %vm3062, %v3146, %v3122
        %v3148 = vsel %vm3061, %v564, %v3145
        %v3149 = vsel %vm3061, 0, %v3147
        %v3150 = vcosq.f32.pop %v3148
        %v3151 = vsinq.f32.pop %v3148
        %vm3152 = vweird.f32 %v564
        %v3153 = vand.u32 %v3149, 3
        %vm3154 = vcmp.lt.s32.totalorder %v3153, 2
        %vm3155 = vcmp.eq.s32.totalorder %v3153, 0
        %v3156 = vxor.u32 %v3151, 2147483648
        %v3157 = vsel %vm3155, %v3150, %v3156
        %vm3158 = vcmp.eq.s32.totalorder %v3153, 2
        %v3159 = vxor.u32 %v3150, 2147483648
        %v3160 = vsel %vm3158, %v3159, %v3151
        %v3161 = vsel %vm3154, %v3157, %v3160
        %v3162 = vsel %vm3152, nan, %v3161
        %v3163 = vand.u32 2147483647, %v565
        %vm3164 = vcmp.le.f32.partialorder %v3163, 0.7853982
        %vm3165 = vcmp.lt.s32.totalorder %v565, 0
        %v3166 = vand.u32 %v565, 2139095040
        %v3167 = vshrl.u32 %v3166, 23
        %v3168 = vsub.s32 %v3167, 127
        %v3169 = vand.u32 2147483647, %v565
        %v3170 = vand.u32 %v3169, 8388607
        %v3171 = vor.u32 %v3170, 8388608
        %v3172 = vsub.s32 0, %v3171
        %v3173 = vadd.s32 %v3168, 1
        %vm3174 = vcmp.gt.s32.totalorder %v3173, 0
        %v3175 = vsel %vm3174, %v3173, 0
        %v3176 = vshrl.u32 %v3175, 5
        %v3177 = vand.u32 %v3175, 31
        %v3178 = vsub.s32 32, %v3177
        %v3179 = vshrl.u32 683565275, %v3178
        %v3180 = vshll.u32 683565275, %v3177
        %v3181 = vshrl.u32 2475754826, %v3178
        %v3182 = vor.u32 %v3180, %v3181
        %v3183 = vshll.u32 2475754826, %v3177
        %v3184 = vshrl.u32 2131351028, %v3178
        %v3185 = vor.u32 %v3183, %v3184
        %v3186 = vshll.u32 2131351028, %v3177
        %v3187 = vshrl.u32 2102212464, %v3178
        %v3188 = vor.u32 %v3186, %v3187
        %v3189 = vshll.u32 2102212464, %v3177
        %v3190 = vshrl.u32 920167782, %v3178
        %v3191 = vor.u32 %v3189, %v3190
        %v3192 = vshll.u32 920167782, %v3177
        %v3193 = vshrl.u32 1326507024, %v3178
        %v3194 = vor.u32 %v3192, %v3193
        %vm3195 = vcmp.lt.s32.totalorder %v3176, 1
        %vm3196 = vcmp.lt.s32.totalorder %v3176, 2
        %vm3197 = vcmp.lt.s32.totalorder %v3176, 3
        %vm3198 = vcmp.lt.s32.totalorder %v3176, 4
        %v3199 = vsel %vm3195, %v3179, %v3182
        %v3200 = vsel %vm3198, %v3188, 2102212464
        %v3201 = vsel %vm3197, %v3185, %v3200
        %v3202 = vsel %vm3196, %v3199, %v3201
        %v3203 = vsel %vm3195, %v3182, %v3185
        %v3204 = vsel %vm3198, %v3191, 920167782
        %v3205 = vsel %vm3197, %v3188, %v3204
        %v3206 = vsel %vm3196, %v3203, %v3205
        %v3207 = vsel %vm3195, %v3185, %v3188
        %v3208 = vsel %vm3198, %v3194, 1326507024
        %v3209 = vsel %vm3197, %v3191, %v3208
        %v3210 = vsel %vm3196, %v3207, %v3209
        %v3211 = vshll.u32 %v3171, 8
        %v3212 = vmul.u32.u64.compose %v3211, %v3210
        %v3213 = vextract.low.u32 %v3212
        %v3214 = vextract.high.u32 %v3212
        %v3215 = vmul.u32.u64.compose %v3211, %v3206
        %v3216 = vextract.low.u32 %v3215
        %v3217 = vextract.high.u32 %v3215
        %v3218 = vmul.u32 %v3211, %v3202
        %v3219 = vadd.s32 %v3214, %v3216
        %vm3220 = vc.u32 %v3214, %v3216
        %v3221 = vadd.s32 %v3217, 1
        %v3222 = vsel %vm3220, %v3221, %v3217
        %v3223 = vadd.s32 %v3218, %v3222
        %v3224 = vadd.s32 %v3223, 536870912
        %v3225 = vshrl.u32 %v3224, 30
        %v3226 = vshll.u32 %v3225, 30
        %v3227 = vsub.s32 %v3223, %v3226
        %vm3228 = vcmp.lt.s32.totalorder %v3227, 0
        %v3229 = vsub.s32 0, %v3227
        %v3230 = vsel %vm3228, %v3229, %v3227
        %v3231 = vclz %v3230
        %v3232 = vsub.s32 %v3231, 2
        %vm3233 = vcmp.gt.s32.totalorder 0, %v3232
        %v3234 = vsel %vm3233, 0, %v3232
        %v3235 = vsub.s32 32, %v3234
        %v3236 = vshll.u32 %v3227, %v3234
        %v3237 = vshrl.u32 %v3219, %v3235
        %v3238 = vor.u32 %v3236, %v3237
        %v3239 = vsub.s32 4294967266, %v3234
        %v3240 = vadd.s32 %v3239, 127
        %v3241 = vshll.u32 %v3240, 23
        %v3242 = vor.u32 4788187, %v3241
        %v3243 = vand.u32 2147483647, %v3242
        %v3245 = vcvt.s32.f32 %v3238
        %v3246 = vmul.f32 %v3245, %v3243
        %v3247 = vxor.u32 %v3246, 2147483648
        %v3248 = vsel %vm3165, %v3247, %v3246
        %v3249 = vsub.s32 4, %v3225
        %v3250 = vsel %vm3165, %v3249, %v3225
        %v3251 = vsel %vm3164, %v565, %v3248
        %v3252 = vsel %vm3164, 0, %v3250
        %v3253 = vcosq.f32.pop %v3251
        %v3254 = vsinq.f32.pop %v3251
        %vm3255 = vweird.f32 %v565
        %v3256 = vand.u32 %v3252, 3
        %vm3257 = vcmp.lt.s32.totalorder %v3256, 2
        %vm3258 = vcmp.eq.s32.totalorder %v3256, 0
        %v3259 = vxor.u32 %v3254, 2147483648
        %v3260 = vsel %vm3258, %v3253, %v3259
        %vm3261 = vcmp.eq.s32.totalorder %v3256, 2
        %v3262 = vxor.u32 %v3253, 2147483648
        %v3263 = vsel %vm3261, %v3262, %v3254
        %v3264 = vsel %vm3257, %v3260, %v3263
        %v3265 = vsel %vm3255, nan, %v3264
        %v3266 = vand.u32 2147483647, %v566
        %vm3267 = vcmp.le.f32.partialorder %v3266, 0.7853982
        %vm3268 = vcmp.lt.s32.totalorder %v566, 0
        %v3269 = vand.u32 %v566, 2139095040
        %v3270 = vshrl.u32 %v3269, 23
        %v3271 = vsub.s32 %v3270, 127
        %v3272 = vand.u32 2147483647, %v566
        %v3273 = vand.u32 %v3272, 8388607
        %v3274 = vor.u32 %v3273, 8388608
        %v3275 = vsub.s32 0, %v3274
        %v3276 = vadd.s32 %v3271, 1
        %vm3277 = vcmp.gt.s32.totalorder %v3276, 0
        %v3278 = vsel %vm3277, %v3276, 0
        %v3279 = vshrl.u32 %v3278, 5
        %v3280 = vand.u32 %v3278, 31
        %v3281 = vsub.s32 32, %v3280
        %v3282 = vshrl.u32 683565275, %v3281
        %v3283 = vshll.u32 683565275, %v3280
        %v3284 = vshrl.u32 2475754826, %v3281
        %v3285 = vor.u32 %v3283, %v3284
        %v3286 = vshll.u32 2475754826, %v3280
        %v3287 = vshrl.u32 2131351028, %v3281
        %v3288 = vor.u32 %v3286, %v3287
        %v3289 = vshll.u32 2131351028, %v3280
        %v3290 = vshrl.u32 2102212464, %v3281
        %v3291 = vor.u32 %v3289, %v3290
        %v3292 = vshll.u32 2102212464, %v3280
        %v3293 = vshrl.u32 920167782, %v3281
        %v3294 = vor.u32 %v3292, %v3293
        %v3295 = vshll.u32 920167782, %v3280
        %v3296 = vshrl.u32 1326507024, %v3281
        %v3297 = vor.u32 %v3295, %v3296
        %vm3298 = vcmp.lt.s32.totalorder %v3279, 1
        %vm3299 = vcmp.lt.s32.totalorder %v3279, 2
        %vm3300 = vcmp.lt.s32.totalorder %v3279, 3
        %vm3301 = vcmp.lt.s32.totalorder %v3279, 4
        %v3302 = vsel %vm3298, %v3282, %v3285
        %v3303 = vsel %vm3301, %v3291, 2102212464
        %v3304 = vsel %vm3300, %v3288, %v3303
        %v3305 = vsel %vm3299, %v3302, %v3304
        %v3306 = vsel %vm3298, %v3285, %v3288
        %v3307 = vsel %vm3301, %v3294, 920167782
        %v3308 = vsel %vm3300, %v3291, %v3307
        %v3309 = vsel %vm3299, %v3306, %v3308
        %v3310 = vsel %vm3298, %v3288, %v3291
        %v3311 = vsel %vm3301, %v3297, 1326507024
        %v3312 = vsel %vm3300, %v3294, %v3311
        %v3313 = vsel %vm3299, %v3310, %v3312
        %v3314 = vshll.u32 %v3274, 8
        %v3315 = vmul.u32.u64.compose %v3314, %v3313
        %v3316 = vextract.low.u32 %v3315
        %v3317 = vextract.high.u32 %v3315
        %v3318 = vmul.u32.u64.compose %v3314, %v3309
        %v3319 = vextract.low.u32 %v3318
        %v3320 = vextract.high.u32 %v3318
        %v3321 = vmul.u32 %v3314, %v3305
        %v3322 = vadd.s32 %v3317, %v3319
        %vm3323 = vc.u32 %v3317, %v3319
        %v3324 = vadd.s32 %v3320, 1
        %v3325 = vsel %vm3323, %v3324, %v3320
        %v3326 = vadd.s32 %v3321, %v3325
        %v3327 = vadd.s32 %v3326, 536870912
        %v3328 = vshrl.u32 %v3327, 30
        %v3329 = vshll.u32 %v3328, 30
        %v3330 = vsub.s32 %v3326, %v3329
        %vm3331 = vcmp.lt.s32.totalorder %v3330, 0
        %v3332 = vsub.s32 0, %v3330
        %v3333 = vsel %vm3331, %v3332, %v3330
        %v3334 = vclz %v3333
        %v3335 = vsub.s32 %v3334, 2
        %vm3336 = vcmp.gt.s32.totalorder 0, %v3335
        %v3337 = vsel %vm3336, 0, %v3335
        %v3338 = vsub.s32 32, %v3337
        %v3339 = vshll.u32 %v3330, %v3337
        %v3340 = vshrl.u32 %v3322, %v3338
        %v3341 = vor.u32 %v3339, %v3340
        %v3342 = vsub.s32 4294967266, %v3337
        %v3343 = vadd.s32 %v3342, 127
        %v3344 = vshll.u32 %v3343, 23
        %v3345 = vor.u32 4788187, %v3344
        %v3346 = vand.u32 2147483647, %v3345
        %v3348 = vcvt.s32.f32 %v3341
        %v3349 = vmul.f32 %v3348, %v3346
        %v3350 = vxor.u32 %v3349, 2147483648
        %v3351 = vsel %vm3268, %v3350, %v3349
        %v3352 = vsub.s32 4, %v3328
        %v3353 = vsel %vm3268, %v3352, %v3328
        %v3354 = vsel %vm3267, %v566, %v3351
        %v3355 = vsel %vm3267, 0, %v3353
        %v3356 = vcosq.f32.pop %v3354
        %v3357 = vsinq.f32.pop %v3354
        %vm3358 = vweird.f32 %v566
        %v3359 = vand.u32 %v3355, 3
        %vm3360 = vcmp.lt.s32.totalorder %v3359, 2
        %vm3361 = vcmp.eq.s32.totalorder %v3359, 0
        %v3362 = vxor.u32 %v3357, 2147483648
        %v3363 = vsel %vm3361, %v3356, %v3362
        %vm3364 = vcmp.eq.s32.totalorder %v3359, 2
        %v3365 = vxor.u32 %v3356, 2147483648
        %v3366 = vsel %vm3364, %v3365, %v3357
        %v3367 = vsel %vm3360, %v3363, %v3366
        %v3368 = vsel %vm3358, nan, %v3367
        %v3369 = vand.u32 2147483647, %v567
        %vm3370 = vcmp.le.f32.partialorder %v3369, 0.7853982
        %vm3371 = vcmp.lt.s32.totalorder %v567, 0
        %v3372 = vand.u32 %v567, 2139095040
        %v3373 = vshrl.u32 %v3372, 23
        %v3374 = vsub.s32 %v3373, 127
        %v3375 = vand.u32 2147483647, %v567
        %v3376 = vand.u32 %v3375, 8388607
        %v3377 = vor.u32 %v3376, 8388608
        %v3378 = vsub.s32 0, %v3377
        %v3379 = vadd.s32 %v3374, 1
        %vm3380 = vcmp.gt.s32.totalorder %v3379, 0
        %v3381 = vsel %vm3380, %v3379, 0
        %v3382 = vshrl.u32 %v3381, 5
        %v3383 = vand.u32 %v3381, 31
        %v3384 = vsub.s32 32, %v3383
        %v3385 = vshrl.u32 683565275, %v3384
        %v3386 = vshll.u32 683565275, %v3383
        %v3387 = vshrl.u32 2475754826, %v3384
        %v3388 = vor.u32 %v3386, %v3387
        %v3389 = vshll.u32 2475754826, %v3383
        %v3390 = vshrl.u32 2131351028, %v3384
        %v3391 = vor.u32 %v3389, %v3390
        %v3392 = vshll.u32 2131351028, %v3383
        %v3393 = vshrl.u32 2102212464, %v3384
        %v3394 = vor.u32 %v3392, %v3393
        %v3395 = vshll.u32 2102212464, %v3383
        %v3396 = vshrl.u32 920167782, %v3384
        %v3397 = vor.u32 %v3395, %v3396
        %v3398 = vshll.u32 920167782, %v3383
        %v3399 = vshrl.u32 1326507024, %v3384
        %v3400 = vor.u32 %v3398, %v3399
        %vm3401 = vcmp.lt.s32.totalorder %v3382, 1
        %vm3402 = vcmp.lt.s32.totalorder %v3382, 2
        %vm3403 = vcmp.lt.s32.totalorder %v3382, 3
        %vm3404 = vcmp.lt.s32.totalorder %v3382, 4
        %v3405 = vsel %vm3401, %v3385, %v3388
        %v3406 = vsel %vm3404, %v3394, 2102212464
        %v3407 = vsel %vm3403, %v3391, %v3406
        %v3408 = vsel %vm3402, %v3405, %v3407
        %v3409 = vsel %vm3401, %v3388, %v3391
        %v3410 = vsel %vm3404, %v3397, 920167782
        %v3411 = vsel %vm3403, %v3394, %v3410
        %v3412 = vsel %vm3402, %v3409, %v3411
        %v3413 = vsel %vm3401, %v3391, %v3394
        %v3414 = vsel %vm3404, %v3400, 1326507024
        %v3415 = vsel %vm3403, %v3397, %v3414
        %v3416 = vsel %vm3402, %v3413, %v3415
        %v3417 = vshll.u32 %v3377, 8
        %v3418 = vmul.u32.u64.compose %v3417, %v3416
        %v3419 = vextract.low.u32 %v3418
        %v3420 = vextract.high.u32 %v3418
        %v3421 = vmul.u32.u64.compose %v3417, %v3412
        %v3422 = vextract.low.u32 %v3421
        %v3423 = vextract.high.u32 %v3421
        %v3424 = vmul.u32 %v3417, %v3408
        %v3425 = vadd.s32 %v3420, %v3422
        %vm3426 = vc.u32 %v3420, %v3422
        %v3427 = vadd.s32 %v3423, 1
        %v3428 = vsel %vm3426, %v3427, %v3423
        %v3429 = vadd.s32 %v3424, %v3428
        %v3430 = vadd.s32 %v3429, 536870912
        %v3431 = vshrl.u32 %v3430, 30
        %v3432 = vshll.u32 %v3431, 30
        %v3433 = vsub.s32 %v3429, %v3432
        %vm3434 = vcmp.lt.s32.totalorder %v3433, 0
        %v3435 = vsub.s32 0, %v3433
        %v3436 = vsel %vm3434, %v3435, %v3433
        %v3437 = vclz %v3436
        %v3438 = vsub.s32 %v3437, 2
        %vm3439 = vcmp.gt.s32.totalorder 0, %v3438
        %v3440 = vsel %vm3439, 0, %v3438
        %v3441 = vsub.s32 32, %v3440
        %v3442 = vshll.u32 %v3433, %v3440
        %v3443 = vshrl.u32 %v3425, %v3441
        %v3444 = vor.u32 %v3442, %v3443
        %v3445 = vsub.s32 4294967266, %v3440
        %v3446 = vadd.s32 %v3445, 127
        %v3447 = vshll.u32 %v3446, 23
        %v3448 = vor.u32 4788187, %v3447
        %v3449 = vand.u32 2147483647, %v3448
        %v3451 = vcvt.s32.f32 %v3444
        %v3452 = vmul.f32 %v3451, %v3449
        %v3453 = vxor.u32 %v3452, 2147483648
        %v3454 = vsel %vm3371, %v3453, %v3452
        %v3455 = vsub.s32 4, %v3431
        %v3456 = vsel %vm3371, %v3455, %v3431
        %v3457 = vsel %vm3370, %v567, %v3454
        %v3458 = vsel %vm3370, 0, %v3456
        %v3459 = vcosq.f32.pop %v3457
        %v3460 = vsinq.f32.pop %v3457
        %vm3461 = vweird.f32 %v567
        %v3462 = vand.u32 %v3458, 3
        %vm3463 = vcmp.lt.s32.totalorder %v3462, 2
        %vm3464 = vcmp.eq.s32.totalorder %v3462, 0
        %v3465 = vxor.u32 %v3460, 2147483648
        %v3466 = vsel %vm3464, %v3459, %v3465
        %vm3467 = vcmp.eq.s32.totalorder %v3462, 2
        %v3468 = vxor.u32 %v3459, 2147483648
        %v3469 = vsel %vm3467, %v3468, %v3460
        %v3470 = vsel %vm3463, %v3466, %v3469
        %v3471 = vsel %vm3461, nan, %v3470
        %v3472 = vand.u32 2147483647, %v568
        %vm3473 = vcmp.le.f32.partialorder %v3472, 0.7853982
        %vm3474 = vcmp.lt.s32.totalorder %v568, 0
        %v3475 = vand.u32 %v568, 2139095040
        %v3476 = vshrl.u32 %v3475, 23
        %v3477 = vsub.s32 %v3476, 127
        %v3478 = vand.u32 2147483647, %v568
        %v3479 = vand.u32 %v3478, 8388607
        %v3480 = vor.u32 %v3479, 8388608
        %v3481 = vsub.s32 0, %v3480
        %v3482 = vadd.s32 %v3477, 1
        %vm3483 = vcmp.gt.s32.totalorder %v3482, 0
        %v3484 = vsel %vm3483, %v3482, 0
        %v3485 = vshrl.u32 %v3484, 5
        %v3486 = vand.u32 %v3484, 31
        %v3487 = vsub.s32 32, %v3486
        %v3488 = vshrl.u32 683565275, %v3487
        %v3489 = vshll.u32 683565275, %v3486
        %v3490 = vshrl.u32 2475754826, %v3487
        %v3491 = vor.u32 %v3489, %v3490
        %v3492 = vshll.u32 2475754826, %v3486
        %v3493 = vshrl.u32 2131351028, %v3487
        %v3494 = vor.u32 %v3492, %v3493
        %v3495 = vshll.u32 2131351028, %v3486
        %v3496 = vshrl.u32 2102212464, %v3487
        %v3497 = vor.u32 %v3495, %v3496
        %v3498 = vshll.u32 2102212464, %v3486
        %v3499 = vshrl.u32 920167782, %v3487
        %v3500 = vor.u32 %v3498, %v3499
        %v3501 = vshll.u32 920167782, %v3486
        %v3502 = vshrl.u32 1326507024, %v3487
        %v3503 = vor.u32 %v3501, %v3502
        %vm3504 = vcmp.lt.s32.totalorder %v3485, 1
        %vm3505 = vcmp.lt.s32.totalorder %v3485, 2
        %vm3506 = vcmp.lt.s32.totalorder %v3485, 3
        %vm3507 = vcmp.lt.s32.totalorder %v3485, 4
        %v3508 = vsel %vm3504, %v3488, %v3491
        %v3509 = vsel %vm3507, %v3497, 2102212464
        %v3510 = vsel %vm3506, %v3494, %v3509
        %v3511 = vsel %vm3505, %v3508, %v3510
        %v3512 = vsel %vm3504, %v3491, %v3494
        %v3513 = vsel %vm3507, %v3500, 920167782
        %v3514 = vsel %vm3506, %v3497, %v3513
        %v3515 = vsel %vm3505, %v3512, %v3514
        %v3516 = vsel %vm3504, %v3494, %v3497
        %v3517 = vsel %vm3507, %v3503, 1326507024
        %v3518 = vsel %vm3506, %v3500, %v3517
        %v3519 = vsel %vm3505, %v3516, %v3518
        %v3520 = vshll.u32 %v3480, 8
        %v3521 = vmul.u32.u64.compose %v3520, %v3519
        %v3522 = vextract.low.u32 %v3521
        %v3523 = vextract.high.u32 %v3521
        %v3524 = vmul.u32.u64.compose %v3520, %v3515
        %v3525 = vextract.low.u32 %v3524
        %v3526 = vextract.high.u32 %v3524
        %v3527 = vmul.u32 %v3520, %v3511
        %v3528 = vadd.s32 %v3523, %v3525
        %vm3529 = vc.u32 %v3523, %v3525
        %v3530 = vadd.s32 %v3526, 1
        %v3531 = vsel %vm3529, %v3530, %v3526
        %v3532 = vadd.s32 %v3527, %v3531
        %v3533 = vadd.s32 %v3532, 536870912
        %v3534 = vshrl.u32 %v3533, 30
        %v3535 = vshll.u32 %v3534, 30
        %v3536 = vsub.s32 %v3532, %v3535
        %vm3537 = vcmp.lt.s32.totalorder %v3536, 0
        %v3538 = vsub.s32 0, %v3536
        %v3539 = vsel %vm3537, %v3538, %v3536
        %v3540 = vclz %v3539
        %v3541 = vsub.s32 %v3540, 2
        %vm3542 = vcmp.gt.s32.totalorder 0, %v3541
        %v3543 = vsel %vm3542, 0, %v3541
        %v3544 = vsub.s32 32, %v3543
        %v3545 = vshll.u32 %v3536, %v3543
        %v3546 = vshrl.u32 %v3528, %v3544
        %v3547 = vor.u32 %v3545, %v3546
        %v3548 = vsub.s32 4294967266, %v3543
        %v3549 = vadd.s32 %v3548, 127
        %v3550 = vshll.u32 %v3549, 23
        %v3551 = vor.u32 4788187, %v3550
        %v3552 = vand.u32 2147483647, %v3551
        %v3554 = vcvt.s32.f32 %v3547
        %v3555 = vmul.f32 %v3554, %v3552
        %v3556 = vxor.u32 %v3555, 2147483648
        %v3557 = vsel %vm3474, %v3556, %v3555
        %v3558 = vsub.s32 4, %v3534
        %v3559 = vsel %vm3474, %v3558, %v3534
        %v3560 = vsel %vm3473, %v568, %v3557
        %v3561 = vsel %vm3473, 0, %v3559
        %v3562 = vcosq.f32.pop %v3560
        %v3563 = vsinq.f32.pop %v3560
        %vm3564 = vweird.f32 %v568
        %v3565 = vand.u32 %v3561, 3
        %vm3566 = vcmp.lt.s32.totalorder %v3565, 2
        %vm3567 = vcmp.eq.s32.totalorder %v3565, 0
        %v3568 = vxor.u32 %v3563, 2147483648
        %v3569 = vsel %vm3567, %v3562, %v3568
        %vm3570 = vcmp.eq.s32.totalorder %v3565, 2
        %v3571 = vxor.u32 %v3562, 2147483648
        %v3572 = vsel %vm3570, %v3571, %v3563
        %v3573 = vsel %vm3566, %v3569, %v3572
        %v3574 = vsel %vm3564, nan, %v3573
        %v3575 = vand.u32 2147483647, %v569
        %vm3576 = vcmp.le.f32.partialorder %v3575, 0.7853982
        %vm3577 = vcmp.lt.s32.totalorder %v569, 0
        %v3578 = vand.u32 %v569, 2139095040
        %v3579 = vshrl.u32 %v3578, 23
        %v3580 = vsub.s32 %v3579, 127
        %v3581 = vand.u32 2147483647, %v569
        %v3582 = vand.u32 %v3581, 8388607
        %v3583 = vor.u32 %v3582, 8388608
        %v3584 = vsub.s32 0, %v3583
        %v3585 = vadd.s32 %v3580, 1
        %vm3586 = vcmp.gt.s32.totalorder %v3585, 0
        %v3587 = vsel %vm3586, %v3585, 0
        %v3588 = vshrl.u32 %v3587, 5
        %v3589 = vand.u32 %v3587, 31
        %v3590 = vsub.s32 32, %v3589
        %v3591 = vshrl.u32 683565275, %v3590
        %v3592 = vshll.u32 683565275, %v3589
        %v3593 = vshrl.u32 2475754826, %v3590
        %v3594 = vor.u32 %v3592, %v3593
        %v3595 = vshll.u32 2475754826, %v3589
        %v3596 = vshrl.u32 2131351028, %v3590
        %v3597 = vor.u32 %v3595, %v3596
        %v3598 = vshll.u32 2131351028, %v3589
        %v3599 = vshrl.u32 2102212464, %v3590
        %v3600 = vor.u32 %v3598, %v3599
        %v3601 = vshll.u32 2102212464, %v3589
        %v3602 = vshrl.u32 920167782, %v3590
        %v3603 = vor.u32 %v3601, %v3602
        %v3604 = vshll.u32 920167782, %v3589
        %v3605 = vshrl.u32 1326507024, %v3590
        %v3606 = vor.u32 %v3604, %v3605
        %vm3607 = vcmp.lt.s32.totalorder %v3588, 1
        %vm3608 = vcmp.lt.s32.totalorder %v3588, 2
        %vm3609 = vcmp.lt.s32.totalorder %v3588, 3
        %vm3610 = vcmp.lt.s32.totalorder %v3588, 4
        %v3611 = vsel %vm3607, %v3591, %v3594
        %v3612 = vsel %vm3610, %v3600, 2102212464
        %v3613 = vsel %vm3609, %v3597, %v3612
        %v3614 = vsel %vm3608, %v3611, %v3613
        %v3615 = vsel %vm3607, %v3594, %v3597
        %v3616 = vsel %vm3610, %v3603, 920167782
        %v3617 = vsel %vm3609, %v3600, %v3616
        %v3618 = vsel %vm3608, %v3615, %v3617
        %v3619 = vsel %vm3607, %v3597, %v3600
        %v3620 = vsel %vm3610, %v3606, 1326507024
        %v3621 = vsel %vm3609, %v3603, %v3620
        %v3622 = vsel %vm3608, %v3619, %v3621
        %v3623 = vshll.u32 %v3583, 8
        %v3624 = vmul.u32.u64.compose %v3623, %v3622
        %v3625 = vextract.low.u32 %v3624
        %v3626 = vextract.high.u32 %v3624
        %v3627 = vmul.u32.u64.compose %v3623, %v3618
        %v3628 = vextract.low.u32 %v3627
        %v3629 = vextract.high.u32 %v3627
        %v3630 = vmul.u32 %v3623, %v3614
        %v3631 = vadd.s32 %v3626, %v3628
        %vm3632 = vc.u32 %v3626, %v3628
        %v3633 = vadd.s32 %v3629, 1
        %v3634 = vsel %vm3632, %v3633, %v3629
        %v3635 = vadd.s32 %v3630, %v3634
        %v3636 = vadd.s32 %v3635, 536870912
        %v3637 = vshrl.u32 %v3636, 30
        %v3638 = vshll.u32 %v3637, 30
        %v3639 = vsub.s32 %v3635, %v3638
        %vm3640 = vcmp.lt.s32.totalorder %v3639, 0
        %v3641 = vsub.s32 0, %v3639
        %v3642 = vsel %vm3640, %v3641, %v3639
        %v3643 = vclz %v3642
        %v3644 = vsub.s32 %v3643, 2
        %vm3645 = vcmp.gt.s32.totalorder 0, %v3644
        %v3646 = vsel %vm3645, 0, %v3644
        %v3647 = vsub.s32 32, %v3646
        %v3648 = vshll.u32 %v3639, %v3646
        %v3649 = vshrl.u32 %v3631, %v3647
        %v3650 = vor.u32 %v3648, %v3649
        %v3651 = vsub.s32 4294967266, %v3646
        %v3652 = vadd.s32 %v3651, 127
        %v3653 = vshll.u32 %v3652, 23
        %v3654 = vor.u32 4788187, %v3653
        %v3655 = vand.u32 2147483647, %v3654
        %v3657 = vcvt.s32.f32 %v3650
        %v3658 = vmul.f32 %v3657, %v3655
        %v3659 = vxor.u32 %v3658, 2147483648
        %v3660 = vsel %vm3577, %v3659, %v3658
        %v3661 = vsub.s32 4, %v3637
        %v3662 = vsel %vm3577, %v3661, %v3637
        %v3663 = vsel %vm3576, %v569, %v3660
        %v3664 = vsel %vm3576, 0, %v3662
        %v3665 = vcosq.f32.pop %v3663
        %v3666 = vsinq.f32.pop %v3663
        %vm3667 = vweird.f32 %v569
        %v3668 = vand.u32 %v3664, 3
        %vm3669 = vcmp.lt.s32.totalorder %v3668, 2
        %vm3670 = vcmp.eq.s32.totalorder %v3668, 0
        %v3671 = vxor.u32 %v3666, 2147483648
        %v3672 = vsel %vm3670, %v3665, %v3671
        %vm3673 = vcmp.eq.s32.totalorder %v3668, 2
        %v3674 = vxor.u32 %v3665, 2147483648
        %v3675 = vsel %vm3673, %v3674, %v3666
        %v3676 = vsel %vm3669, %v3672, %v3675
        %v3677 = vsel %vm3667, nan, %v3676
        %v3678 = vand.u32 2147483647, %v570
        %vm3679 = vcmp.le.f32.partialorder %v3678, 0.7853982
        %vm3680 = vcmp.lt.s32.totalorder %v570, 0
        %v3681 = vand.u32 %v570, 2139095040
        %v3682 = vshrl.u32 %v3681, 23
        %v3683 = vsub.s32 %v3682, 127
        %v3684 = vand.u32 2147483647, %v570
        %v3685 = vand.u32 %v3684, 8388607
        %v3686 = vor.u32 %v3685, 8388608
        %v3687 = vsub.s32 0, %v3686
        %v3688 = vadd.s32 %v3683, 1
        %vm3689 = vcmp.gt.s32.totalorder %v3688, 0
        %v3690 = vsel %vm3689, %v3688, 0
        %v3691 = vshrl.u32 %v3690, 5
        %v3692 = vand.u32 %v3690, 31
        %v3693 = vsub.s32 32, %v3692
        %v3694 = vshrl.u32 683565275, %v3693
        %v3695 = vshll.u32 683565275, %v3692
        %v3696 = vshrl.u32 2475754826, %v3693
        %v3697 = vor.u32 %v3695, %v3696
        %v3698 = vshll.u32 2475754826, %v3692
        %v3699 = vshrl.u32 2131351028, %v3693
        %v3700 = vor.u32 %v3698, %v3699
        %v3701 = vshll.u32 2131351028, %v3692
        %v3702 = vshrl.u32 2102212464, %v3693
        %v3703 = vor.u32 %v3701, %v3702
        %v3704 = vshll.u32 2102212464, %v3692
        %v3705 = vshrl.u32 920167782, %v3693
        %v3706 = vor.u32 %v3704, %v3705
        %v3707 = vshll.u32 920167782, %v3692
        %v3708 = vshrl.u32 1326507024, %v3693
        %v3709 = vor.u32 %v3707, %v3708
        %vm3710 = vcmp.lt.s32.totalorder %v3691, 1
        %vm3711 = vcmp.lt.s32.totalorder %v3691, 2
        %vm3712 = vcmp.lt.s32.totalorder %v3691, 3
        %vm3713 = vcmp.lt.s32.totalorder %v3691, 4
        %v3714 = vsel %vm3710, %v3694, %v3697
        %v3715 = vsel %vm3713, %v3703, 2102212464
        %v3716 = vsel %vm3712, %v3700, %v3715
        %v3717 = vsel %vm3711, %v3714, %v3716
        %v3718 = vsel %vm3710, %v3697, %v3700
        %v3719 = vsel %vm3713, %v3706, 920167782
        %v3720 = vsel %vm3712, %v3703, %v3719
        %v3721 = vsel %vm3711, %v3718, %v3720
        %v3722 = vsel %vm3710, %v3700, %v3703
        %v3723 = vsel %vm3713, %v3709, 1326507024
        %v3724 = vsel %vm3712, %v3706, %v3723
        %v3725 = vsel %vm3711, %v3722, %v3724
        %v3726 = vshll.u32 %v3686, 8
        %v3727 = vmul.u32.u64.compose %v3726, %v3725
        %v3728 = vextract.low.u32 %v3727
        %v3729 = vextract.high.u32 %v3727
        %v3730 = vmul.u32.u64.compose %v3726, %v3721
        %v3731 = vextract.low.u32 %v3730
        %v3732 = vextract.high.u32 %v3730
        %v3733 = vmul.u32 %v3726, %v3717
        %v3734 = vadd.s32 %v3729, %v3731
        %vm3735 = vc.u32 %v3729, %v3731
        %v3736 = vadd.s32 %v3732, 1
        %v3737 = vsel %vm3735, %v3736, %v3732
        %v3738 = vadd.s32 %v3733, %v3737
        %v3739 = vadd.s32 %v3738, 536870912
        %v3740 = vshrl.u32 %v3739, 30
        %v3741 = vshll.u32 %v3740, 30
        %v3742 = vsub.s32 %v3738, %v3741
        %vm3743 = vcmp.lt.s32.totalorder %v3742, 0
        %v3744 = vsub.s32 0, %v3742
        %v3745 = vsel %vm3743, %v3744, %v3742
        %v3746 = vclz %v3745
        %v3747 = vsub.s32 %v3746, 2
        %vm3748 = vcmp.gt.s32.totalorder 0, %v3747
        %v3749 = vsel %vm3748, 0, %v3747
        %v3750 = vsub.s32 32, %v3749
        %v3751 = vshll.u32 %v3742, %v3749
        %v3752 = vshrl.u32 %v3734, %v3750
        %v3753 = vor.u32 %v3751, %v3752
        %v3754 = vsub.s32 4294967266, %v3749
        %v3755 = vadd.s32 %v3754, 127
        %v3756 = vshll.u32 %v3755, 23
        %v3757 = vor.u32 4788187, %v3756
        %v3758 = vand.u32 2147483647, %v3757
        %v3760 = vcvt.s32.f32 %v3753
        %v3761 = vmul.f32 %v3760, %v3758
        %v3762 = vxor.u32 %v3761, 2147483648
        %v3763 = vsel %vm3680, %v3762, %v3761
        %v3764 = vsub.s32 4, %v3740
        %v3765 = vsel %vm3680, %v3764, %v3740
        %v3766 = vsel %vm3679, %v570, %v3763
        %v3767 = vsel %vm3679, 0, %v3765
        %v3768 = vcosq.f32.pop %v3766
        %v3769 = vsinq.f32.pop %v3766
        %vm3770 = vweird.f32 %v570
        %v3771 = vand.u32 %v3767, 3
        %vm3772 = vcmp.lt.s32.totalorder %v3771, 2
        %vm3773 = vcmp.eq.s32.totalorder %v3771, 0
        %v3774 = vxor.u32 %v3769, 2147483648
        %v3775 = vsel %vm3773, %v3768, %v3774
        %vm3776 = vcmp.eq.s32.totalorder %v3771, 2
        %v3777 = vxor.u32 %v3768, 2147483648
        %v3778 = vsel %vm3776, %v3777, %v3769
        %v3779 = vsel %vm3772, %v3775, %v3778
        %v3780 = vsel %vm3770, nan, %v3779
        %v3781 = vand.u32 2147483647, %v571
        %vm3782 = vcmp.le.f32.partialorder %v3781, 0.7853982
        %vm3783 = vcmp.lt.s32.totalorder %v571, 0
        %v3784 = vand.u32 %v571, 2139095040
        %v3785 = vshrl.u32 %v3784, 23
        %v3786 = vsub.s32 %v3785, 127
        %v3787 = vand.u32 2147483647, %v571
        %v3788 = vand.u32 %v3787, 8388607
        %v3789 = vor.u32 %v3788, 8388608
        %v3790 = vsub.s32 0, %v3789
        %v3791 = vadd.s32 %v3786, 1
        %vm3792 = vcmp.gt.s32.totalorder %v3791, 0
        %v3793 = vsel %vm3792, %v3791, 0
        %v3794 = vshrl.u32 %v3793, 5
        %v3795 = vand.u32 %v3793, 31
        %v3796 = vsub.s32 32, %v3795
        %v3797 = vshrl.u32 683565275, %v3796
        %v3798 = vshll.u32 683565275, %v3795
        %v3799 = vshrl.u32 2475754826, %v3796
        %v3800 = vor.u32 %v3798, %v3799
        %v3801 = vshll.u32 2475754826, %v3795
        %v3802 = vshrl.u32 2131351028, %v3796
        %v3803 = vor.u32 %v3801, %v3802
        %v3804 = vshll.u32 2131351028, %v3795
        %v3805 = vshrl.u32 2102212464, %v3796
        %v3806 = vor.u32 %v3804, %v3805
        %v3807 = vshll.u32 2102212464, %v3795
        %v3808 = vshrl.u32 920167782, %v3796
        %v3809 = vor.u32 %v3807, %v3808
        %v3810 = vshll.u32 920167782, %v3795
        %v3811 = vshrl.u32 1326507024, %v3796
        %v3812 = vor.u32 %v3810, %v3811
        %vm3813 = vcmp.lt.s32.totalorder %v3794, 1
        %vm3814 = vcmp.lt.s32.totalorder %v3794, 2
        %vm3815 = vcmp.lt.s32.totalorder %v3794, 3
        %vm3816 = vcmp.lt.s32.totalorder %v3794, 4
        %v3817 = vsel %vm3813, %v3797, %v3800
        %v3818 = vsel %vm3816, %v3806, 2102212464
        %v3819 = vsel %vm3815, %v3803, %v3818
        %v3820 = vsel %vm3814, %v3817, %v3819
        %v3821 = vsel %vm3813, %v3800, %v3803
        %v3822 = vsel %vm3816, %v3809, 920167782
        %v3823 = vsel %vm3815, %v3806, %v3822
        %v3824 = vsel %vm3814, %v3821, %v3823
        %v3825 = vsel %vm3813, %v3803, %v3806
        %v3826 = vsel %vm3816, %v3812, 1326507024
        %v3827 = vsel %vm3815, %v3809, %v3826
        %v3828 = vsel %vm3814, %v3825, %v3827
        %v3829 = vshll.u32 %v3789, 8
        %v3830 = vmul.u32.u64.compose %v3829, %v3828
        %v3831 = vextract.low.u32 %v3830
        %v3832 = vextract.high.u32 %v3830
        %v3833 = vmul.u32.u64.compose %v3829, %v3824
        %v3834 = vextract.low.u32 %v3833
        %v3835 = vextract.high.u32 %v3833
        %v3836 = vmul.u32 %v3829, %v3820
        %v3837 = vadd.s32 %v3832, %v3834
        %vm3838 = vc.u32 %v3832, %v3834
        %v3839 = vadd.s32 %v3835, 1
        %v3840 = vsel %vm3838, %v3839, %v3835
        %v3841 = vadd.s32 %v3836, %v3840
        %v3842 = vadd.s32 %v3841, 536870912
        %v3843 = vshrl.u32 %v3842, 30
        %v3844 = vshll.u32 %v3843, 30
        %v3845 = vsub.s32 %v3841, %v3844
        %vm3846 = vcmp.lt.s32.totalorder %v3845, 0
        %v3847 = vsub.s32 0, %v3845
        %v3848 = vsel %vm3846, %v3847, %v3845
        %v3849 = vclz %v3848
        %v3850 = vsub.s32 %v3849, 2
        %vm3851 = vcmp.gt.s32.totalorder 0, %v3850
        %v3852 = vsel %vm3851, 0, %v3850
        %v3853 = vsub.s32 32, %v3852
        %v3854 = vshll.u32 %v3845, %v3852
        %v3855 = vshrl.u32 %v3837, %v3853
        %v3856 = vor.u32 %v3854, %v3855
        %v3857 = vsub.s32 4294967266, %v3852
        %v3858 = vadd.s32 %v3857, 127
        %v3859 = vshll.u32 %v3858, 23
        %v3860 = vor.u32 4788187, %v3859
        %v3861 = vand.u32 2147483647, %v3860
        %v3863 = vcvt.s32.f32 %v3856
        %v3864 = vmul.f32 %v3863, %v3861
        %v3865 = vxor.u32 %v3864, 2147483648
        %v3866 = vsel %vm3783, %v3865, %v3864
        %v3867 = vsub.s32 4, %v3843
        %v3868 = vsel %vm3783, %v3867, %v3843
        %v3869 = vsel %vm3782, %v571, %v3866
        %v3870 = vsel %vm3782, 0, %v3868
        %v3871 = vcosq.f32.pop %v3869
        %v3872 = vsinq.f32.pop %v3869
        %vm3873 = vweird.f32 %v571
        %v3874 = vand.u32 %v3870, 3
        %vm3875 = vcmp.lt.s32.totalorder %v3874, 2
        %vm3876 = vcmp.eq.s32.totalorder %v3874, 0
        %v3877 = vxor.u32 %v3872, 2147483648
        %v3878 = vsel %vm3876, %v3871, %v3877
        %vm3879 = vcmp.eq.s32.totalorder %v3874, 2
        %v3880 = vxor.u32 %v3871, 2147483648
        %v3881 = vsel %vm3879, %v3880, %v3872
        %v3882 = vsel %vm3875, %v3878, %v3881
        %v3883 = vsel %vm3873, nan, %v3882
        %v3884 = vld [vmem:[%s4] sm:$0xff]
        %v3885 = vld [vmem:[%s5] sm:$0xf]
        %vm3886 = vcmask 31744
        %v3888 = vsel %vm3886, %v675, 0
        %v3891 = vsel %vm3886, %v779, 0
        %v3894 = vsel %vm3886, %v883, 0
        %v3897 = vsel %vm3886, %v987, 0
        %v3900 = vsel %vm3886, %v1091, 0
        %v3903 = vsel %vm3886, %v1195, 0
        %v3906 = vsel %vm3886, %v1299, 0
        %v3909 = vsel %vm3886, %v1403, 0
        %v3912 = vsel %vm3886, %v1507, 0
        %v3915 = vsel %vm3886, %v1611, 0
        %v3918 = vsel %vm3886, %v1715, 0
        %v3921 = vsel %vm3886, %v1819, 0
        %v3924 = vsel %vm3886, %v1923, 0
        %v3927 = vsel %vm3886, %v2027, 0
        %v3930 = vsel %vm3886, %v2131, 0
        %v3933 = vsel %vm3886, %v2235, 0
        %vm3935 = vcmask 1043456
        %v3937 = vsel %vm3935, %v3885, 0
        %3939 = vmatprep.subr.mxu0 0.0
        %3940 = vmatpush1.msra.mxu0 %v3937
        %3941 = vmatprep.subr.mxu0 0.0
        %3942 = vmatpush1.msra.mxu0 0.0
        %3943 = vmatprep.subr.mxu0 0.0
        %3944 = vmatpush1.msra.mxu0 0.0
        %3945 = vmatprep.subr.mxu0 0.0
        %3946 = vmatpush1.msra.mxu0 0.0
        %3947 = vmatprep.subr.mxu0 0.0
        %3948 = vmatpush1.msra.mxu0 0.0
        %3949 = vmatprep.subr.mxu0 0.0
        %3950 = vmatpush1.msra.mxu0 0.0
        %3951 = vmatprep.subr.mxu0 0.0
        %3952 = vmatpush1.msra.mxu0 0.0
        %3953 = vmatprep.subr.mxu0 0.0
        %3954 = vmatpush1.msra.mxu0 0.0
        %3955 = vmatprep.subr.mxu0 0.0
        %3956 = vmatpush1.msra.mxu0 0.0
        %3957 = vmatprep.subr.mxu0 0.0
        %3958 = vmatpush1.msra.mxu0 0.0
        %3959 = vmatprep.subr.mxu0 0.0
        %3960 = vmatpush1.msra.mxu0 0.0
        %3961 = vmatprep.subr.mxu0 0.0
        %3962 = vmatpush1.msra.mxu0 0.0
        %3963 = vmatprep.subr.mxu0 0.0
        %3964 = vmatpush1.msra.mxu0 0.0
        %3965 = vmatprep.subr.mxu0 0.0
        %3966 = vmatpush1.msra.mxu0 0.0
        %3967 = vmatprep.subr.mxu0 0.0
        %3968 = vmatpush1.msra.mxu0 0.0
        %3969 = vmatprep.subr.mxu0 0.0
        %3970 = vmatpush1.msra.mxu0 0.0
        %3971 = vmatprep.subr.mxu0 0.0
        %3972 = vmatpush1.msra.mxu0 0.0
        %3973 = vmatprep.subr.mxu0 0.0
        %3974 = vmatpush1.msra.mxu0 0.0
        %3975 = vmatprep.subr.mxu0 0.0
        %3976 = vmatpush1.msra.mxu0 0.0
        %3977 = vmatprep.subr.mxu0 0.0
        %3978 = vmatpush1.msra.mxu0 0.0
        %3979 = vmatprep.subr.mxu0 0.0
        %3980 = vmatpush1.msra.mxu0 0.0
        %3981 = vmatprep.subr.mxu0 0.0
        %3982 = vmatpush1.msra.mxu0 0.0
        %3983 = vmatprep.subr.mxu0 0.0
        %3984 = vmatpush1.msra.mxu0 0.0
        %3985 = vmatprep.subr.mxu0 0.0
        %3986 = vmatpush1.msra.mxu0 0.0
        %3987 = vmatprep.subr.mxu0 0.0
        %3988 = vmatpush1.msra.mxu0 0.0
        %3989 = vmatprep.subr.mxu0 0.0
        %3990 = vmatpush1.msra.mxu0 0.0
        %3991 = vmatprep.subr.mxu0 0.0
        %3992 = vmatpush1.msra.mxu0 0.0
        %3993 = vmatprep.subr.mxu0 0.0
        %3994 = vmatpush1.msra.mxu0 0.0
        %3995 = vmatprep.subr.mxu0 0.0
        %3996 = vmatpush1.msra.mxu0 0.0
        %3997 = vmatprep.subr.mxu0 0.0
        %3998 = vmatpush1.msra.mxu0 0.0
        %3999 = vmatprep.subr.mxu0 0.0
        %4000 = vmatpush1.msra.mxu0 0.0
        %4001 = vmatprep.subr.mxu0 0.0
        %4002 = vmatpush1.msra.mxu0 0.0
        %4003 = vmatprep.mubr.f32.mxu0 0.0
        %4004 = vmatmul.mubr.f32.gmra.mrb[0].mxu0 %v3888
        %v4005 = vpop.f32.mrb[0].mxu0
        %v4006 = vadd.f32 0.0, %v4005
        %v4007 = vpop.f32.mrb[0].mxu0
        %4008 = vmatprep.mubr.f32.mxu0 0.0
        %4009 = vmatmul.mubr.f32.gmra.mrb[0].mxu0 %v3891
        %v4010 = vpop.f32.mrb[0].mxu0
        %v4011 = vadd.f32 0.0, %v4010
        %v4012 = vpop.f32.mrb[0].mxu0
        %4013 = vmatprep.mubr.f32.mxu0 0.0
        %4014 = vmatmul.mubr.f32.gmra.mrb[0].mxu0 %v3894
        %v4015 = vpop.f32.mrb[0].mxu0
        %v4016 = vadd.f32 0.0, %v4015
        %v4017 = vpop.f32.mrb[0].mxu0
        %4018 = vmatprep.mubr.f32.mxu0 0.0
        %4019 = vmatmul.mubr.f32.gmra.mrb[0].mxu0 %v3897
        %v4020 = vpop.f32.mrb[0].mxu0
        %v4021 = vadd.f32 0.0, %v4020
        %v4022 = vpop.f32.mrb[0].mxu0
        %4023 = vmatprep.mubr.f32.mxu0 0.0
        %4024 = vmatmul.mubr.f32.gmra.mrb[0].mxu0 %v3900
        %v4025 = vpop.f32.mrb[0].mxu0
        %v4026 = vadd.f32 0.0, %v4025
        %v4027 = vpop.f32.mrb[0].mxu0
        %4028 = vmatprep.mubr.f32.mxu0 0.0
        %4029 = vmatmul.mubr.f32.gmra.mrb[0].mxu0 %v3903
        %v4030 = vpop.f32.mrb[0].mxu0
        %v4031 = vadd.f32 0.0, %v4030
        %v4032 = vpop.f32.mrb[0].mxu0
        %4033 = vmatprep.mubr.f32.mxu0 0.0
        %4034 = vmatmul.mubr.f32.gmra.mrb[0].mxu0 %v3906
        %v4035 = vpop.f32.mrb[0].mxu0
        %v4036 = vadd.f32 0.0, %v4035
        %v4037 = vpop.f32.mrb[0].mxu0
        %4038 = vmatprep.mubr.f32.mxu0 0.0
        %4039 = vmatmul.mubr.f32.gmra.mrb[0].mxu0 %v3909
        %v4040 = vpop.f32.mrb[0].mxu0
        %v4041 = vadd.f32 0.0, %v4040
        %v4042 = vpop.f32.mrb[0].mxu0
        %4043 = vmatprep.mubr.f32.mxu0 0.0
        %4044 = vmatmul.mubr.f32.gmra.mrb[0].mxu0 %v3912
        %v4045 = vpop.f32.mrb[0].mxu0
        %v4046 = vadd.f32 0.0, %v4045
        %v4047 = vpop.f32.mrb[0].mxu0
        %4048 = vmatprep.mubr.f32.mxu0 0.0
        %4049 = vmatmul.mubr.f32.gmra.mrb[0].mxu0 %v3915
        %v4050 = vpop.f32.mrb[0].mxu0
        %v4051 = vadd.f32 0.0, %v4050
        %v4052 = vpop.f32.mrb[0].mxu0
        %4053 = vmatprep.mubr.f32.mxu0 0.0
        %4054 = vmatmul.mubr.f32.gmra.mrb[0].mxu0 %v3918
        %v4055 = vpop.f32.mrb[0].mxu0
        %v4056 = vadd.f32 0.0, %v4055
        %v4057 = vpop.f32.mrb[0].mxu0
        %4058 = vmatprep.mubr.f32.mxu0 0.0
        %4059 = vmatmul.mubr.f32.gmra.mrb[0].mxu0 %v3921
        %v4060 = vpop.f32.mrb[0].mxu0
        %v4061 = vadd.f32 0.0, %v4060
        %v4062 = vpop.f32.mrb[0].mxu0
        %4063 = vmatprep.mubr.f32.mxu0 0.0
        %4064 = vmatmul.mubr.f32.gmra.mrb[0].mxu0 %v3924
        %v4065 = vpop.f32.mrb[0].mxu0
        %v4066 = vadd.f32 0.0, %v4065
        %v4067 = vpop.f32.mrb[0].mxu0
        %4068 = vmatprep.mubr.f32.mxu0 0.0
        %4069 = vmatmul.mubr.f32.gmra.mrb[0].mxu0 %v3927
        %v4070 = vpop.f32.mrb[0].mxu0
        %v4071 = vadd.f32 0.0, %v4070
        %v4072 = vpop.f32.mrb[0].mxu0
        %4073 = vmatprep.mubr.f32.mxu0 0.0
        %4074 = vmatmul.mubr.f32.gmra.mrb[0].mxu0 %v3930
        %v4075 = vpop.f32.mrb[0].mxu0
        %v4076 = vadd.f32 0.0, %v4075
        %v4077 = vpop.f32.mrb[0].mxu0
        %4078 = vmatprep.mubr.f32.mxu0 0.0
        %4079 = vmatmul.mubr.f32.gmra.mrb[0].mxu0 %v3933
        %v4080 = vpop.f32.mrb[0].mxu0
        %v4081 = vadd.f32 0.0, %v4080
        %v4082 = vpop.f32.mrb[0].mxu0
        %4083 = vdwg.mxu0
        %vm4084 = vcmask 64512
        %v4086 = vsel %vm4084, %v437, 0
        %v4089 = vsel %vm4084, %v438, 0
        %v4092 = vsel %vm4084, %v439, 0
        %v4095 = vsel %vm4084, %v440, 0
        %v4098 = vsel %vm4084, %v441, 0
        %v4101 = vsel %vm4084, %v442, 0
        %v4104 = vsel %vm4084, %v443, 0
        %v4107 = vsel %vm4084, %v444, 0
        %v4110 = vsel %vm4084, %v445, 0
        %v4113 = vsel %vm4084, %v446, 0
        %v4116 = vsel %vm4084, %v447, 0
        %v4119 = vsel %vm4084, %v448, 0
        %v4122 = vsel %vm4084, %v449, 0
        %v4125 = vsel %vm4084, %v450, 0
        %v4128 = vsel %vm4084, %v451, 0
        %v4131 = vsel %vm4084, %v452, 0
        %4133 = vmatprep.subr.mxu0 0.0
        %4134 = vmatpush1.msra.mxu0 %v3884
        %4135 = vmatprep.subr.mxu0 0.0
        %4136 = vmatpush1.msra.mxu0 0.0
        %4137 = vmatprep.subr.mxu0 0.0
        %4138 = vmatpush1.msra.mxu0 0.0
        %4139 = vmatprep.subr.mxu0 0.0
        %4140 = vmatpush1.msra.mxu0 0.0
        %4141 = vmatprep.subr.mxu0 0.0
        %4142 = vmatpush1.msra.mxu0 0.0
        %4143 = vmatprep.subr.mxu0 0.0
        %4144 = vmatpush1.msra.mxu0 0.0
        %4145 = vmatprep.subr.mxu0 0.0
        %4146 = vmatpush1.msra.mxu0 0.0
        %4147 = vmatprep.subr.mxu0 0.0
        %4148 = vmatpush1.msra.mxu0 0.0
        %4149 = vmatprep.subr.mxu0 0.0
        %4150 = vmatpush1.msra.mxu0 0.0
        %4151 = vmatprep.subr.mxu0 0.0
        %4152 = vmatpush1.msra.mxu0 0.0
        %4153 = vmatprep.subr.mxu0 0.0
        %4154 = vmatpush1.msra.mxu0 0.0
        %4155 = vmatprep.subr.mxu0 0.0
        %4156 = vmatpush1.msra.mxu0 0.0
        %4157 = vmatprep.subr.mxu0 0.0
        %4158 = vmatpush1.msra.mxu0 0.0
        %4159 = vmatprep.subr.mxu0 0.0
        %4160 = vmatpush1.msra.mxu0 0.0
        %4161 = vmatprep.subr.mxu0 0.0
        %4162 = vmatpush1.msra.mxu0 0.0
        %4163 = vmatprep.subr.mxu0 0.0
        %4164 = vmatpush1.msra.mxu0 0.0
        %4165 = vmatprep.subr.mxu0 0.0
        %4166 = vmatpush1.msra.mxu0 0.0
        %4167 = vmatprep.subr.mxu0 0.0
        %4168 = vmatpush1.msra.mxu0 0.0
        %4169 = vmatprep.subr.mxu0 0.0
        %4170 = vmatpush1.msra.mxu0 0.0
        %4171 = vmatprep.subr.mxu0 0.0
        %4172 = vmatpush1.msra.mxu0 0.0
        %4173 = vmatprep.subr.mxu0 0.0
        %4174 = vmatpush1.msra.mxu0 0.0
        %4175 = vmatprep.subr.mxu0 0.0
        %4176 = vmatpush1.msra.mxu0 0.0
        %4177 = vmatprep.subr.mxu0 0.0
        %4178 = vmatpush1.msra.mxu0 0.0
        %4179 = vmatprep.subr.mxu0 0.0
        %4180 = vmatpush1.msra.mxu0 0.0
        %4181 = vmatprep.subr.mxu0 0.0
        %4182 = vmatpush1.msra.mxu0 0.0
        %4183 = vmatprep.subr.mxu0 0.0
        %4184 = vmatpush1.msra.mxu0 0.0
        %4185 = vmatprep.subr.mxu0 0.0
        %4186 = vmatpush1.msra.mxu0 0.0
        %4187 = vmatprep.subr.mxu0 0.0
        %4188 = vmatpush1.msra.mxu0 0.0
        %4189 = vmatprep.subr.mxu0 0.0
        %4190 = vmatpush1.msra.mxu0 0.0
        %4191 = vmatprep.subr.mxu0 0.0
        %4192 = vmatpush1.msra.mxu0 0.0
        %4193 = vmatprep.subr.mxu0 0.0
        %4194 = vmatpush1.msra.mxu0 0.0
        %4195 = vmatprep.subr.mxu0 0.0
        %4196 = vmatpush1.msra.mxu0 0.0
        %4197 = vmatprep.mubr.f32.mxu0 0.0
        %4198 = vmatmul.mubr.f32.gmra.mrb[0].mxu0 %v4086
        %v4199 = vpop.f32.mrb[0].mxu0
        %v4200 = vadd.f32 %v4006, %v4199
        %v4201 = vpop.f32.mrb[0].mxu0
        %4202 = vmatprep.mubr.f32.mxu0 0.0
        %4203 = vmatmul.mubr.f32.gmra.mrb[0].mxu0 %v4089
        %v4204 = vpop.f32.mrb[0].mxu0
        %v4205 = vadd.f32 %v4011, %v4204
        %v4206 = vpop.f32.mrb[0].mxu0
        %4207 = vmatprep.mubr.f32.mxu0 0.0
        %4208 = vmatmul.mubr.f32.gmra.mrb[0].mxu0 %v4092
        %v4209 = vpop.f32.mrb[0].mxu0
        %v4210 = vadd.f32 %v4016, %v4209
        %v4211 = vpop.f32.mrb[0].mxu0
        %4212 = vmatprep.mubr.f32.mxu0 0.0
        %4213 = vmatmul.mubr.f32.gmra.mrb[0].mxu0 %v4095
        %v4214 = vpop.f32.mrb[0].mxu0
        %v4215 = vadd.f32 %v4021, %v4214
        %v4216 = vpop.f32.mrb[0].mxu0
        %4217 = vmatprep.mubr.f32.mxu0 0.0
        %4218 = vmatmul.mubr.f32.gmra.mrb[0].mxu0 %v4098
        %v4219 = vpop.f32.mrb[0].mxu0
        %v4220 = vadd.f32 %v4026, %v4219
        %v4221 = vpop.f32.mrb[0].mxu0
        %4222 = vmatprep.mubr.f32.mxu0 0.0
        %4223 = vmatmul.mubr.f32.gmra.mrb[0].mxu0 %v4101
        %v4224 = vpop.f32.mrb[0].mxu0
        %v4225 = vadd.f32 %v4031, %v4224
        %v4226 = vpop.f32.mrb[0].mxu0
        %4227 = vmatprep.mubr.f32.mxu0 0.0
        %4228 = vmatmul.mubr.f32.gmra.mrb[0].mxu0 %v4104
        %v4229 = vpop.f32.mrb[0].mxu0
        %v4230 = vadd.f32 %v4036, %v4229
        %v4231 = vpop.f32.mrb[0].mxu0
        %4232 = vmatprep.mubr.f32.mxu0 0.0
        %4233 = vmatmul.mubr.f32.gmra.mrb[0].mxu0 %v4107
        %v4234 = vpop.f32.mrb[0].mxu0
        %v4235 = vadd.f32 %v4041, %v4234
        %v4236 = vpop.f32.mrb[0].mxu0
        %4237 = vmatprep.mubr.f32.mxu0 0.0
        %4238 = vmatmul.mubr.f32.gmra.mrb[0].mxu0 %v4110
        %v4239 = vpop.f32.mrb[0].mxu0
        %v4240 = vadd.f32 %v4046, %v4239
        %v4241 = vpop.f32.mrb[0].mxu0
        %4242 = vmatprep.mubr.f32.mxu0 0.0
        %4243 = vmatmul.mubr.f32.gmra.mrb[0].mxu0 %v4113
        %v4244 = vpop.f32.mrb[0].mxu0
        %v4245 = vadd.f32 %v4051, %v4244
        %v4246 = vpop.f32.mrb[0].mxu0
        %4247 = vmatprep.mubr.f32.mxu0 0.0
        %4248 = vmatmul.mubr.f32.gmra.mrb[0].mxu0 %v4116
        %v4249 = vpop.f32.mrb[0].mxu0
        %v4250 = vadd.f32 %v4056, %v4249
        %v4251 = vpop.f32.mrb[0].mxu0
        %4252 = vmatprep.mubr.f32.mxu0 0.0
        %4253 = vmatmul.mubr.f32.gmra.mrb[0].mxu0 %v4119
        %v4254 = vpop.f32.mrb[0].mxu0
        %v4255 = vadd.f32 %v4061, %v4254
        %v4256 = vpop.f32.mrb[0].mxu0
        %4257 = vmatprep.mubr.f32.mxu0 0.0
        %4258 = vmatmul.mubr.f32.gmra.mrb[0].mxu0 %v4122
        %v4259 = vpop.f32.mrb[0].mxu0
        %v4260 = vadd.f32 %v4066, %v4259
        %v4261 = vpop.f32.mrb[0].mxu0
        %4262 = vmatprep.mubr.f32.mxu0 0.0
        %4263 = vmatmul.mubr.f32.gmra.mrb[0].mxu0 %v4125
        %v4264 = vpop.f32.mrb[0].mxu0
        %v4265 = vadd.f32 %v4071, %v4264
        %v4266 = vpop.f32.mrb[0].mxu0
        %4267 = vmatprep.mubr.f32.mxu0 0.0
        %4268 = vmatmul.mubr.f32.gmra.mrb[0].mxu0 %v4128
        %v4269 = vpop.f32.mrb[0].mxu0
        %v4270 = vadd.f32 %v4076, %v4269
        %v4271 = vpop.f32.mrb[0].mxu0
        %4272 = vmatprep.mubr.f32.mxu0 0.0
        %4273 = vmatmul.mubr.f32.gmra.mrb[0].mxu0 %v4131
        %v4274 = vpop.f32.mrb[0].mxu0
        %v4275 = vadd.f32 %v4081, %v4274
        %v4276 = vpop.f32.mrb[0].mxu0
        %4277 = vdwg.mxu0
        %v4278 = vld [vmem:[%s6] sm:$0xf]
        %v4280 = vsel %vm3886, %v2338, 0
        %v4283 = vsel %vm3886, %v2441, 0
        %v4286 = vsel %vm3886, %v2544, 0
        %v4289 = vsel %vm3886, %v2647, 0
        %v4292 = vsel %vm3886, %v2750, 0
        %v4295 = vsel %vm3886, %v2853, 0
        %v4298 = vsel %vm3886, %v2956, 0
        %v4301 = vsel %vm3886, %v3059, 0
        %v4304 = vsel %vm3886, %v3162, 0
        %v4307 = vsel %vm3886, %v3265, 0
        %v4310 = vsel %vm3886, %v3368, 0
        %v4313 = vsel %vm3886, %v3471, 0
        %v4316 = vsel %vm3886, %v3574, 0
        %v4319 = vsel %vm3886, %v3677, 0
        %v4322 = vsel %vm3886, %v3780, 0
        %v4325 = vsel %vm3886, %v3883, 0
        %v4328 = vsel %vm3935, %v4278, 0
        %4330 = vmatprep.subr.mxu0 0.0
        %4331 = vmatpush1.msra.mxu0 %v4328
        %4332 = vmatprep.subr.mxu0 0.0
        %4333 = vmatpush1.msra.mxu0 0.0
        %4334 = vmatprep.subr.mxu0 0.0
        %4335 = vmatpush1.msra.mxu0 0.0
        %4336 = vmatprep.subr.mxu0 0.0
        %4337 = vmatpush1.msra.mxu0 0.0
        %4338 = vmatprep.subr.mxu0 0.0
        %4339 = vmatpush1.msra.mxu0 0.0
        %4340 = vmatprep.subr.mxu0 0.0
        %4341 = vmatpush1.msra.mxu0 0.0
        %4342 = vmatprep.subr.mxu0 0.0
        %4343 = vmatpush1.msra.mxu0 0.0
        %4344 = vmatprep.subr.mxu0 0.0
        %4345 = vmatpush1.msra.mxu0 0.0
        %4346 = vmatprep.subr.mxu0 0.0
        %4347 = vmatpush1.msra.mxu0 0.0
        %4348 = vmatprep.subr.mxu0 0.0
        %4349 = vmatpush1.msra.mxu0 0.0
        %4350 = vmatprep.subr.mxu0 0.0
        %4351 = vmatpush1.msra.mxu0 0.0
        %4352 = vmatprep.subr.mxu0 0.0
        %4353 = vmatpush1.msra.mxu0 0.0
        %4354 = vmatprep.subr.mxu0 0.0
        %4355 = vmatpush1.msra.mxu0 0.0
        %4356 = vmatprep.subr.mxu0 0.0
        %4357 = vmatpush1.msra.mxu0 0.0
        %4358 = vmatprep.subr.mxu0 0.0
        %4359 = vmatpush1.msra.mxu0 0.0
        %4360 = vmatprep.subr.mxu0 0.0
        %4361 = vmatpush1.msra.mxu0 0.0
        %4362 = vmatprep.subr.mxu0 0.0
        %4363 = vmatpush1.msra.mxu0 0.0
        %4364 = vmatprep.subr.mxu0 0.0
        %4365 = vmatpush1.msra.mxu0 0.0
        %4366 = vmatprep.subr.mxu0 0.0
        %4367 = vmatpush1.msra.mxu0 0.0
        %4368 = vmatprep.subr.mxu0 0.0
        %4369 = vmatpush1.msra.mxu0 0.0
        %4370 = vmatprep.subr.mxu0 0.0
        %4371 = vmatpush1.msra.mxu0 0.0
        %4372 = vmatprep.subr.mxu0 0.0
        %4373 = vmatpush1.msra.mxu0 0.0
        %4374 = vmatprep.subr.mxu0 0.0
        %4375 = vmatpush1.msra.mxu0 0.0
        %4376 = vmatprep.subr.mxu0 0.0
        %4377 = vmatpush1.msra.mxu0 0.0
        %4378 = vmatprep.subr.mxu0 0.0
        %4379 = vmatpush1.msra.mxu0 0.0
        %4380 = vmatprep.subr.mxu0 0.0
        %4381 = vmatpush1.msra.mxu0 0.0
        %4382 = vmatprep.subr.mxu0 0.0
        %4383 = vmatpush1.msra.mxu0 0.0
        %4384 = vmatprep.subr.mxu0 0.0
        %4385 = vmatpush1.msra.mxu0 0.0
        %4386 = vmatprep.subr.mxu0 0.0
        %4387 = vmatpush1.msra.mxu0 0.0
        %4388 = vmatprep.subr.mxu0 0.0
        %4389 = vmatpush1.msra.mxu0 0.0
        %4390 = vmatprep.subr.mxu0 0.0
        %4391 = vmatpush1.msra.mxu0 0.0
        %4392 = vmatprep.subr.mxu0 0.0
        %4393 = vmatpush1.msra.mxu0 0.0
        %4394 = vmatprep.mubr.f32.mxu0 0.0
        %4395 = vmatmul.mubr.f32.gmra.mrb[0].mxu0 %v4280
        %v4396 = vpop.f32.mrb[0].mxu0
        %v4397 = vadd.f32 0.0, %v4396
        %v4398 = vpop.f32.mrb[0].mxu0
        %4399 = vmatprep.mubr.f32.mxu0 0.0
        %4400 = vmatmul.mubr.f32.gmra.mrb[0].mxu0 %v4283
        %v4401 = vpop.f32.mrb[0].mxu0
        %v4402 = vadd.f32 0.0, %v4401
        %v4403 = vpop.f32.mrb[0].mxu0
        %4404 = vmatprep.mubr.f32.mxu0 0.0
        %4405 = vmatmul.mubr.f32.gmra.mrb[0].mxu0 %v4286
        %v4406 = vpop.f32.mrb[0].mxu0
        %v4407 = vadd.f32 0.0, %v4406
        %v4408 = vpop.f32.mrb[0].mxu0
        %4409 = vmatprep.mubr.f32.mxu0 0.0
        %4410 = vmatmul.mubr.f32.gmra.mrb[0].mxu0 %v4289
        %v4411 = vpop.f32.mrb[0].mxu0
        %v4412 = vadd.f32 0.0, %v4411
        %v4413 = vpop.f32.mrb[0].mxu0
        %4414 = vmatprep.mubr.f32.mxu0 0.0
        %4415 = vmatmul.mubr.f32.gmra.mrb[0].mxu0 %v4292
        %v4416 = vpop.f32.mrb[0].mxu0
        %v4417 = vadd.f32 0.0, %v4416
        %v4418 = vpop.f32.mrb[0].mxu0
        %4419 = vmatprep.mubr.f32.mxu0 0.0
        %4420 = vmatmul.mubr.f32.gmra.mrb[0].mxu0 %v4295
        %v4421 = vpop.f32.mrb[0].mxu0
        %v4422 = vadd.f32 0.0, %v4421
        %v4423 = vpop.f32.mrb[0].mxu0
        %4424 = vmatprep.mubr.f32.mxu0 0.0
        %4425 = vmatmul.mubr.f32.gmra.mrb[0].mxu0 %v4298
        %v4426 = vpop.f32.mrb[0].mxu0
        %v4427 = vadd.f32 0.0, %v4426
        %v4428 = vpop.f32.mrb[0].mxu0
        %4429 = vmatprep.mubr.f32.mxu0 0.0
        %4430 = vmatmul.mubr.f32.gmra.mrb[0].mxu0 %v4301
        %v4431 = vpop.f32.mrb[0].mxu0
        %v4432 = vadd.f32 0.0, %v4431
        %v4433 = vpop.f32.mrb[0].mxu0
        %4434 = vmatprep.mubr.f32.mxu0 0.0
        %4435 = vmatmul.mubr.f32.gmra.mrb[0].mxu0 %v4304
        %v4436 = vpop.f32.mrb[0].mxu0
        %v4437 = vadd.f32 0.0, %v4436
        %v4438 = vpop.f32.mrb[0].mxu0
        %4439 = vmatprep.mubr.f32.mxu0 0.0
        %4440 = vmatmul.mubr.f32.gmra.mrb[0].mxu0 %v4307
        %v4441 = vpop.f32.mrb[0].mxu0
        %v4442 = vadd.f32 0.0, %v4441
        %v4443 = vpop.f32.mrb[0].mxu0
        %4444 = vmatprep.mubr.f32.mxu0 0.0
        %4445 = vmatmul.mubr.f32.gmra.mrb[0].mxu0 %v4310
        %v4446 = vpop.f32.mrb[0].mxu0
        %v4447 = vadd.f32 0.0, %v4446
        %v4448 = vpop.f32.mrb[0].mxu0
        %4449 = vmatprep.mubr.f32.mxu0 0.0
        %4450 = vmatmul.mubr.f32.gmra.mrb[0].mxu0 %v4313
        %v4451 = vpop.f32.mrb[0].mxu0
        %v4452 = vadd.f32 0.0, %v4451
        %v4453 = vpop.f32.mrb[0].mxu0
        %4454 = vmatprep.mubr.f32.mxu0 0.0
        %4455 = vmatmul.mubr.f32.gmra.mrb[0].mxu0 %v4316
        %v4456 = vpop.f32.mrb[0].mxu0
        %v4457 = vadd.f32 0.0, %v4456
        %v4458 = vpop.f32.mrb[0].mxu0
        %4459 = vmatprep.mubr.f32.mxu0 0.0
        %4460 = vmatmul.mubr.f32.gmra.mrb[0].mxu0 %v4319
        %v4461 = vpop.f32.mrb[0].mxu0
        %v4462 = vadd.f32 0.0, %v4461
        %v4463 = vpop.f32.mrb[0].mxu0
        %4464 = vmatprep.mubr.f32.mxu0 0.0
        %4465 = vmatmul.mubr.f32.gmra.mrb[0].mxu0 %v4322
        %v4466 = vpop.f32.mrb[0].mxu0
        %v4467 = vadd.f32 0.0, %v4466
        %v4468 = vpop.f32.mrb[0].mxu0
        %4469 = vmatprep.mubr.f32.mxu0 0.0
        %4470 = vmatmul.mubr.f32.gmra.mrb[0].mxu0 %v4325
        %v4471 = vpop.f32.mrb[0].mxu0
        %v4472 = vadd.f32 0.0, %v4471
        %v4473 = vpop.f32.mrb[0].mxu0
        %4474 = vdwg.mxu0
        %v4475 = vadd.f32 %v4200, %v4397
        %v4476 = vadd.f32 %v4205, %v4402
        %v4477 = vadd.f32 %v4210, %v4407
        %v4478 = vadd.f32 %v4215, %v4412
        %v4479 = vadd.f32 %v4220, %v4417
        %v4480 = vadd.f32 %v4225, %v4422
        %v4481 = vadd.f32 %v4230, %v4427
        %v4482 = vadd.f32 %v4235, %v4432
        %v4483 = vadd.f32 %v4240, %v4437
        %v4484 = vadd.f32 %v4245, %v4442
        %v4485 = vadd.f32 %v4250, %v4447
        %v4486 = vadd.f32 %v4255, %v4452
        %v4487 = vadd.f32 %v4260, %v4457
        %v4488 = vadd.f32 %v4265, %v4462
        %v4489 = vadd.f32 %v4270, %v4467
        %v4490 = vadd.f32 %v4275, %v4472
        %v4491 = vld [vmem:[%s7] sm:$0x1]
        %v4493 = vlaneseq
        %v4494 = vshrl.u32 %v4493, 7
        %v4495 = vsub.s32 0, %v4494
        %v4496 = vrot.slane %v4491, %v4495
        %v4498 = vadd.f32 %v4475, %v4496
        %v4499 = vadd.f32 %v4476, %v4496
        %v4500 = vadd.f32 %v4477, %v4496
        %v4501 = vadd.f32 %v4478, %v4496
        %v4502 = vadd.f32 %v4479, %v4496
        %v4503 = vadd.f32 %v4480, %v4496
        %v4504 = vadd.f32 %v4481, %v4496
        %v4505 = vadd.f32 %v4482, %v4496
        %v4506 = vadd.f32 %v4483, %v4496
        %v4507 = vadd.f32 %v4484, %v4496
        %v4508 = vadd.f32 %v4485, %v4496
        %v4509 = vadd.f32 %v4486, %v4496
        %v4510 = vadd.f32 %v4487, %v4496
        %v4511 = vadd.f32 %v4488, %v4496
        %v4512 = vadd.f32 %v4489, %v4496
        %v4513 = vadd.f32 %v4490, %v4496
        %v4514 = vtanh.pop %v4498
        %v4515 = vtanh.pop %v4499
        %v4516 = vtanh.pop %v4500
        %v4517 = vtanh.pop %v4501
        %v4518 = vtanh.pop %v4502
        %v4519 = vtanh.pop %v4503
        %v4520 = vtanh.pop %v4504
        %v4521 = vtanh.pop %v4505
        %v4522 = vtanh.pop %v4506
        %v4523 = vtanh.pop %v4507
        %v4524 = vtanh.pop %v4508
        %v4525 = vtanh.pop %v4509
        %v4526 = vtanh.pop %v4510
        %v4527 = vtanh.pop %v4511
        %v4528 = vtanh.pop %v4512
        %v4529 = vtanh.pop %v4513
        %v4530 = vld [vmem:[%s8] sm:$0x1]
        %v4532 = vlaneseq
        %v4533 = vshrl.u32 %v4532, 7
        %v4534 = vsub.s32 0, %v4533
        %v4535 = vrot.slane %v4530, %v4534
        %v4537 = vmul.f32 %v4514, %v4535
        %v4538 = vmul.f32 %v4515, %v4535
        %v4539 = vmul.f32 %v4516, %v4535
        %v4540 = vmul.f32 %v4517, %v4535
        %v4541 = vmul.f32 %v4518, %v4535
        %v4542 = vmul.f32 %v4519, %v4535
        %v4543 = vmul.f32 %v4520, %v4535
        %v4544 = vmul.f32 %v4521, %v4535
        %v4545 = vmul.f32 %v4522, %v4535
        %v4546 = vmul.f32 %v4523, %v4535
        %v4547 = vmul.f32 %v4524, %v4535
        %v4548 = vmul.f32 %v4525, %v4535
        %v4549 = vmul.f32 %v4526, %v4535
        %v4550 = vmul.f32 %v4527, %v4535
        %v4551 = vmul.f32 %v4528, %v4535
        %v4552 = vmul.f32 %v4529, %v4535
        %4553 = vadd.xlane.f32.xlu0 %v4537
        %v4554 = vpop.xlane.xlu0 %4553
        %4555 = vadd.xlane.f32.xlu0 %v4538
        %v4556 = vpop.xlane.xlu0 %4555
        %4557 = vadd.xlane.f32.xlu0 %v4539
        %v4558 = vpop.xlane.xlu0 %4557
        %4559 = vadd.xlane.f32.xlu0 %v4540
        %v4560 = vpop.xlane.xlu0 %4559
        %4561 = vadd.xlane.f32.xlu0 %v4541
        %v4562 = vpop.xlane.xlu0 %4561
        %4563 = vadd.xlane.f32.xlu0 %v4542
        %v4564 = vpop.xlane.xlu0 %4563
        %4565 = vadd.xlane.f32.xlu0 %v4543
        %v4566 = vpop.xlane.xlu0 %4565
        %4567 = vadd.xlane.f32.xlu0 %v4544
        %v4568 = vpop.xlane.xlu0 %4567
        %4569 = vadd.xlane.f32.xlu0 %v4545
        %v4570 = vpop.xlane.xlu0 %4569
        %4571 = vadd.xlane.f32.xlu0 %v4546
        %v4572 = vpop.xlane.xlu0 %4571
        %4573 = vadd.xlane.f32.xlu0 %v4547
        %v4574 = vpop.xlane.xlu0 %4573
        %4575 = vadd.xlane.f32.xlu0 %v4548
        %v4576 = vpop.xlane.xlu0 %4575
        %4577 = vadd.xlane.f32.xlu0 %v4549
        %v4578 = vpop.xlane.xlu0 %4577
        %4579 = vadd.xlane.f32.xlu0 %v4550
        %v4580 = vpop.xlane.xlu0 %4579
        %4581 = vadd.xlane.f32.xlu0 %v4551
        %v4582 = vpop.xlane.xlu0 %4581
        %4583 = vadd.xlane.f32.xlu0 %v4552
        %v4584 = vpop.xlane.xlu0 %4583
        %v4585 = vmul.f32 %v4554, 1.442695
        %v4586 = vpow.pop %v4585
        %v4587 = vmul.f32 %v4556, 1.442695
        %v4588 = vpow.pop %v4587
        %v4589 = vmul.f32 %v4558, 1.442695
        %v4590 = vpow.pop %v4589
        %v4591 = vmul.f32 %v4560, 1.442695
        %v4592 = vpow.pop %v4591
        %v4593 = vmul.f32 %v4562, 1.442695
        %v4594 = vpow.pop %v4593
        %v4595 = vmul.f32 %v4564, 1.442695
        %v4596 = vpow.pop %v4595
        %v4597 = vmul.f32 %v4566, 1.442695
        %v4598 = vpow.pop %v4597
        %v4599 = vmul.f32 %v4568, 1.442695
        %v4600 = vpow.pop %v4599
        %v4601 = vmul.f32 %v4570, 1.442695
        %v4602 = vpow.pop %v4601
        %v4603 = vmul.f32 %v4572, 1.442695
        %v4604 = vpow.pop %v4603
        %v4605 = vmul.f32 %v4574, 1.442695
        %v4606 = vpow.pop %v4605
        %v4607 = vmul.f32 %v4576, 1.442695
        %v4608 = vpow.pop %v4607
        %v4609 = vmul.f32 %v4578, 1.442695
        %v4610 = vpow.pop %v4609
        %v4611 = vmul.f32 %v4580, 1.442695
        %v4612 = vpow.pop %v4611
        %v4613 = vmul.f32 %v4582, 1.442695
        %v4614 = vpow.pop %v4613
        %v4615 = vmul.f32 %v4584, 1.442695
        %v4616 = vpow.pop %v4615
        %v4617 = vld [vmem:[%s9] sm:$0x1]
        %v4619 = vlaneseq
        %v4620 = vshrl.u32 %v4619, 7
        %v4621 = vsub.s32 0, %v4620
        %v4622 = vrot.slane %v4617, %v4621
        %v4624 = vadd.f32 %v4514, %v4622
        %v4625 = vadd.f32 %v4515, %v4622
        %v4626 = vadd.f32 %v4516, %v4622
        %v4627 = vadd.f32 %v4517, %v4622
        %v4628 = vadd.f32 %v4518, %v4622
        %v4629 = vadd.f32 %v4519, %v4622
        %v4630 = vadd.f32 %v4520, %v4622
        %v4631 = vadd.f32 %v4521, %v4622
        %v4632 = vadd.f32 %v4522, %v4622
        %v4633 = vadd.f32 %v4523, %v4622
        %v4634 = vadd.f32 %v4524, %v4622
        %v4635 = vadd.f32 %v4525, %v4622
        %v4636 = vadd.f32 %v4526, %v4622
        %v4637 = vadd.f32 %v4527, %v4622
        %v4638 = vadd.f32 %v4528, %v4622
        %v4639 = vadd.f32 %v4529, %v4622
        %v4640 = vmul.f32 %v4624, %v4586
        %v4641 = vmul.f32 %v4625, %v4588
        %v4642 = vmul.f32 %v4626, %v4590
        %v4643 = vmul.f32 %v4627, %v4592
        %v4644 = vmul.f32 %v4628, %v4594
        %v4645 = vmul.f32 %v4629, %v4596
        %v4646 = vmul.f32 %v4630, %v4598
        %v4647 = vmul.f32 %v4631, %v4600
        %v4648 = vmul.f32 %v4632, %v4602
        %v4649 = vmul.f32 %v4633, %v4604
        %v4650 = vmul.f32 %v4634, %v4606
        %v4651 = vmul.f32 %v4635, %v4608
        %v4652 = vmul.f32 %v4636, %v4610
        %v4653 = vmul.f32 %v4637, %v4612
        %v4654 = vmul.f32 %v4638, %v4614
        %v4655 = vmul.f32 %v4639, %v4616
        %v4656 = vld [vmem:[%s422] sm:$0xf]
        %v4657 = vunpack.c.l.bf16 %v4656
        %v4658 = vld [vmem:[%s409] sm:$0xff]
        %4659 = vmatprep.subr.mxu0 0.0
        %4660 = vmatpush1.msra.mxu0 %v4640
        %4661 = vmatprep.subr.mxu0 0.0
        %4662 = vmatpush1.msra.mxu0 %v4641
        %4663 = vmatprep.subr.mxu0 0.0
        %4664 = vmatpush1.msra.mxu0 %v4642
        %4665 = vmatprep.subr.mxu0 0.0
        %4666 = vmatpush1.msra.mxu0 %v4643
        %4667 = vmatprep.subr.mxu0 0.0
        %4668 = vmatpush1.msra.mxu0 %v4644
        %4669 = vmatprep.subr.mxu0 0.0
        %4670 = vmatpush1.msra.mxu0 %v4645
        %4671 = vmatprep.subr.mxu0 0.0
        %4672 = vmatpush1.msra.mxu0 %v4646
        %4673 = vmatprep.subr.mxu0 0.0
        %4674 = vmatpush1.msra.mxu0 %v4647
        %4675 = vmatprep.subr.mxu0 0.0
        %4676 = vmatpush1.msra.mxu0 %v4648
        %4677 = vmatprep.subr.mxu0 0.0
        %4678 = vmatpush1.msra.mxu0 %v4649
        %4679 = vmatprep.subr.mxu0 0.0
        %4680 = vmatpush1.msra.mxu0 %v4650
        %4681 = vmatprep.subr.mxu0 0.0
        %4682 = vmatpush1.msra.mxu0 %v4651
        %4683 = vmatprep.subr.mxu0 0.0
        %4684 = vmatpush1.msra.mxu0 %v4652
        %4685 = vmatprep.subr.mxu0 0.0
        %4686 = vmatpush1.msra.mxu0 %v4653
        %4687 = vmatprep.subr.mxu0 0.0
        %4688 = vmatpush1.msra.mxu0 %v4654
        %4689 = vmatprep.subr.mxu0 0.0
        %4690 = vmatpush1.msra.mxu0 %v4655
        %4691 = vmatprep.subr.mxu0 0.0
        %4692 = vmatpush1.msra.mxu0 0.0
        %4693 = vmatprep.subr.mxu0 0.0
        %4694 = vmatpush1.msra.mxu0 0.0
        %4695 = vmatprep.subr.mxu0 0.0
        %4696 = vmatpush1.msra.mxu0 0.0
        %4697 = vmatprep.subr.mxu0 0.0
        %4698 = vmatpush1.msra.mxu0 0.0
        %4699 = vmatprep.subr.mxu0 0.0
        %4700 = vmatpush1.msra.mxu0 0.0
        %4701 = vmatprep.subr.mxu0 0.0
        %4702 = vmatpush1.msra.mxu0 0.0
        %4703 = vmatprep.subr.mxu0 0.0
        %4704 = vmatpush1.msra.mxu0 0.0
        %4705 = vmatprep.subr.mxu0 0.0
        %4706 = vmatpush1.msra.mxu0 0.0
        %4707 = vmatprep.subr.mxu0 0.0
        %4708 = vmatpush1.msra.mxu0 0.0
        %4709 = vmatprep.subr.mxu0 0.0
        %4710 = vmatpush1.msra.mxu0 0.0
        %4711 = vmatprep.subr.mxu0 0.0
        %4712 = vmatpush1.msra.mxu0 0.0
        %4713 = vmatprep.subr.mxu0 0.0
        %4714 = vmatpush1.msra.mxu0 0.0
        %4715 = vmatprep.subr.mxu0 0.0
        %4716 = vmatpush1.msra.mxu0 0.0
        %4717 = vmatprep.subr.mxu0 0.0
        %4718 = vmatpush1.msra.mxu0 0.0
        %4719 = vmatprep.subr.mxu0 0.0
        %4720 = vmatpush1.msra.mxu0 0.0
        %4721 = vmatprep.subr.mxu0 0.0
        %4722 = vmatpush1.msra.mxu0 0.0
        %4723 = vmatprep.mubr.f32.mxu0 0.0
        %4724 = vmatmul.mubr.f32.gmra.mrb[0].mxu0 %v4657
        %v4725 = vpop.f32.mrb[0].mxu0
        %v4726 = vadd.f32 0.0, %v4725
        %v4727 = vpop.f32.mrb[0].mxu0
        %4728 = vdwg.mxu0
        %v4729 = vadd.f32 %v4658, %v4726
        %4730 = vst [vmem:[%s409] sm:$0xff] %v4729
        %s4731 = sand.u32 %s275, 1
        %s4732 = scalar_lea.sflag [#allocation3], %s4731
        %s4733 = sand.u32 %s275, 1
        %s4734 = smul.addr %s4733, 8
        %s4735 = scalar_lea.vmem [#allocation2], %s4734
        // Predicated region
        $region65: #{tpu_custom_call.1} parent=59 // pred_check
          %p4736 = pneg %p285
        $region66: #{tpu_custom_call.1} parent=59 // pred_check_branch
          %4738 = sbr.rel (%p4736) target = $region68
        $region67: #{tpu_custom_call.1} parent=59 // pred_region
          %s4740 = ssub.s32 128, 128
          %4741 = vsyncadd %s4732, %s4740
          %s4742 = smul.addr %s28, 128
          %s4743 = scalar_lea.hbm %s10, %s4742
          %s4745 = sshll.u32 %s4735, 4
          %s4746 = int_to_ptr.vmem [resolvable:$true] %s4745
          %4748 = dma.vmem_to_hbm [thread:$0]  %s4746, 128, %s4743, %s4732
        $region68: #{tpu_custom_call.1} parent=59 // pred_fallthru
          _
      $region60: #{tpu_custom_call.1} parent=5 // pred_fallthru
        _
      %p4749 = scmp.le.s32.totalorder 2, %s19
      // Predicated region
      $region69: #{tpu_custom_call.1} parent=5 // pred_check
        %p4750 = pneg %p4749
      $region70: #{tpu_custom_call.1} parent=5 // pred_check_branch
        %4752 = sbr.rel (%p4750) target = $region72
      $region71: #{tpu_custom_call.1} parent=5 // pred_region
        %s4753 = ssub.s32 %s19, 2
        // Predicated region
        $region73: #{tpu_custom_call.1} parent=71 // pred_check
          %p4754 = pneg %p291
        $region74: #{tpu_custom_call.1} parent=71 // pred_check_branch
          %4756 = sbr.rel (%p4754) target = $region76
        $region75: #{tpu_custom_call.1} parent=71 // pred_region
          %s4757 = sand.u32 %s276, 1
          %s4758 = scalar_lea.sflag [#allocation3], %s4757
          %s4759 = sand.u32 %s276, 1
          %s4760 = smul.addr %s4759, 8
          %s4761 = scalar_lea.vmem [#allocation2], %s4760
          %4762 = dma.done %s4758, 128
        $region76: #{tpu_custom_call.1} parent=71 // pred_fallthru
          _
      $region72: #{tpu_custom_call.1} parent=5 // pred_fallthru
        _
    $region6: #{tpu_custom_call.1} parent=1 // loop_footer
      %s23 = sadd.s32 1, %s19
    $region7: #{tpu_custom_call.1} parent=1 // loop_footer_branch
      %18 = sbr.rel target = $region3
    $region8: #{tpu_custom_call.1} parent=1 // loop_exit
      _
    %4763 = vsyncpa [#allocation3], 1
    %s4764 = scalar_lea.sflag [#allocation3], 1
    %4765 = vsyncpa %s4764, 1

</llo_original>
